<compile_context>
chip_gen: v7x
topology: tpu7x:2x2x1
jax: 0.10.0
libtpu: 0.0.40
codegen_flags: <defaults>
</compile_context>

<pallas_src>
import functools

import jax
import jax.numpy as jnp
import numpy as np
from jax import lax
from jax.experimental import pallas as pl
from jax.experimental.pallas import tpu as pltpu

NEG_SLOPE = 0.01


def _round_up(v, m):
    return ((v + m - 1) // m) * m


# --------------------------- host-side packing / operators ---------------------------

def _pack_conv_taps(w, cin_pad):
    """(kd, kh, kw, Cin, Cout) -> (kd, Cout, kh*kw*cin_pad), Cin zero-padded per tap."""
    kd, kh, kw, cin, cout = w.shape
    wt = jnp.transpose(w.reshape(kd, kh * kw, cin, cout), (0, 1, 3, 2))   # (kd, T, Cout, Cin)
    if cin_pad > cin:
        wt = jnp.pad(wt, ((0, 0), (0, 0), (0, 0), (0, cin_pad - cin)))
    return jnp.transpose(wt, (0, 2, 1, 3)).reshape(kd, cout, kh * kw * cin_pad)


def _pool1_inplane_operator(ho, wo, w_in):
    """In-plane half of AvgPool3d(2,2,2)/2 (depth pair is pre-summed -> weights 1/8).

    Rows are indexed by the in-plane flat index q = h*w_in + w of the conv1 output layout;
    wrapped (invalid) rows simply get weight 0.
    """
    hp, wp = ho // 2, wo // 2
    m_hw = (ho - 1) * w_in + wo
    P = np.zeros((m_hw, hp * wp), np.float32)
    for zh in range(hp):
        for zw in range(wp):
            for dy in range(2):
                for dx in range(2):
                    P[(2 * zh + dy) * w_in + (2 * zw + dx), zh * wp + zw] = 0.125
    return P, (hp, wp)


def _pool2_operator(do, ho, wo, hw_plane, w_plane):
    """AvgPool3d((1,2,2),(1,2,2),pad=(0,1,1)), count_include_pad=True, on the flat conv2
    output layout m = zd*hw_plane + oh*w_plane + ow.  Tiny (82x18) -> kept dense."""
    hp = (ho + 2 - 2) // 2 + 1
    wp = (wo + 2 - 2) // 2 + 1
    m_acc = (do - 1) * hw_plane + (ho - 1) * w_plane + wo
    P = np.zeros((m_acc, do * hp * wp), np.float32)
    for zd in range(do):
        for zh in range(hp):
            for zw in range(wp):
                p = (zd * hp + zh) * wp + zw
                for dy in range(2):
                    for dx in range(2):
                        oh = 2 * zh - 1 + dy
                        ow = 2 * zw - 1 + dx
                        if 0 <= oh < ho and 0 <= ow < wo:
                            P[zd * hw_plane + oh * w_plane + ow, p] = 0.25
    return P, (do, hp, wp)


# ----------------------------------- fused kernel -----------------------------------

def _fused_kernel(x_ref, w1_ref, b1_ref, phw_ref, w2_ref, b2_ref, p2_ref, w3_ref, b3_ref,
                  o_ref, xk1_ref, p1_ref, xk2_ref, *,
                  cin, cin_pad, c1, c1_pad, kd1, offs1, hw, m_acc1, m_hw1,
                  dp1, hp1wp1, offs2, m_acc2, neg_slope):
    L1 = (kd1 - 1) * hw + m_acc1                      # == D*H*W of the input block

    # -------- stage 1: Conv3d(3x3x3, valid) + bias + LeakyReLU --------------------------
    # Pack the 9 in-plane taps once on the contraction axis (9 unaligned lane realigns in
    # total); the kd depth taps reuse them through lane-ALIGNED slices (hw % 128 == 0), so
    # the conv is kd matmuls with K = 9*cin_pad instead of 27 K=4 pushes.
    if cin_pad != cin:
        xk1_ref[...] = jnp.zeros_like(xk1_ref)        # keep Cin-pad rows exactly zero
    for j, off in enumerate(offs1):
        xk1_ref[j * cin_pad:j * cin_pad + cin, 0:L1] = x_ref[0, :, off:off + L1]
    acc = None
    for a in range(kd1):
        part = jnp.dot(w1_ref[a], xk1_ref[:, a * hw:a * hw + m_acc1],
                       preferred_element_type=jnp.float32)
        acc = part if acc is None else acc + part
    act1 = acc + b1_ref[...]
    act1 = jnp.where(act1 >= 0, act1, neg_slope * act1)           # (C1, m_acc1)

    # -------- pool1: AvgPool3d(2,2,2)/2, separable ---------------------------------------
    # Depth pairs: aligned lane-slice adds on the VPU.  In-plane 2x2: small operator matmul.
    for zd in range(dp1):
        s = (act1[:, (2 * zd) * hw:(2 * zd) * hw + m_hw1]
             + act1[:, (2 * zd + 1) * hw:(2 * zd + 1) * hw + m_hw1])
        p1_ref[:, zd * hp1wp1:(zd + 1) * hp1wp1] = jnp.dot(
            s, phw_ref[...], preferred_element_type=jnp.float32)  # (C1, Hp1*Wp1)

    # -------- stage 2: Conv3d((1,3,3), valid) + bias + LeakyReLU -------------------------
    if c1_pad != c1:
        xk2_ref[...] = jnp.zeros_like(xk2_ref)
    for j, off in enumerate(offs2):
        xk2_ref[j * c1_pad:j * c1_pad + c1, 0:m_acc2] = p1_ref[:, off:off + m_acc2]
    act2 = jnp.dot(w2_ref[...], xk2_ref[:, 0:m_acc2], preferred_element_type=jnp.float32)
    act2 = act2 + b2_ref[...]
    act2 = jnp.where(act2 >= 0, act2, neg_slope * act2)           # (C2, m_acc2)

    # -------- pool2 (tiny operator matmul) + fused 1x1x1 projection ----------------------
    pooled2 = jnp.dot(act2, p2_ref[...], preferred_element_type=jnp.float32)  # (C2, Mp2)
    out = jnp.dot(w3_ref[...], pooled2, preferred_element_type=jnp.float32) + b3_ref[...]
    o_ref[0] = out.astype(o_ref.dtype)


# ----------------------------------- forward pass -----------------------------------

def convolutions_forward(x_ncdhw, params):
    """Forward of Convolutions(in_channels, out_channels, p=[]) — NCDHW in / NCDHW out."""
    N, cin, D, H, W = x_ncdhw.shape
    w1, b1 = params["w1"], params["b1"]
    w2, b2 = params["w2"], params["b2"]
    w3, b3 = params["w3"], params["b3"]
    kd1, kh1, kw1, _, c1 = w1.shape
    kd2, kh2, kw2, _, c2 = w2.shape
    c3 = w3.shape[-1]
    assert kd2 == 1, "fused kernel assumes block-2 conv/pool leave depth untouched"

    hw = H * W
    do1, ho1, wo1 = D - kd1 + 1, H - kh1 + 1, W - kw1 + 1
    assert do1 % 2 == 0 and ho1 % 2 == 0 and wo1 % 2 == 0, "AvgPool3d(2,2,2) must tile exactly"
    m_hw1 = (ho1 - 1) * W + wo1
    m_acc1 = (do1 - 1) * hw + m_hw1
    L1 = (kd1 - 1) * hw + m_acc1                      # == D*H*W exactly
    offs1 = tuple(b * W + c for b in range(kh1) for c in range(kw1))

    cin_pad = _round_up(cin, 8)
    c1_pad = _round_up(c1, 8)
    k1 = kh1 * kw1 * cin_pad
    k2 = kh2 * kw2 * c1_pad

    phw, (hp1, wp1) = _pool1_inplane_operator(ho1, wo1, W)
    dp1 = do1 // 2
    hp1wp1 = hp1 * wp1

    do2, ho2, wo2 = dp1 - kd2 + 1, hp1 - kh2 + 1, wp1 - kw2 + 1
    m_acc2 = (do2 - 1) * hp1wp1 + (ho2 - 1) * wp1 + wo2
    offs2 = tuple(b * wp1 + c for b in range(kh2) for c in range(kw2))
    p2, (dp2, hp2, wp2) = _pool2_operator(do2, ho2, wo2, hp1wp1, wp1)
    mp2 = dp2 * hp2 * wp2

    w1p = _pack_conv_taps(w1, cin_pad)                 # (kd1, C1, k1)
    w2p = _pack_conv_taps(w2, c1_pad)[0]               # (C2, k2)
    w3p = jnp.transpose(w3.reshape(c2, c3), (1, 0))    # (C3, C2)

    x_flat = x_ncdhw.reshape(N, cin, D * hw)           # NCDHW is already channel-major: free

    kernel = functools.partial(
        _fused_kernel, cin=cin, cin_pad=cin_pad, c1=c1, c1_pad=c1_pad, kd1=kd1,
        offs1=offs1, hw=hw, m_acc1=m_acc1, m_hw1=m_hw1, dp1=dp1, hp1wp1=hp1wp1,
        offs2=offs2, m_acc2=m_acc2, neg_slope=NEG_SLOPE)

    flops = N * (2 * kd1 * c1 * k1 * m_acc1 + 2 * dp1 * c1 * m_hw1 * hp1wp1
                 + 2 * c2 * k2 * m_acc2 + 2 * c2 * m_acc2 * mp2 + 2 * c3 * c2 * mp2)
    bytes_accessed = 4 * (x_flat.size + w1p.size + b1.size + phw.size + w2p.size
                          + b2.size + p2.size + w3p.size + b3.size + N * c3 * mp2)

    y = pl.pallas_call(
        kernel,
        out_shape=jax.ShapeDtypeStruct((N, c3, mp2), x_ncdhw.dtype),
        grid=(N,),
        in_specs=[
            pl.BlockSpec((1, cin, D * hw), lambda n: (n, 0, 0)),
            pl.BlockSpec((kd1, c1, k1), lambda n: (0, 0, 0)),   # constants -> fetched once
            pl.BlockSpec((c1, 1), lambda n: (0, 0)),
            pl.BlockSpec((m_hw1, hp1wp1), lambda n: (0, 0)),
            pl.BlockSpec((c2, k2), lambda n: (0, 0)),
            pl.BlockSpec((c2, 1), lambda n: (0, 0)),
            pl.BlockSpec((m_acc2, mp2), lambda n: (0, 0)),
            pl.BlockSpec((c3, c2), lambda n: (0, 0)),
            pl.BlockSpec((c3, 1), lambda n: (0, 0)),
        ],
        out_specs=pl.BlockSpec((1, c3, mp2), lambda n: (n, 0, 0)),
        scratch_shapes=[
            pltpu.VMEM((k1, L1), jnp.float32),               # stacked conv1 taps (~440 KB)
            pltpu.VMEM((c1, dp1 * hp1wp1), jnp.float32),     # pooled stage-1 activation
            pltpu.VMEM((k2, m_acc2), jnp.float32),           # stacked conv2 taps
        ],
        compiler_params=pltpu.CompilerParams(dimension_semantics=("parallel",)),
        cost_estimate=pl.CostEstimate(flops=flops, transcendentals=0,
                                      bytes_accessed=bytes_accessed),
    )(x_flat, w1p, b1.reshape(c1, 1), jnp.asarray(phw), w2p, b2.reshape(c2, 1),
      jnp.asarray(p2), w3p, b3.reshape(c3, 1))
    return y.reshape(N, c3, dp2, hp2, wp2)                                   # NCDHW


# ------------------------------- pure-JAX reference ---------------------------------

def _ref_conv3d(x, w, b):
    out = lax.conv_general_dilated(x, w, window_strides=(1, 1, 1), padding="VALID",
                                   dimension_numbers=("NDHWC", "DHWIO", "NDHWC"))
    return out + b.reshape(1, 1, 1, 1, -1)


def _ref_avgpool(x, kernel, stride, pad):
    pd, ph, pw = kernel
    s = lax.reduce_window(x, 0.0, lax.add,
                          window_dimensions=(1, pd, ph, pw, 1),
                          window_strides=(1,) + stride + (1,),
                          padding=((0, 0), (pad[0], pad[0]), (pad[1], pad[1]),
                                   (pad[2], pad[2]), (0, 0)))
    return s / float(pd * ph * pw)


def _ref_forward(x_ncdhw, params):
    x = jnp.transpose(x_ncdhw, (0, 2, 3, 4, 1))
    x = _ref_conv3d(x, params["w1"], params["b1"])
    x = jnp.where(x >= 0, x, NEG_SLOPE * x)
    x = _ref_avgpool(x, (2, 2, 2), (2, 2, 2), (0, 0, 0))
    x = _ref_conv3d(x, params["w2"], params["b2"])
    x = jnp.where(x >= 0, x, NEG_SLOPE * x)
    x = _ref_avgpool(x, (1, 2, 2), (1, 2, 2), (0, 1, 1))
    x = _ref_conv3d(x, params["w3"], params["b3"])
    return jnp.transpose(x, (0, 4, 1, 2, 3))


# --------------------------------------- main ---------------------------------------

if __name__ == "__main__":
    key = jax.random.PRNGKey(0)
    kx, k1, k2, k3, kb1, kb2, kb3 = jax.random.split(key, 7)

    in_channels = 4
    out_channels = [8, 8, 16]
    N, D, H, W = 2, 6, 16, 16

    # PyTorch-style NCDHW input
    x = jax.random.normal(kx, (N, in_channels, D, H, W), jnp.float32)

    # Deterministic parameter init (weights stored as (kd, kh, kw, Cin, Cout))
    params = {
        "w1": 0.1 * jax.random.normal(k1, (3, 3, 3, in_channels, out_channels[0]), jnp.float32),
        "b1": 0.1 * jax.random.normal(kb1, (out_channels[0],), jnp.float32),
        "w2": 0.1 * jax.random.normal(k2, (1, 3, 3, out_channels[0], out_channels[1]), jnp.float32),
        "b2": 0.1 * jax.random.normal(kb2, (out_channels[1],), jnp.float32),
        "w3": 0.1 * jax.random.normal(k3, (1, 1, 1, out_channels[1], out_channels[2]), jnp.float32),
        "b3": 0.1 * jax.random.normal(kb3, (out_channels[2],), jnp.float32),
    }

    out = jax.block_until_ready(jax.jit(convolutions_forward)(x, params))
    assert out.shape == (N, out_channels[2], 2, 3, 3), out.shape

    ref = jax.block_until_ready(jax.jit(_ref_forward)(x, params))
    np.testing.assert_allclose(np.asarray(out), np.asarray(ref), rtol=1e-4, atol=1e-4)

    print("KERNEL_OK")
</pallas_src>

<mosaic_0001>
module attributes {stable_mosaic.version = 11 : i64} {
  func.func @_fused_kernel(%arg0: i32, %arg1: memref<1x4x1536xf32, #tpu.memory_space<vmem>>, %arg2: memref<3x8x72xf32, #tpu.memory_space<vmem>>, %arg3: memref<8x1xf32, #tpu.memory_space<vmem>>, %arg4: memref<222x49xf32, #tpu.memory_space<vmem>>, %arg5: memref<8x72xf32, #tpu.memory_space<vmem>>, %arg6: memref<8x1xf32, #tpu.memory_space<vmem>>, %arg7: memref<82x18xf32, #tpu.memory_space<vmem>>, %arg8: memref<16x8xf32, #tpu.memory_space<vmem>>, %arg9: memref<16x1xf32, #tpu.memory_space<vmem>>, %arg10: memref<1x16x18xf32, #tpu.memory_space<vmem>>, %arg11: memref<72x1502xf32, #tpu.memory_space<vmem>>, %arg12: memref<8x98xf32, #tpu.memory_space<vmem>>, %arg13: memref<72x82xf32, #tpu.memory_space<vmem>>) attributes {dimension_semantics = [#tpu.dimension_semantics<parallel>], iteration_bounds = array<i64: 2>, scalar_prefetch = 0 : i64, scratch_operands = 3 : i64, tpu.core_type = #tpu.core_type<tc>, window_params = [{transform_indices = @transform_0, window_bounds = array<i64: 1, 4, 1536>}, {pipeline_mode = #tpu.pipeline_mode<synchronous>, transform_indices = @transform_1, window_bounds = array<i64: 3, 8, 72>}, {pipeline_mode = #tpu.pipeline_mode<synchronous>, transform_indices = @transform_2, window_bounds = array<i64: 8, 1>}, {pipeline_mode = #tpu.pipeline_mode<synchronous>, transform_indices = @transform_3, window_bounds = array<i64: 222, 49>}, {pipeline_mode = #tpu.pipeline_mode<synchronous>, transform_indices = @transform_4, window_bounds = array<i64: 8, 72>}, {pipeline_mode = #tpu.pipeline_mode<synchronous>, transform_indices = @transform_5, window_bounds = array<i64: 8, 1>}, {pipeline_mode = #tpu.pipeline_mode<synchronous>, transform_indices = @transform_6, window_bounds = array<i64: 82, 18>}, {pipeline_mode = #tpu.pipeline_mode<synchronous>, transform_indices = @transform_7, window_bounds = array<i64: 16, 8>}, {pipeline_mode = #tpu.pipeline_mode<synchronous>, transform_indices = @transform_8, window_bounds = array<i64: 16, 1>}, {transform_indices = @transform_9, window_bounds = array<i64: 1, 16, 18>}]} {
    %cst = arith.constant 0.000000e+00 : f32
    %0 = vector.broadcast %cst : f32 to vector<72x1502xf32>
    %c0 = arith.constant 0 : index
    %c0_0 = arith.constant 0 : index
    %1 = vector.load %arg11[%c0, %c0_0] : memref<72x1502xf32, #tpu.memory_space<vmem>>, vector<72x1502xf32>
    tpu.vector_store %arg11[%c0, %c0_0], %0 {strides = array<i32>} : memref<72x1502xf32, #tpu.memory_space<vmem>>, vector<72x1502xf32>,
    %c0_1 = arith.constant 0 : index
    %c0_2 = arith.constant 0 : index
    %c0_3 = arith.constant 0 : index
    %2 = vector.load %arg1[%c0_1, %c0_2, %c0_3] : memref<1x4x1536xf32, #tpu.memory_space<vmem>>, vector<1x4x1502xf32>
    %3 = vector.shape_cast %2 : vector<1x4x1502xf32> to vector<4x1502xf32>
    %c0_4 = arith.constant 0 : index
    %c0_5 = arith.constant 0 : index
    %4 = vector.load %arg11[%c0_4, %c0_5] : memref<72x1502xf32, #tpu.memory_space<vmem>>, vector<4x1502xf32>
    tpu.vector_store %arg11[%c0_4, %c0_5], %3 {strides = array<i32>} : memref<72x1502xf32, #tpu.memory_space<vmem>>, vector<4x1502xf32>,
    %c0_6 = arith.constant 0 : index
    %c0_7 = arith.constant 0 : index
    %c1 = arith.constant 1 : index
    %5 = vector.load %arg1[%c0_6, %c0_7, %c1] : memref<1x4x1536xf32, #tpu.memory_space<vmem>>, vector<1x4x1502xf32>
    %6 = vector.shape_cast %5 : vector<1x4x1502xf32> to vector<4x1502xf32>
    %c8 = arith.constant 8 : index
    %c0_8 = arith.constant 0 : index
    %7 = vector.load %arg11[%c8, %c0_8] : memref<72x1502xf32, #tpu.memory_space<vmem>>, vector<4x1502xf32>
    tpu.vector_store %arg11[%c8, %c0_8], %6 {strides = array<i32>} : memref<72x1502xf32, #tpu.memory_space<vmem>>, vector<4x1502xf32>,
    %c0_9 = arith.constant 0 : index
    %c0_10 = arith.constant 0 : index
    %c2 = arith.constant 2 : index
    %8 = vector.load %arg1[%c0_9, %c0_10, %c2] : memref<1x4x1536xf32, #tpu.memory_space<vmem>>, vector<1x4x1502xf32>
    %9 = vector.shape_cast %8 : vector<1x4x1502xf32> to vector<4x1502xf32>
    %c16 = arith.constant 16 : index
    %c0_11 = arith.constant 0 : index
    %10 = vector.load %arg11[%c16, %c0_11] : memref<72x1502xf32, #tpu.memory_space<vmem>>, vector<4x1502xf32>
    tpu.vector_store %arg11[%c16, %c0_11], %9 {strides = array<i32>} : memref<72x1502xf32, #tpu.memory_space<vmem>>, vector<4x1502xf32>,
    %c0_12 = arith.constant 0 : index
    %c0_13 = arith.constant 0 : index
    %c16_14 = arith.constant 16 : index
    %11 = vector.load %arg1[%c0_12, %c0_13, %c16_14] : memref<1x4x1536xf32, #tpu.memory_space<vmem>>, vector<1x4x1502xf32>
    %12 = vector.shape_cast %11 : vector<1x4x1502xf32> to vector<4x1502xf32>
    %c24 = arith.constant 24 : index
    %c0_15 = arith.constant 0 : index
    %13 = vector.load %arg11[%c24, %c0_15] : memref<72x1502xf32, #tpu.memory_space<vmem>>, vector<4x1502xf32>
    tpu.vector_store %arg11[%c24, %c0_15], %12 {strides = array<i32>} : memref<72x1502xf32, #tpu.memory_space<vmem>>, vector<4x1502xf32>,
    %c0_16 = arith.constant 0 : index
    %c0_17 = arith.constant 0 : index
    %c17 = arith.constant 17 : index
    %14 = vector.load %arg1[%c0_16, %c0_17, %c17] : memref<1x4x1536xf32, #tpu.memory_space<vmem>>, vector<1x4x1502xf32>
    %15 = vector.shape_cast %14 : vector<1x4x1502xf32> to vector<4x1502xf32>
    %c32 = arith.constant 32 : index
    %c0_18 = arith.constant 0 : index
    %16 = vector.load %arg11[%c32, %c0_18] : memref<72x1502xf32, #tpu.memory_space<vmem>>, vector<4x1502xf32>
    tpu.vector_store %arg11[%c32, %c0_18], %15 {strides = array<i32>} : memref<72x1502xf32, #tpu.memory_space<vmem>>, vector<4x1502xf32>,
    %c0_19 = arith.constant 0 : index
    %c0_20 = arith.constant 0 : index
    %c18 = arith.constant 18 : index
    %17 = vector.load %arg1[%c0_19, %c0_20, %c18] : memref<1x4x1536xf32, #tpu.memory_space<vmem>>, vector<1x4x1502xf32>
    %18 = vector.shape_cast %17 : vector<1x4x1502xf32> to vector<4x1502xf32>
    %c40 = arith.constant 40 : index
    %c0_21 = arith.constant 0 : index
    %19 = vector.load %arg11[%c40, %c0_21] : memref<72x1502xf32, #tpu.memory_space<vmem>>, vector<4x1502xf32>
    tpu.vector_store %arg11[%c40, %c0_21], %18 {strides = array<i32>} : memref<72x1502xf32, #tpu.memory_space<vmem>>, vector<4x1502xf32>,
    %c0_22 = arith.constant 0 : index
    %c0_23 = arith.constant 0 : index
    %c32_24 = arith.constant 32 : index
    %20 = vector.load %arg1[%c0_22, %c0_23, %c32_24] : memref<1x4x1536xf32, #tpu.memory_space<vmem>>, vector<1x4x1502xf32>
    %21 = vector.shape_cast %20 : vector<1x4x1502xf32> to vector<4x1502xf32>
    %c48 = arith.constant 48 : index
    %c0_25 = arith.constant 0 : index
    %22 = vector.load %arg11[%c48, %c0_25] : memref<72x1502xf32, #tpu.memory_space<vmem>>, vector<4x1502xf32>
    tpu.vector_store %arg11[%c48, %c0_25], %21 {strides = array<i32>} : memref<72x1502xf32, #tpu.memory_space<vmem>>, vector<4x1502xf32>,
    %c0_26 = arith.constant 0 : index
    %c0_27 = arith.constant 0 : index
    %c33 = arith.constant 33 : index
    %23 = vector.load %arg1[%c0_26, %c0_27, %c33] : memref<1x4x1536xf32, #tpu.memory_space<vmem>>, vector<1x4x1502xf32>
    %24 = vector.shape_cast %23 : vector<1x4x1502xf32> to vector<4x1502xf32>
    %c56 = arith.constant 56 : index
    %c0_28 = arith.constant 0 : index
    %25 = vector.load %arg11[%c56, %c0_28] : memref<72x1502xf32, #tpu.memory_space<vmem>>, vector<4x1502xf32>
    tpu.vector_store %arg11[%c56, %c0_28], %24 {strides = array<i32>} : memref<72x1502xf32, #tpu.memory_space<vmem>>, vector<4x1502xf32>,
    %c0_29 = arith.constant 0 : index
    %c0_30 = arith.constant 0 : index
    %c34 = arith.constant 34 : index
    %26 = vector.load %arg1[%c0_29, %c0_30, %c34] : memref<1x4x1536xf32, #tpu.memory_space<vmem>>, vector<1x4x1502xf32>
    %27 = vector.shape_cast %26 : vector<1x4x1502xf32> to vector<4x1502xf32>
    %c64 = arith.constant 64 : index
    %c0_31 = arith.constant 0 : index
    %28 = vector.load %arg11[%c64, %c0_31] : memref<72x1502xf32, #tpu.memory_space<vmem>>, vector<4x1502xf32>
    tpu.vector_store %arg11[%c64, %c0_31], %27 {strides = array<i32>} : memref<72x1502xf32, #tpu.memory_space<vmem>>, vector<4x1502xf32>,
    %c0_32 = arith.constant 0 : index
    %c0_33 = arith.constant 0 : index
    %c0_34 = arith.constant 0 : index
    %29 = vector.load %arg2[%c0_32, %c0_33, %c0_34] : memref<3x8x72xf32, #tpu.memory_space<vmem>>, vector<1x8x72xf32>
    %30 = vector.shape_cast %29 : vector<1x8x72xf32> to vector<8x72xf32>
    %c0_35 = arith.constant 0 : index
    %c0_36 = arith.constant 0 : index
    %31 = vector.load %arg11[%c0_35, %c0_36] : memref<72x1502xf32, #tpu.memory_space<vmem>>, vector<72x990xf32>
    %cst_37 = arith.constant dense<0.000000e+00> : vector<8x990xf32>
    %32 = tpu.matmul %30, %31, %cst_37 {dimension_numbers = #tpu.dot_dimension_numbers<[1], [0], [0], [1], [0, 0, 1, 1], [], []>} : vector<8x72xf32>, vector<72x990xf32>, vector<8x990xf32> -> vector<8x990xf32>
    %c1_38 = arith.constant 1 : index
    %c0_39 = arith.constant 0 : index
    %c0_40 = arith.constant 0 : index
    %33 = vector.load %arg2[%c1_38, %c0_39, %c0_40] : memref<3x8x72xf32, #tpu.memory_space<vmem>>, vector<1x8x72xf32>
    %34 = vector.shape_cast %33 : vector<1x8x72xf32> to vector<8x72xf32>
    %c0_41 = arith.constant 0 : index
    %c256 = arith.constant 256 : index
    %35 = vector.load %arg11[%c0_41, %c256] : memref<72x1502xf32, #tpu.memory_space<vmem>>, vector<72x990xf32>
    %cst_42 = arith.constant dense<0.000000e+00> : vector<8x990xf32>
    %36 = tpu.matmul %34, %35, %cst_42 {dimension_numbers = #tpu.dot_dimension_numbers<[1], [0], [0], [1], [0, 0, 1, 1], [], []>} : vector<8x72xf32>, vector<72x990xf32>, vector<8x990xf32> -> vector<8x990xf32>
    %37 = arith.addf %32, %36 : vector<8x990xf32>
    %c2_43 = arith.constant 2 : index
    %c0_44 = arith.constant 0 : index
    %c0_45 = arith.constant 0 : index
    %38 = vector.load %arg2[%c2_43, %c0_44, %c0_45] : memref<3x8x72xf32, #tpu.memory_space<vmem>>, vector<1x8x72xf32>
    %39 = vector.shape_cast %38 : vector<1x8x72xf32> to vector<8x72xf32>
    %c0_46 = arith.constant 0 : index
    %c512 = arith.constant 512 : index
    %40 = vector.load %arg11[%c0_46, %c512] : memref<72x1502xf32, #tpu.memory_space<vmem>>, vector<72x990xf32>
    %cst_47 = arith.constant dense<0.000000e+00> : vector<8x990xf32>
    %41 = tpu.matmul %39, %40, %cst_47 {dimension_numbers = #tpu.dot_dimension_numbers<[1], [0], [0], [1], [0, 0, 1, 1], [], []>} : vector<8x72xf32>, vector<72x990xf32>, vector<8x990xf32> -> vector<8x990xf32>
    %42 = arith.addf %37, %41 : vector<8x990xf32>
    %c0_48 = arith.constant 0 : index
    %c0_49 = arith.constant 0 : index
    %43 = vector.load %arg3[%c0_48, %c0_49] : memref<8x1xf32, #tpu.memory_space<vmem>>, vector<8x1xf32>
    %44 = vector.broadcast %43 : vector<8x1xf32> to vector<8x990xf32>
    %45 = arith.addf %42, %44 : vector<8x990xf32>
    %cst_50 = arith.constant 0.000000e+00 : f32
    %46 = vector.broadcast %cst_50 : f32 to vector<8x990xf32>
    %47 = arith.cmpf oge, %45, %46 : vector<8x990xf32>
    %cst_51 = arith.constant 0.00999999977 : f32
    %48 = vector.broadcast %cst_51 : f32 to vector<8x990xf32>
    %49 = arith.mulf %48, %45 : vector<8x990xf32>
    %50 = arith.select %47, %45, %49 : vector<8x990xi1>, vector<8x990xf32>
    %51 = vector.extract_strided_slice %50 {offsets = [0, 0], sizes = [8, 222], strides = [1, 1]} : vector<8x990xf32> to vector<8x222xf32>
    %52 = vector.extract_strided_slice %50 {offsets = [0, 256], sizes = [8, 222], strides = [1, 1]} : vector<8x990xf32> to vector<8x222xf32>
    %53 = arith.addf %51, %52 : vector<8x222xf32>
    %c0_52 = arith.constant 0 : index
    %c0_53 = arith.constant 0 : index
    %54 = vector.load %arg4[%c0_52, %c0_53] : memref<222x49xf32, #tpu.memory_space<vmem>>, vector<222x49xf32>
    %cst_54 = arith.constant dense<0.000000e+00> : vector<8x49xf32>
    %55 = tpu.matmul %53, %54, %cst_54 {dimension_numbers = #tpu.dot_dimension_numbers<[1], [0], [0], [1], [0, 0, 1, 1], [], []>} : vector<8x222xf32>, vector<222x49xf32>, vector<8x49xf32> -> vector<8x49xf32>
    %c0_55 = arith.constant 0 : index
    %c0_56 = arith.constant 0 : index
    %56 = vector.load %arg12[%c0_55, %c0_56] : memref<8x98xf32, #tpu.memory_space<vmem>>, vector<8x49xf32>
    tpu.vector_store %arg12[%c0_55, %c0_56], %55 {strides = array<i32>} : memref<8x98xf32, #tpu.memory_space<vmem>>, vector<8x49xf32>,
    %57 = vector.extract_strided_slice %50 {offsets = [0, 512], sizes = [8, 222], strides = [1, 1]} : vector<8x990xf32> to vector<8x222xf32>
    %58 = vector.extract_strided_slice %50 {offsets = [0, 768], sizes = [8, 222], strides = [1, 1]} : vector<8x990xf32> to vector<8x222xf32>
    %59 = arith.addf %57, %58 : vector<8x222xf32>
    %c0_57 = arith.constant 0 : index
    %c0_58 = arith.constant 0 : index
    %60 = vector.load %arg4[%c0_57, %c0_58] : memref<222x49xf32, #tpu.memory_space<vmem>>, vector<222x49xf32>
    %cst_59 = arith.constant dense<0.000000e+00> : vector<8x49xf32>
    %61 = tpu.matmul %59, %60, %cst_59 {dimension_numbers = #tpu.dot_dimension_numbers<[1], [0], [0], [1], [0, 0, 1, 1], [], []>} : vector<8x222xf32>, vector<222x49xf32>, vector<8x49xf32> -> vector<8x49xf32>
    %c0_60 = arith.constant 0 : index
    %c49 = arith.constant 49 : index
    %62 = vector.load %arg12[%c0_60, %c49] : memref<8x98xf32, #tpu.memory_space<vmem>>, vector<8x49xf32>
    tpu.vector_store %arg12[%c0_60, %c49], %61 {strides = array<i32>} : memref<8x98xf32, #tpu.memory_space<vmem>>, vector<8x49xf32>,
    %c0_61 = arith.constant 0 : index
    %c0_62 = arith.constant 0 : index
    %63 = vector.load %arg12[%c0_61, %c0_62] : memref<8x98xf32, #tpu.memory_space<vmem>>, vector<8x82xf32>
    %c0_63 = arith.constant 0 : index
    %c0_64 = arith.constant 0 : index
    %64 = vector.load %arg13[%c0_63, %c0_64] : memref<72x82xf32, #tpu.memory_space<vmem>>, vector<8x82xf32>
    tpu.vector_store %arg13[%c0_63, %c0_64], %63 {strides = array<i32>} : memref<72x82xf32, #tpu.memory_space<vmem>>, vector<8x82xf32>,
    %c0_65 = arith.constant 0 : index
    %c1_66 = arith.constant 1 : index
    %65 = vector.load %arg12[%c0_65, %c1_66] : memref<8x98xf32, #tpu.memory_space<vmem>>, vector<8x82xf32>
    %c8_67 = arith.constant 8 : index
    %c0_68 = arith.constant 0 : index
    %66 = vector.load %arg13[%c8_67, %c0_68] : memref<72x82xf32, #tpu.memory_space<vmem>>, vector<8x82xf32>
    tpu.vector_store %arg13[%c8_67, %c0_68], %65 {strides = array<i32>} : memref<72x82xf32, #tpu.memory_space<vmem>>, vector<8x82xf32>,
    %c0_69 = arith.constant 0 : index
    %c2_70 = arith.constant 2 : index
    %67 = vector.load %arg12[%c0_69, %c2_70] : memref<8x98xf32, #tpu.memory_space<vmem>>, vector<8x82xf32>
    %c16_71 = arith.constant 16 : index
    %c0_72 = arith.constant 0 : index
    %68 = vector.load %arg13[%c16_71, %c0_72] : memref<72x82xf32, #tpu.memory_space<vmem>>, vector<8x82xf32>
    tpu.vector_store %arg13[%c16_71, %c0_72], %67 {strides = array<i32>} : memref<72x82xf32, #tpu.memory_space<vmem>>, vector<8x82xf32>,
    %c0_73 = arith.constant 0 : index
    %c7 = arith.constant 7 : index
    %69 = vector.load %arg12[%c0_73, %c7] : memref<8x98xf32, #tpu.memory_space<vmem>>, vector<8x82xf32>
    %c24_74 = arith.constant 24 : index
    %c0_75 = arith.constant 0 : index
    %70 = vector.load %arg13[%c24_74, %c0_75] : memref<72x82xf32, #tpu.memory_space<vmem>>, vector<8x82xf32>
    tpu.vector_store %arg13[%c24_74, %c0_75], %69 {strides = array<i32>} : memref<72x82xf32, #tpu.memory_space<vmem>>, vector<8x82xf32>,
    %c0_76 = arith.constant 0 : index
    %c8_77 = arith.constant 8 : index
    %71 = vector.load %arg12[%c0_76, %c8_77] : memref<8x98xf32, #tpu.memory_space<vmem>>, vector<8x82xf32>
    %c32_78 = arith.constant 32 : index
    %c0_79 = arith.constant 0 : index
    %72 = vector.load %arg13[%c32_78, %c0_79] : memref<72x82xf32, #tpu.memory_space<vmem>>, vector<8x82xf32>
    tpu.vector_store %arg13[%c32_78, %c0_79], %71 {strides = array<i32>} : memref<72x82xf32, #tpu.memory_space<vmem>>, vector<8x82xf32>,
    %c0_80 = arith.constant 0 : index
    %c9 = arith.constant 9 : index
    %73 = vector.load %arg12[%c0_80, %c9] : memref<8x98xf32, #tpu.memory_space<vmem>>, vector<8x82xf32>
    %c40_81 = arith.constant 40 : index
    %c0_82 = arith.constant 0 : index
    %74 = vector.load %arg13[%c40_81, %c0_82] : memref<72x82xf32, #tpu.memory_space<vmem>>, vector<8x82xf32>
    tpu.vector_store %arg13[%c40_81, %c0_82], %73 {strides = array<i32>} : memref<72x82xf32, #tpu.memory_space<vmem>>, vector<8x82xf32>,
    %c0_83 = arith.constant 0 : index
    %c14 = arith.constant 14 : index
    %75 = vector.load %arg12[%c0_83, %c14] : memref<8x98xf32, #tpu.memory_space<vmem>>, vector<8x82xf32>
    %c48_84 = arith.constant 48 : index
    %c0_85 = arith.constant 0 : index
    %76 = vector.load %arg13[%c48_84, %c0_85] : memref<72x82xf32, #tpu.memory_space<vmem>>, vector<8x82xf32>
    tpu.vector_store %arg13[%c48_84, %c0_85], %75 {strides = array<i32>} : memref<72x82xf32, #tpu.memory_space<vmem>>, vector<8x82xf32>,
    %c0_86 = arith.constant 0 : index
    %c15 = arith.constant 15 : index
    %77 = vector.load %arg12[%c0_86, %c15] : memref<8x98xf32, #tpu.memory_space<vmem>>, vector<8x82xf32>
    %c56_87 = arith.constant 56 : index
    %c0_88 = arith.constant 0 : index
    %78 = vector.load %arg13[%c56_87, %c0_88] : memref<72x82xf32, #tpu.memory_space<vmem>>, vector<8x82xf32>
    tpu.vector_store %arg13[%c56_87, %c0_88], %77 {strides = array<i32>} : memref<72x82xf32, #tpu.memory_space<vmem>>, vector<8x82xf32>,
    %c0_89 = arith.constant 0 : index
    %c16_90 = arith.constant 16 : index
    %79 = vector.load %arg12[%c0_89, %c16_90] : memref<8x98xf32, #tpu.memory_space<vmem>>, vector<8x82xf32>
    %c64_91 = arith.constant 64 : index
    %c0_92 = arith.constant 0 : index
    %80 = vector.load %arg13[%c64_91, %c0_92] : memref<72x82xf32, #tpu.memory_space<vmem>>, vector<8x82xf32>
    tpu.vector_store %arg13[%c64_91, %c0_92], %79 {strides = array<i32>} : memref<72x82xf32, #tpu.memory_space<vmem>>, vector<8x82xf32>,
    %c0_93 = arith.constant 0 : index
    %c0_94 = arith.constant 0 : index
    %81 = vector.load %arg5[%c0_93, %c0_94] : memref<8x72xf32, #tpu.memory_space<vmem>>, vector<8x72xf32>
    %c0_95 = arith.constant 0 : index
    %c0_96 = arith.constant 0 : index
    %82 = vector.load %arg13[%c0_95, %c0_96] : memref<72x82xf32, #tpu.memory_space<vmem>>, vector<72x82xf32>
    %cst_97 = arith.constant dense<0.000000e+00> : vector<8x82xf32>
    %83 = tpu.matmul %81, %82, %cst_97 {dimension_numbers = #tpu.dot_dimension_numbers<[1], [0], [0], [1], [0, 0, 1, 1], [], []>} : vector<8x72xf32>, vector<72x82xf32>, vector<8x82xf32> -> vector<8x82xf32>
    %c0_98 = arith.constant 0 : index
    %c0_99 = arith.constant 0 : index
    %84 = vector.load %arg6[%c0_98, %c0_99] : memref<8x1xf32, #tpu.memory_space<vmem>>, vector<8x1xf32>
    %85 = vector.broadcast %84 : vector<8x1xf32> to vector<8x82xf32>
    %86 = arith.addf %83, %85 : vector<8x82xf32>
    %cst_100 = arith.constant 0.000000e+00 : f32
    %87 = vector.broadcast %cst_100 : f32 to vector<8x82xf32>
    %88 = arith.cmpf oge, %86, %87 : vector<8x82xf32>
    %cst_101 = arith.constant 0.00999999977 : f32
    %89 = vector.broadcast %cst_101 : f32 to vector<8x82xf32>
    %90 = arith.mulf %89, %86 : vector<8x82xf32>
    %91 = arith.select %88, %86, %90 : vector<8x82xi1>, vector<8x82xf32>
    %c0_102 = arith.constant 0 : index
    %c0_103 = arith.constant 0 : index
    %92 = vector.load %arg7[%c0_102, %c0_103] : memref<82x18xf32, #tpu.memory_space<vmem>>, vector<82x18xf32>
    %cst_104 = arith.constant dense<0.000000e+00> : vector<8x18xf32>
    %93 = tpu.matmul %91, %92, %cst_104 {dimension_numbers = #tpu.dot_dimension_numbers<[1], [0], [0], [1], [0, 0, 1, 1], [], []>} : vector<8x82xf32>, vector<82x18xf32>, vector<8x18xf32> -> vector<8x18xf32>
    %c0_105 = arith.constant 0 : index
    %c0_106 = arith.constant 0 : index
    %94 = vector.load %arg8[%c0_105, %c0_106] : memref<16x8xf32, #tpu.memory_space<vmem>>, vector<16x8xf32>
    %cst_107 = arith.constant dense<0.000000e+00> : vector<16x18xf32>
    %95 = tpu.matmul %94, %93, %cst_107 {dimension_numbers = #tpu.dot_dimension_numbers<[1], [0], [0], [1], [0, 0, 1, 1], [], []>} : vector<16x8xf32>, vector<8x18xf32>, vector<16x18xf32> -> vector<16x18xf32>
    %c0_108 = arith.constant 0 : index
    %c0_109 = arith.constant 0 : index
    %96 = vector.load %arg9[%c0_108, %c0_109] : memref<16x1xf32, #tpu.memory_space<vmem>>, vector<16x1xf32>
    %97 = vector.broadcast %96 : vector<16x1xf32> to vector<16x18xf32>
    %98 = arith.addf %95, %97 : vector<16x18xf32>
    %c0_110 = arith.constant 0 : index
    %c0_111 = arith.constant 0 : index
    %c0_112 = arith.constant 0 : index
    %99 = vector.load %arg10[%c0_110, %c0_111, %c0_112] : memref<1x16x18xf32, #tpu.memory_space<vmem>>, vector<1x16x18xf32>
    %100 = vector.shape_cast %99 : vector<1x16x18xf32> to vector<16x18xf32>
    %101 = vector.shape_cast %98 : vector<16x18xf32> to vector<1x16x18xf32>
    tpu.vector_store %arg10[%c0_110, %c0_111, %c0_112], %101 {strides = array<i32>} : memref<1x16x18xf32, #tpu.memory_space<vmem>>, vector<1x16x18xf32>,
    return
  }
  func.func @transform_0(%arg0: i32) -> (i32, i32, i32) {
    %c0_i32 = arith.constant 0 : i32
    %c0_i32_0 = arith.constant 0 : i32
    %c0_i32_1 = arith.constant 0 : i32
    return %arg0, %c0_i32, %c0_i32_0 : i32, i32, i32
  }
  func.func @transform_1(%arg0: i32) -> (i32, i32, i32) {
    %c0_i32 = arith.constant 0 : i32
    %c0_i32_0 = arith.constant 0 : i32
    %c0_i32_1 = arith.constant 0 : i32
    %c0_i32_2 = arith.constant 0 : i32
    return %c0_i32, %c0_i32_0, %c0_i32_1 : i32, i32, i32
  }
  func.func @transform_2(%arg0: i32) -> (i32, i32) {
    %c0_i32 = arith.constant 0 : i32
    %c0_i32_0 = arith.constant 0 : i32
    %c0_i32_1 = arith.constant 0 : i32
    return %c0_i32, %c0_i32_0 : i32, i32
  }
  func.func @transform_3(%arg0: i32) -> (i32, i32) {
    %c0_i32 = arith.constant 0 : i32
    %c0_i32_0 = arith.constant 0 : i32
    %c0_i32_1 = arith.constant 0 : i32
    return %c0_i32, %c0_i32_0 : i32, i32
  }
  func.func @transform_4(%arg0: i32) -> (i32, i32) {
    %c0_i32 = arith.constant 0 : i32
    %c0_i32_0 = arith.constant 0 : i32
    %c0_i32_1 = arith.constant 0 : i32
    return %c0_i32, %c0_i32_0 : i32, i32
  }
  func.func @transform_5(%arg0: i32) -> (i32, i32) {
    %c0_i32 = arith.constant 0 : i32
    %c0_i32_0 = arith.constant 0 : i32
    %c0_i32_1 = arith.constant 0 : i32
    return %c0_i32, %c0_i32_0 : i32, i32
  }
  func.func @transform_6(%arg0: i32) -> (i32, i32) {
    %c0_i32 = arith.constant 0 : i32
    %c0_i32_0 = arith.constant 0 : i32
    %c0_i32_1 = arith.constant 0 : i32
    return %c0_i32, %c0_i32_0 : i32, i32
  }
  func.func @transform_7(%arg0: i32) -> (i32, i32) {
    %c0_i32 = arith.constant 0 : i32
    %c0_i32_0 = arith.constant 0 : i32
    %c0_i32_1 = arith.constant 0 : i32
    return %c0_i32, %c0_i32_0 : i32, i32
  }
  func.func @transform_8(%arg0: i32) -> (i32, i32) {
    %c0_i32 = arith.constant 0 : i32
    %c0_i32_0 = arith.constant 0 : i32
    %c0_i32_1 = arith.constant 0 : i32
    return %c0_i32, %c0_i32_0 : i32, i32
  }
  func.func @transform_9(%arg0: i32) -> (i32, i32, i32) {
    %c0_i32 = arith.constant 0 : i32
    %c0_i32_0 = arith.constant 0 : i32
    %c0_i32_1 = arith.constant 0 : i32
    return %arg0, %c0_i32, %c0_i32_0 : i32, i32, i32
  }
}

</mosaic_0001>

<llo_original>
// kernel: convolutions_forward.1
$region0: #{convolutions_forward.1}
  #allocation0 [shape = 'u32[]', space=smem, size = 0x4, offset = 0x4, fixed_abs, tag = 'smem constant byte address 0x4 - core index']
  #allocation1 [shape = 'u32[144,128]{1,0:T(1,128)}', space=vmem, size = 0x12000, scoped, tag = 'internal scratch']
  #allocation2 [shape = 'f32[72,1502]{1,0:T(8,128)}', space=vmem, size = 0x6c000, scoped, tag = 'scratch operand']
  #allocation3 [shape = 'f32[8,98]{1,0:T(8,128)}', space=vmem, size = 0x1000, scoped, tag = 'scratch operand']
  #allocation4 [shape = 'f32[72,82]{1,0:T(8,128)}', space=vmem, size = 0x9000, scoped, tag = 'scratch operand']
  %s0 = inlined_call_operand.vmem [shape: f32[2,4,1536], index: 0, kind: input, shape index: {}]
  %s1 = inlined_call_operand.vmem [shape: f32[3,8,72], index: 1, kind: input, shape index: {}]
  %s2 = inlined_call_operand.vmem [shape: f32[8,1], index: 2, kind: input, shape index: {}]
  %s3 = inlined_call_operand.vmem [shape: f32[222,49], index: 3, kind: input, shape index: {}]
  %s4 = inlined_call_operand.vmem [shape: f32[8,72], index: 4, kind: input, shape index: {}]
  %s5 = inlined_call_operand.vmem [shape: f32[8,1], index: 5, kind: input, shape index: {}]
  %s6 = inlined_call_operand.vmem [shape: f32[82,18], index: 6, kind: input, shape index: {}]
  %s7 = inlined_call_operand.vmem [shape: f32[16,8], index: 7, kind: input, shape index: {}]
  %s8 = inlined_call_operand.vmem [shape: f32[16,1], index: 8, kind: input, shape index: {}]
  %s9 = inlined_call_operand.vmem [shape: f32[2,16,18], index: 9, kind: output, shape index: {}]
  %s10 = sld [smem:[#allocation0]]
  $region69: #{convolutions_forward.1} parent=0
    _
  %s12 = ssub.s32 1, %s10
  %s13 = scalar_select 0, %s12, %s10
  loop: start=0, step=1, limit=4
  $region2: #{convolutions_forward.1} parent=0 // loop_pre_header
    _
  $region3: #{convolutions_forward.1} parent=0 // loop_header
    %s15 = sphi 0, %s19
    %p16 = scmp.ge.s32.totalorder %s15, 4
    %s25 = sphi 0, %s27
    %s28 = sphi 0, %s25
    %s29 = sphi 0, %s28
    %s45 = sphi 0, %s29
    %s49 = sphi 0, %s49
    %s51 = sphi 0, %s49
    %s52 = sphi 0, %s51
    %s66 = sphi 0, %s52
    %s70 = sphi 0, %s70
    %s72 = sphi 0, %s70
    %s73 = sphi 0, %s72
    %s87 = sphi 0, %s73
    %s91 = sphi 0, %s91
    %s93 = sphi 0, %s91
    %s94 = sphi 0, %s93
    %s108 = sphi 0, %s94
    %s112 = sphi 0, %s112
    %s114 = sphi 0, %s112
    %s115 = sphi 0, %s114
    %s129 = sphi 0, %s115
    %s133 = sphi 0, %s133
    %s135 = sphi 0, %s133
    %s136 = sphi 0, %s135
    %s150 = sphi 0, %s136
    %s154 = sphi 0, %s154
    %s156 = sphi 0, %s154
    %s157 = sphi 0, %s156
    %s171 = sphi 0, %s157
    %s175 = sphi 0, %s175
    %s177 = sphi 0, %s175
    %s178 = sphi 0, %s177
    %s192 = sphi 0, %s178
    %s196 = sphi 0, %s196
    %s198 = sphi 0, %s196
    %s199 = sphi 0, %s198
    %s213 = sphi 0, %s199
    %s219 = sphi 0, %s221
    %s222 = sphi 0, %s219
    %s223 = sphi 0, %s222
    %s239 = sphi 0, %s223
  $region4: #{convolutions_forward.1} parent=0 // loop_header_branch
    %18 = sbr.rel (%p16) target = $region8
  $region5: #{convolutions_forward.1} parent=0 // loop_body
    %s20 = ssub.s32 %s15, 1
    %s21 = ssub.s32 %s15, 2
    %s22 = sadd.s32 %s15, 1
    %s23 = ssub.s32 %s15, %s22
    %p24 = scmp.eq.s32.totalorder %s23, 0
    %s26 = sadd.s32 %s25, 1
    %s27 = scalar_select %p24, %s25, %s26
    %p30 = pneg %p24
    %p31 = scmp.eq.s32.totalorder %s15, 1
    %p32 = por %p30, %p31
    %p33 = scmp.ne.s32.totalorder %s25, %s28
    %p34 = scmp.eq.s32.totalorder %s15, 0
    %p35 = por %p33, %p34
    %p36 = scmp.ne.s32.totalorder %s25, %s28
    %p37 = scmp.eq.s32.totalorder %s20, 1
    %p38 = por %p36, %p37
    %p39 = scmp.ne.s32.totalorder %s28, %s29
    %p40 = scmp.eq.s32.totalorder %s20, 0
    %p41 = por %p39, %p40
    %p42 = scmp.ne.s32.totalorder %s28, %s29
    %p43 = scmp.eq.s32.totalorder %s21, 1
    %p44 = por %p42, %p43
    %p46 = scmp.ne.s32.totalorder %s29, %s45
    %p47 = scmp.eq.s32.totalorder %s21, 0
    %p48 = por %p46, %p47
    %s50 = sadd.s32 %s49, 1
    %p53 = scmp.eq.s32.totalorder %s15, 1
    %p54 = scmp.ne.s32.totalorder %s49, %s51
    %p55 = scmp.eq.s32.totalorder %s15, 0
    %p56 = por %p54, %p55
    %p57 = scmp.ne.s32.totalorder %s49, %s51
    %p58 = scmp.eq.s32.totalorder %s20, 1
    %p59 = por %p57, %p58
    %p60 = scmp.ne.s32.totalorder %s51, %s52
    %p61 = scmp.eq.s32.totalorder %s20, 0
    %p62 = por %p60, %p61
    %p63 = scmp.ne.s32.totalorder %s51, %s52
    %p64 = scmp.eq.s32.totalorder %s21, 1
    %p65 = por %p63, %p64
    %p67 = scmp.ne.s32.totalorder %s52, %s66
    %p68 = scmp.eq.s32.totalorder %s21, 0
    %p69 = por %p67, %p68
    %s71 = sadd.s32 %s70, 1
    %p74 = scmp.eq.s32.totalorder %s15, 1
    %p75 = scmp.ne.s32.totalorder %s70, %s72
    %p76 = scmp.eq.s32.totalorder %s15, 0
    %p77 = por %p75, %p76
    %p78 = scmp.ne.s32.totalorder %s70, %s72
    %p79 = scmp.eq.s32.totalorder %s20, 1
    %p80 = por %p78, %p79
    %p81 = scmp.ne.s32.totalorder %s72, %s73
    %p82 = scmp.eq.s32.totalorder %s20, 0
    %p83 = por %p81, %p82
    %p84 = scmp.ne.s32.totalorder %s72, %s73
    %p85 = scmp.eq.s32.totalorder %s21, 1
    %p86 = por %p84, %p85
    %p88 = scmp.ne.s32.totalorder %s73, %s87
    %p89 = scmp.eq.s32.totalorder %s21, 0
    %p90 = por %p88, %p89
    %s92 = sadd.s32 %s91, 1
    %p95 = scmp.eq.s32.totalorder %s15, 1
    %p96 = scmp.ne.s32.totalorder %s91, %s93
    %p97 = scmp.eq.s32.totalorder %s15, 0
    %p98 = por %p96, %p97
    %p99 = scmp.ne.s32.totalorder %s91, %s93
    %p100 = scmp.eq.s32.totalorder %s20, 1
    %p101 = por %p99, %p100
    %p102 = scmp.ne.s32.totalorder %s93, %s94
    %p103 = scmp.eq.s32.totalorder %s20, 0
    %p104 = por %p102, %p103
    %p105 = scmp.ne.s32.totalorder %s93, %s94
    %p106 = scmp.eq.s32.totalorder %s21, 1
    %p107 = por %p105, %p106
    %p109 = scmp.ne.s32.totalorder %s94, %s108
    %p110 = scmp.eq.s32.totalorder %s21, 0
    %p111 = por %p109, %p110
    %s113 = sadd.s32 %s112, 1
    %p116 = scmp.eq.s32.totalorder %s15, 1
    %p117 = scmp.ne.s32.totalorder %s112, %s114
    %p118 = scmp.eq.s32.totalorder %s15, 0
    %p119 = por %p117, %p118
    %p120 = scmp.ne.s32.totalorder %s112, %s114
    %p121 = scmp.eq.s32.totalorder %s20, 1
    %p122 = por %p120, %p121
    %p123 = scmp.ne.s32.totalorder %s114, %s115
    %p124 = scmp.eq.s32.totalorder %s20, 0
    %p125 = por %p123, %p124
    %p126 = scmp.ne.s32.totalorder %s114, %s115
    %p127 = scmp.eq.s32.totalorder %s21, 1
    %p128 = por %p126, %p127
    %p130 = scmp.ne.s32.totalorder %s115, %s129
    %p131 = scmp.eq.s32.totalorder %s21, 0
    %p132 = por %p130, %p131
    %s134 = sadd.s32 %s133, 1
    %p137 = scmp.eq.s32.totalorder %s15, 1
    %p138 = scmp.ne.s32.totalorder %s133, %s135
    %p139 = scmp.eq.s32.totalorder %s15, 0
    %p140 = por %p138, %p139
    %p141 = scmp.ne.s32.totalorder %s133, %s135
    %p142 = scmp.eq.s32.totalorder %s20, 1
    %p143 = por %p141, %p142
    %p144 = scmp.ne.s32.totalorder %s135, %s136
    %p145 = scmp.eq.s32.totalorder %s20, 0
    %p146 = por %p144, %p145
    %p147 = scmp.ne.s32.totalorder %s135, %s136
    %p148 = scmp.eq.s32.totalorder %s21, 1
    %p149 = por %p147, %p148
    %p151 = scmp.ne.s32.totalorder %s136, %s150
    %p152 = scmp.eq.s32.totalorder %s21, 0
    %p153 = por %p151, %p152
    %s155 = sadd.s32 %s154, 1
    %p158 = scmp.eq.s32.totalorder %s15, 1
    %p159 = scmp.ne.s32.totalorder %s154, %s156
    %p160 = scmp.eq.s32.totalorder %s15, 0
    %p161 = por %p159, %p160
    %p162 = scmp.ne.s32.totalorder %s154, %s156
    %p163 = scmp.eq.s32.totalorder %s20, 1
    %p164 = por %p162, %p163
    %p165 = scmp.ne.s32.totalorder %s156, %s157
    %p166 = scmp.eq.s32.totalorder %s20, 0
    %p167 = por %p165, %p166
    %p168 = scmp.ne.s32.totalorder %s156, %s157
    %p169 = scmp.eq.s32.totalorder %s21, 1
    %p170 = por %p168, %p169
    %p172 = scmp.ne.s32.totalorder %s157, %s171
    %p173 = scmp.eq.s32.totalorder %s21, 0
    %p174 = por %p172, %p173
    %s176 = sadd.s32 %s175, 1
    %p179 = scmp.eq.s32.totalorder %s15, 1
    %p180 = scmp.ne.s32.totalorder %s175, %s177
    %p181 = scmp.eq.s32.totalorder %s15, 0
    %p182 = por %p180, %p181
    %p183 = scmp.ne.s32.totalorder %s175, %s177
    %p184 = scmp.eq.s32.totalorder %s20, 1
    %p185 = por %p183, %p184
    %p186 = scmp.ne.s32.totalorder %s177, %s178
    %p187 = scmp.eq.s32.totalorder %s20, 0
    %p188 = por %p186, %p187
    %p189 = scmp.ne.s32.totalorder %s177, %s178
    %p190 = scmp.eq.s32.totalorder %s21, 1
    %p191 = por %p189, %p190
    %p193 = scmp.ne.s32.totalorder %s178, %s192
    %p194 = scmp.eq.s32.totalorder %s21, 0
    %p195 = por %p193, %p194
    %s197 = sadd.s32 %s196, 1
    %p200 = scmp.eq.s32.totalorder %s15, 1
    %p201 = scmp.ne.s32.totalorder %s196, %s198
    %p202 = scmp.eq.s32.totalorder %s15, 0
    %p203 = por %p201, %p202
    %p204 = scmp.ne.s32.totalorder %s196, %s198
    %p205 = scmp.eq.s32.totalorder %s20, 1
    %p206 = por %p204, %p205
    %p207 = scmp.ne.s32.totalorder %s198, %s199
    %p208 = scmp.eq.s32.totalorder %s20, 0
    %p209 = por %p207, %p208
    %p210 = scmp.ne.s32.totalorder %s198, %s199
    %p211 = scmp.eq.s32.totalorder %s21, 1
    %p212 = por %p210, %p211
    %p214 = scmp.ne.s32.totalorder %s199, %s213
    %p215 = scmp.eq.s32.totalorder %s21, 0
    %p216 = por %p214, %p215
    %s217 = ssub.s32 %s15, %s22
    %p218 = scmp.eq.s32.totalorder %s217, 0
    %s220 = sadd.s32 %s219, 1
    %s221 = scalar_select %p218, %s219, %s220
    %p224 = pneg %p218
    %p225 = scmp.eq.s32.totalorder %s15, 1
    %p226 = por %p224, %p225
    %p227 = scmp.ne.s32.totalorder %s219, %s222
    %p228 = scmp.eq.s32.totalorder %s15, 0
    %p229 = por %p227, %p228
    %p230 = scmp.ne.s32.totalorder %s219, %s222
    %p231 = scmp.eq.s32.totalorder %s20, 1
    %p232 = por %p230, %p231
    %p233 = scmp.ne.s32.totalorder %s222, %s223
    %p234 = scmp.eq.s32.totalorder %s20, 0
    %p235 = por %p233, %p234
    %p236 = scmp.ne.s32.totalorder %s222, %s223
    %p237 = scmp.eq.s32.totalorder %s21, 1
    %p238 = por %p236, %p237
    %p240 = scmp.ne.s32.totalorder %s223, %s239
    %p241 = scmp.eq.s32.totalorder %s21, 0
    %p242 = por %p240, %p241
    %p243 = scmp.le.s32.totalorder 1, %s15
    %p244 = scmp.lt.s32.totalorder %s15, 3
    %p245 = pnand %p243, %p244
    %p246 = pneg %p245
    // Predicated region
    $region9: #{convolutions_forward.1} parent=5 // pred_check
      _
    $region10: #{convolutions_forward.1} parent=5 // pred_check_branch
      %248 = sbr.rel (%p245) target = $region12
    $region11: #{convolutions_forward.1} parent=5 // pred_region
      %s249 = ssub.s32 %s15, 1
      // Predicated region
      $region13: #{convolutions_forward.1} parent=11 // pred_check
        %p250 = pneg %p62
      $region14: #{convolutions_forward.1} parent=11 // pred_check_branch
        %252 = sbr.rel (%p250) target = $region16
      $region15: #{convolutions_forward.1} parent=11 // pred_region
        _
      $region16: #{convolutions_forward.1} parent=11 // pred_fallthru
        _
      // Predicated region
      $region17: #{convolutions_forward.1} parent=11 // pred_check
        %p253 = pneg %p83
      $region18: #{convolutions_forward.1} parent=11 // pred_check_branch
        %255 = sbr.rel (%p253) target = $region20
      $region19: #{convolutions_forward.1} parent=11 // pred_region
        _
      $region20: #{convolutions_forward.1} parent=11 // pred_fallthru
        _
      // Predicated region
      $region21: #{convolutions_forward.1} parent=11 // pred_check
        %p256 = pneg %p104
      $region22: #{convolutions_forward.1} parent=11 // pred_check_branch
        %258 = sbr.rel (%p256) target = $region24
      $region23: #{convolutions_forward.1} parent=11 // pred_region
        _
      $region24: #{convolutions_forward.1} parent=11 // pred_fallthru
        _
      // Predicated region
      $region25: #{convolutions_forward.1} parent=11 // pred_check
        %p259 = pneg %p125
      $region26: #{convolutions_forward.1} parent=11 // pred_check_branch
        %261 = sbr.rel (%p259) target = $region28
      $region27: #{convolutions_forward.1} parent=11 // pred_region
        _
      $region28: #{convolutions_forward.1} parent=11 // pred_fallthru
        _
      // Predicated region
      $region29: #{convolutions_forward.1} parent=11 // pred_check
        %p262 = pneg %p146
      $region30: #{convolutions_forward.1} parent=11 // pred_check_branch
        %264 = sbr.rel (%p262) target = $region32
      $region31: #{convolutions_forward.1} parent=11 // pred_region
        _
      $region32: #{convolutions_forward.1} parent=11 // pred_fallthru
        _
      // Predicated region
      $region33: #{convolutions_forward.1} parent=11 // pred_check
        %p265 = pneg %p167
      $region34: #{convolutions_forward.1} parent=11 // pred_check_branch
        %267 = sbr.rel (%p265) target = $region36
      $region35: #{convolutions_forward.1} parent=11 // pred_region
        _
      $region36: #{convolutions_forward.1} parent=11 // pred_fallthru
        _
      // Predicated region
      $region37: #{convolutions_forward.1} parent=11 // pred_check
        %p268 = pneg %p188
      $region38: #{convolutions_forward.1} parent=11 // pred_check_branch
        %270 = sbr.rel (%p268) target = $region40
      $region39: #{convolutions_forward.1} parent=11 // pred_region
        _
      $region40: #{convolutions_forward.1} parent=11 // pred_fallthru
        _
      // Predicated region
      $region41: #{convolutions_forward.1} parent=11 // pred_check
        %p271 = pneg %p209
      $region42: #{convolutions_forward.1} parent=11 // pred_check_branch
        %273 = sbr.rel (%p271) target = $region44
      $region43: #{convolutions_forward.1} parent=11 // pred_region
        _
      $region44: #{convolutions_forward.1} parent=11 // pred_fallthru
        _
    $region12: #{convolutions_forward.1} parent=5 // pred_fallthru
      _
    %p274 = scmp.lt.s32.totalorder %s15, 2
    // Predicated region
    $region45: #{convolutions_forward.1} parent=5 // pred_check
      %p275 = pneg %p274
    $region46: #{convolutions_forward.1} parent=5 // pred_check_branch
      %277 = sbr.rel (%p275) target = $region48
    $region47: #{convolutions_forward.1} parent=5 // pred_region
      // Predicated region
      $region49: #{convolutions_forward.1} parent=47 // pred_check
        %p278 = pneg %p35
      $region50: #{convolutions_forward.1} parent=47 // pred_check_branch
        %280 = sbr.rel (%p278) target = $region52
      $region51: #{convolutions_forward.1} parent=47 // pred_region
        %p281 = scmp.lt.s32.totalorder %s15, 1
        %s282 = scalar_select %p281, %s15, 1
        %s283 = smul.addr %s282, 12
        %s284 = smul.addr %s283, 4
        %s285 = scalar_lea.vmem %s0, %s284
      $region52: #{convolutions_forward.1} parent=47 // pred_fallthru
        _
    $region48: #{convolutions_forward.1} parent=5 // pred_fallthru
      _
    %p286 = scmp.le.s32.totalorder 1, %s15
    %p287 = scmp.lt.s32.totalorder %s15, 3
    %p288 = pnand %p286, %p287
    %p289 = pneg %p288
    // Predicated region
    $region53: #{convolutions_forward.1} parent=5 // pred_check
      _
    $region54: #{convolutions_forward.1} parent=5 // pred_check_branch
      %291 = sbr.rel (%p288) target = $region56
    $region55: #{convolutions_forward.1} parent=5 // pred_region
      %s292 = ssub.s32 %s15, 1
      %p293 = scmp.lt.s32.totalorder %s20, 1
      %s294 = scalar_select %p293, %s20, 1
      %s295 = smul.addr %s294, 12
      %s296 = smul.addr %s295, 4
      %s297 = scalar_lea.vmem %s0, %s296
      %p298 = pneg %p41
      %p299 = pneg %p38
      %p300 = pneg %p62
      %p301 = pneg %p59
      %p302 = pneg %p83
      %p303 = pneg %p80
      %p304 = pneg %p104
      %p305 = pneg %p101
      %p306 = pneg %p125
      %p307 = pneg %p122
      %p308 = pneg %p146
      %p309 = pneg %p143
      %p310 = pneg %p167
      %p311 = pneg %p164
      %p312 = pneg %p188
      %p313 = pneg %p185
      %p314 = pneg %p209
      %p315 = pneg %p206
      %p316 = pneg %p235
      %p317 = pneg %p232
      %p318 = scmp.lt.s32.totalorder %s20, 1
      %s319 = scalar_select %p318, %s20, 1
      %s320 = smul.addr %s319, 2
      %s321 = smul.addr %s320, 8
      %s322 = scalar_lea.vmem %s9, %s321
      %p323 = scmp.lt.s32.totalorder %s20, 1
      %s324 = scalar_select %p323, %s20, 1
      %s325 = smul.addr %s324, 12
      %s326 = smul.addr %s325, 4
      %s327 = scalar_lea.vmem %s0, %s326
      %p328 = scmp.lt.s32.totalorder %s20, 1
      %s329 = scalar_select %p328, %s20, 1
      %s330 = smul.addr %s329, 2
      %s331 = smul.addr %s330, 8
      %s332 = scalar_lea.vmem %s9, %s331
      %333 = vst [vmem:[#allocation2] sm:$0xff] 0.0
      %334 = vst [vmem:[#allocation2 + $0x8] sm:$0xff] 0.0
      %335 = vst [vmem:[#allocation2 + $0x10] sm:$0xff] 0.0
      %336 = vst [vmem:[#allocation2 + $0x18] sm:$0xff] 0.0
      %337 = vst [vmem:[#allocation2 + $0x20] sm:$0xff] 0.0
      %338 = vst [vmem:[#allocation2 + $0x28] sm:$0xff] 0.0
      %339 = vst [vmem:[#allocation2 + $0x30] sm:$0xff] 0.0
      %340 = vst [vmem:[#allocation2 + $0x38] sm:$0xff] 0.0
      %341 = vst [vmem:[#allocation2 + $0x40] sm:$0xff] 0.0
      %342 = vst [vmem:[#allocation2 + $0x48] sm:$0xff] 0.0
      %343 = vst [vmem:[#allocation2 + $0x50] sm:$0xff] 0.0
      %vm344 = vcmask 769024
      %345 = vst.msk [vmem:[#allocation2 + $0x58] sm:$0xff] %vm344, 0.0
      %346 = vst [vmem:[#allocation2 + $0x60] sm:$0xff] 0.0
      %347 = vst [vmem:[#allocation2 + $0x68] sm:$0xff] 0.0
      %348 = vst [vmem:[#allocation2 + $0x70] sm:$0xff] 0.0
      %349 = vst [vmem:[#allocation2 + $0x78] sm:$0xff] 0.0
      %350 = vst [vmem:[#allocation2 + $0x80] sm:$0xff] 0.0
      %351 = vst [vmem:[#allocation2 + $0x88] sm:$0xff] 0.0
      %352 = vst [vmem:[#allocation2 + $0x90] sm:$0xff] 0.0
      %353 = vst [vmem:[#allocation2 + $0x98] sm:$0xff] 0.0
      %354 = vst [vmem:[#allocation2 + $0xa0] sm:$0xff] 0.0
      %355 = vst [vmem:[#allocation2 + $0xa8] sm:$0xff] 0.0
      %356 = vst [vmem:[#allocation2 + $0xb0] sm:$0xff] 0.0
      %357 = vst.msk [vmem:[#allocation2 + $0xb8] sm:$0xff] %vm344, 0.0
      %358 = vst [vmem:[#allocation2 + $0xc0] sm:$0xff] 0.0
      %359 = vst [vmem:[#allocation2 + $0xc8] sm:$0xff] 0.0
      %360 = vst [vmem:[#allocation2 + $0xd0] sm:$0xff] 0.0
      %361 = vst [vmem:[#allocation2 + $0xd8] sm:$0xff] 0.0
      %362 = vst [vmem:[#allocation2 + $0xe0] sm:$0xff] 0.0
      %363 = vst [vmem:[#allocation2 + $0xe8] sm:$0xff] 0.0
      %364 = vst [vmem:[#allocation2 + $0xf0] sm:$0xff] 0.0
      %365 = vst [vmem:[#allocation2 + $0xf8] sm:$0xff] 0.0
      %366 = vst [vmem:[#allocation2 + $0x100] sm:$0xff] 0.0
      %367 = vst [vmem:[#allocation2 + $0x108] sm:$0xff] 0.0
      %368 = vst [vmem:[#allocation2 + $0x110] sm:$0xff] 0.0
      %369 = vst.msk [vmem:[#allocation2 + $0x118] sm:$0xff] %vm344, 0.0
      %370 = vst [vmem:[#allocation2 + $0x120] sm:$0xff] 0.0
      %371 = vst [vmem:[#allocation2 + $0x128] sm:$0xff] 0.0
      %372 = vst [vmem:[#allocation2 + $0x130] sm:$0xff] 0.0
      %373 = vst [vmem:[#allocation2 + $0x138] sm:$0xff] 0.0
      %374 = vst [vmem:[#allocation2 + $0x140] sm:$0xff] 0.0
      %375 = vst [vmem:[#allocation2 + $0x148] sm:$0xff] 0.0
      %376 = vst [vmem:[#allocation2 + $0x150] sm:$0xff] 0.0
      %377 = vst [vmem:[#allocation2 + $0x158] sm:$0xff] 0.0
      %378 = vst [vmem:[#allocation2 + $0x160] sm:$0xff] 0.0
      %379 = vst [vmem:[#allocation2 + $0x168] sm:$0xff] 0.0
      %380 = vst [vmem:[#allocation2 + $0x170] sm:$0xff] 0.0
      %381 = vst.msk [vmem:[#allocation2 + $0x178] sm:$0xff] %vm344, 0.0
      %382 = vst [vmem:[#allocation2 + $0x180] sm:$0xff] 0.0
      %383 = vst [vmem:[#allocation2 + $0x188] sm:$0xff] 0.0
      %384 = vst [vmem:[#allocation2 + $0x190] sm:$0xff] 0.0
      %385 = vst [vmem:[#allocation2 + $0x198] sm:$0xff] 0.0
      %386 = vst [vmem:[#allocation2 + $0x1a0] sm:$0xff] 0.0
      %387 = vst [vmem:[#allocation2 + $0x1a8] sm:$0xff] 0.0
      %388 = vst [vmem:[#allocation2 + $0x1b0] sm:$0xff] 0.0
      %389 = vst [vmem:[#allocation2 + $0x1b8] sm:$0xff] 0.0
      %390 = vst [vmem:[#allocation2 + $0x1c0] sm:$0xff] 0.0
      %391 = vst [vmem:[#allocation2 + $0x1c8] sm:$0xff] 0.0
      %392 = vst [vmem:[#allocation2 + $0x1d0] sm:$0xff] 0.0
      %393 = vst.msk [vmem:[#allocation2 + $0x1d8] sm:$0xff] %vm344, 0.0
      %394 = vst [vmem:[#allocation2 + $0x1e0] sm:$0xff] 0.0
      %395 = vst [vmem:[#allocation2 + $0x1e8] sm:$0xff] 0.0
      %396 = vst [vmem:[#allocation2 + $0x1f0] sm:$0xff] 0.0
      %397 = vst [vmem:[#allocation2 + $0x1f8] sm:$0xff] 0.0
      %398 = vst [vmem:[#allocation2 + $0x200] sm:$0xff] 0.0
      %399 = vst [vmem:[#allocation2 + $0x208] sm:$0xff] 0.0
      %400 = vst [vmem:[#allocation2 + $0x210] sm:$0xff] 0.0
      %401 = vst [vmem:[#allocation2 + $0x218] sm:$0xff] 0.0
      %402 = vst [vmem:[#allocation2 + $0x220] sm:$0xff] 0.0
      %403 = vst [vmem:[#allocation2 + $0x228] sm:$0xff] 0.0
      %404 = vst [vmem:[#allocation2 + $0x230] sm:$0xff] 0.0
      %405 = vst.msk [vmem:[#allocation2 + $0x238] sm:$0xff] %vm344, 0.0
      %406 = vst [vmem:[#allocation2 + $0x240] sm:$0xff] 0.0
      %407 = vst [vmem:[#allocation2 + $0x248] sm:$0xff] 0.0
      %408 = vst [vmem:[#allocation2 + $0x250] sm:$0xff] 0.0
      %409 = vst [vmem:[#allocation2 + $0x258] sm:$0xff] 0.0
      %410 = vst [vmem:[#allocation2 + $0x260] sm:$0xff] 0.0
      %411 = vst [vmem:[#allocation2 + $0x268] sm:$0xff] 0.0
      %412 = vst [vmem:[#allocation2 + $0x270] sm:$0xff] 0.0
      %413 = vst [vmem:[#allocation2 + $0x278] sm:$0xff] 0.0
      %414 = vst [vmem:[#allocation2 + $0x280] sm:$0xff] 0.0
      %415 = vst [vmem:[#allocation2 + $0x288] sm:$0xff] 0.0
      %416 = vst [vmem:[#allocation2 + $0x290] sm:$0xff] 0.0
      %417 = vst.msk [vmem:[#allocation2 + $0x298] sm:$0xff] %vm344, 0.0
      %418 = vst [vmem:[#allocation2 + $0x2a0] sm:$0xff] 0.0
      %419 = vst [vmem:[#allocation2 + $0x2a8] sm:$0xff] 0.0
      %420 = vst [vmem:[#allocation2 + $0x2b0] sm:$0xff] 0.0
      %421 = vst [vmem:[#allocation2 + $0x2b8] sm:$0xff] 0.0
      %422 = vst [vmem:[#allocation2 + $0x2c0] sm:$0xff] 0.0
      %423 = vst [vmem:[#allocation2 + $0x2c8] sm:$0xff] 0.0
      %424 = vst [vmem:[#allocation2 + $0x2d0] sm:$0xff] 0.0
      %425 = vst [vmem:[#allocation2 + $0x2d8] sm:$0xff] 0.0
      %426 = vst [vmem:[#allocation2 + $0x2e0] sm:$0xff] 0.0
      %427 = vst [vmem:[#allocation2 + $0x2e8] sm:$0xff] 0.0
      %428 = vst [vmem:[#allocation2 + $0x2f0] sm:$0xff] 0.0
      %429 = vst.msk [vmem:[#allocation2 + $0x2f8] sm:$0xff] %vm344, 0.0
      %430 = vst [vmem:[#allocation2 + $0x300] sm:$0xff] 0.0
      %431 = vst [vmem:[#allocation2 + $0x308] sm:$0xff] 0.0
      %432 = vst [vmem:[#allocation2 + $0x310] sm:$0xff] 0.0
      %433 = vst [vmem:[#allocation2 + $0x318] sm:$0xff] 0.0
      %434 = vst [vmem:[#allocation2 + $0x320] sm:$0xff] 0.0
      %435 = vst [vmem:[#allocation2 + $0x328] sm:$0xff] 0.0
      %436 = vst [vmem:[#allocation2 + $0x330] sm:$0xff] 0.0
      %437 = vst [vmem:[#allocation2 + $0x338] sm:$0xff] 0.0
      %438 = vst [vmem:[#allocation2 + $0x340] sm:$0xff] 0.0
      %439 = vst [vmem:[#allocation2 + $0x348] sm:$0xff] 0.0
      %440 = vst [vmem:[#allocation2 + $0x350] sm:$0xff] 0.0
      %441 = vst.msk [vmem:[#allocation2 + $0x358] sm:$0xff] %vm344, 0.0
      %v442 = vld [vmem:[%s327] sm:$0xff]
      %v443 = vld [vmem:[%s327 + $0x8] sm:$0xff]
      %v444 = vld [vmem:[%s327 + $0x10] sm:$0xff]
      %v445 = vld [vmem:[%s327 + $0x18] sm:$0xff]
      %v446 = vld [vmem:[%s327 + $0x20] sm:$0xff]
      %v447 = vld [vmem:[%s327 + $0x28] sm:$0xff]
      %v454 = vcombine.high %v442, %v442
      %v455 = vcombine.high %v443, %v443
      %v456 = vcombine.high %v444, %v444
      %v457 = vcombine.high %v445, %v445
      %v458 = vcombine.high %v446, %v446
      %v459 = vcombine.high %v447, %v447
      %466 = vst [vmem:[#allocation2] sm:$0xf] %v442
      %467 = vst [vmem:[#allocation2 + $0x8] sm:$0xf] %v454
      %468 = vst [vmem:[#allocation2 + $0x10] sm:$0xf] %v443
      %469 = vst [vmem:[#allocation2 + $0x18] sm:$0xf] %v455
      %470 = vst [vmem:[#allocation2 + $0x20] sm:$0xf] %v444
      %471 = vst [vmem:[#allocation2 + $0x28] sm:$0xf] %v456
      %472 = vst [vmem:[#allocation2 + $0x30] sm:$0xf] %v445
      %473 = vst [vmem:[#allocation2 + $0x38] sm:$0xf] %v457
      %474 = vst [vmem:[#allocation2 + $0x40] sm:$0xf] %v446
      %475 = vst [vmem:[#allocation2 + $0x48] sm:$0xf] %v458
      %476 = vst [vmem:[#allocation2 + $0x50] sm:$0xf] %v447
      %vm477 = vcmask 764928
      %478 = vst.msk [vmem:[#allocation2 + $0x58] sm:$0xf] %vm477, %v459
      %v479 = vld [vmem:[%s327] sm:$0xff]
      %v480 = vld [vmem:[%s327 + $0x8] sm:$0xff]
      %v481 = vld [vmem:[%s327 + $0x10] sm:$0xff]
      %v482 = vld [vmem:[%s327 + $0x18] sm:$0xff]
      %v483 = vld [vmem:[%s327 + $0x20] sm:$0xff]
      %v484 = vld [vmem:[%s327 + $0x28] sm:$0xff]
      %v491 = vcombine.high %v479, %v479
      %v492 = vcombine.high %v480, %v480
      %v493 = vcombine.high %v481, %v481
      %v494 = vcombine.high %v482, %v482
      %v495 = vcombine.high %v483, %v483
      %v496 = vcombine.high %v484, %v484
      %497 = vrot.lane.b32.xlu0 %v479, 127
      %v498 = vpop.permute.xlu0 %497
      %499 = vrot.lane.b32.xlu0 %v491, 127
      %v500 = vpop.permute.xlu0 %499
      %501 = vrot.lane.b32.xlu0 %v480, 127
      %v502 = vpop.permute.xlu0 %501
      %503 = vrot.lane.b32.xlu0 %v492, 127
      %v504 = vpop.permute.xlu0 %503
      %505 = vrot.lane.b32.xlu0 %v481, 127
      %v506 = vpop.permute.xlu0 %505
      %507 = vrot.lane.b32.xlu0 %v493, 127
      %v508 = vpop.permute.xlu0 %507
      %509 = vrot.lane.b32.xlu0 %v482, 127
      %v510 = vpop.permute.xlu0 %509
      %511 = vrot.lane.b32.xlu0 %v494, 127
      %v512 = vpop.permute.xlu0 %511
      %513 = vrot.lane.b32.xlu0 %v483, 127
      %v514 = vpop.permute.xlu0 %513
      %515 = vrot.lane.b32.xlu0 %v495, 127
      %v516 = vpop.permute.xlu0 %515
      %517 = vrot.lane.b32.xlu0 %v484, 127
      %v518 = vpop.permute.xlu0 %517
      %519 = vrot.lane.b32.xlu0 %v496, 127
      %v520 = vpop.permute.xlu0 %519
      %vm521 = vcmask 1039360
      %v522 = vsel %vm521, %v498, %v500
      %v523 = vsel %vm521, %v500, %v502
      %v524 = vsel %vm521, %v502, %v504
      %v525 = vsel %vm521, %v504, %v506
      %v526 = vsel %vm521, %v506, %v508
      %v527 = vsel %vm521, %v508, %v510
      %v528 = vsel %vm521, %v510, %v512
      %v529 = vsel %vm521, %v512, %v514
      %v530 = vsel %vm521, %v514, %v516
      %v531 = vsel %vm521, %v516, %v518
      %v532 = vsel %vm521, %v518, %v520
      %545 = vst [vmem:[#allocation2 + $0x60] sm:$0xf] %v522
      %546 = vst [vmem:[#allocation2 + $0x68] sm:$0xf] %v523
      %547 = vst [vmem:[#allocation2 + $0x70] sm:$0xf] %v524
      %548 = vst [vmem:[#allocation2 + $0x78] sm:$0xf] %v525
      %549 = vst [vmem:[#allocation2 + $0x80] sm:$0xf] %v526
      %550 = vst [vmem:[#allocation2 + $0x88] sm:$0xf] %v527
      %551 = vst [vmem:[#allocation2 + $0x90] sm:$0xf] %v528
      %552 = vst [vmem:[#allocation2 + $0x98] sm:$0xf] %v529
      %553 = vst [vmem:[#allocation2 + $0xa0] sm:$0xf] %v530
      %554 = vst [vmem:[#allocation2 + $0xa8] sm:$0xf] %v531
      %555 = vst [vmem:[#allocation2 + $0xb0] sm:$0xf] %v532
      %556 = vst.msk [vmem:[#allocation2 + $0xb8] sm:$0xf] %vm477, %v520
      %v557 = vld [vmem:[%s327] sm:$0xff]
      %v558 = vld [vmem:[%s327 + $0x8] sm:$0xff]
      %v559 = vld [vmem:[%s327 + $0x10] sm:$0xff]
      %v560 = vld [vmem:[%s327 + $0x18] sm:$0xff]
      %v561 = vld [vmem:[%s327 + $0x20] sm:$0xff]
      %v562 = vld [vmem:[%s327 + $0x28] sm:$0xff]
      %v569 = vcombine.high %v557, %v557
      %v570 = vcombine.high %v558, %v558
      %v571 = vcombine.high %v559, %v559
      %v572 = vcombine.high %v560, %v560
      %v573 = vcombine.high %v561, %v561
      %v574 = vcombine.high %v562, %v562
      %575 = vrot.lane.b32.xlu0 %v557, 126
      %v576 = vpop.permute.xlu0 %575
      %577 = vrot.lane.b32.xlu0 %v569, 126
      %v578 = vpop.permute.xlu0 %577
      %579 = vrot.lane.b32.xlu0 %v558, 126
      %v580 = vpop.permute.xlu0 %579
      %581 = vrot.lane.b32.xlu0 %v570, 126
      %v582 = vpop.permute.xlu0 %581
      %583 = vrot.lane.b32.xlu0 %v559, 126
      %v584 = vpop.permute.xlu0 %583
      %585 = vrot.lane.b32.xlu0 %v571, 126
      %v586 = vpop.permute.xlu0 %585
      %587 = vrot.lane.b32.xlu0 %v560, 126
      %v588 = vpop.permute.xlu0 %587
      %589 = vrot.lane.b32.xlu0 %v572, 126
      %v590 = vpop.permute.xlu0 %589
      %591 = vrot.lane.b32.xlu0 %v561, 126
      %v592 = vpop.permute.xlu0 %591
      %593 = vrot.lane.b32.xlu0 %v573, 126
      %v594 = vpop.permute.xlu0 %593
      %595 = vrot.lane.b32.xlu0 %v562, 126
      %v596 = vpop.permute.xlu0 %595
      %597 = vrot.lane.b32.xlu0 %v574, 126
      %v598 = vpop.permute.xlu0 %597
      %vm599 = vcmask 1031168
      %v600 = vsel %vm599, %v576, %v578
      %v601 = vsel %vm599, %v578, %v580
      %v602 = vsel %vm599, %v580, %v582
      %v603 = vsel %vm599, %v582, %v584
      %v604 = vsel %vm599, %v584, %v586
      %v605 = vsel %vm599, %v586, %v588
      %v606 = vsel %vm599, %v588, %v590
      %v607 = vsel %vm599, %v590, %v592
      %v608 = vsel %vm599, %v592, %v594
      %v609 = vsel %vm599, %v594, %v596
      %v610 = vsel %vm599, %v596, %v598
      %623 = vst [vmem:[#allocation2 + $0xc0] sm:$0xf] %v600
      %624 = vst [vmem:[#allocation2 + $0xc8] sm:$0xf] %v601
      %625 = vst [vmem:[#allocation2 + $0xd0] sm:$0xf] %v602
      %626 = vst [vmem:[#allocation2 + $0xd8] sm:$0xf] %v603
      %627 = vst [vmem:[#allocation2 + $0xe0] sm:$0xf] %v604
      %628 = vst [vmem:[#allocation2 + $0xe8] sm:$0xf] %v605
      %629 = vst [vmem:[#allocation2 + $0xf0] sm:$0xf] %v606
      %630 = vst [vmem:[#allocation2 + $0xf8] sm:$0xf] %v607
      %631 = vst [vmem:[#allocation2 + $0x100] sm:$0xf] %v608
      %632 = vst [vmem:[#allocation2 + $0x108] sm:$0xf] %v609
      %633 = vst [vmem:[#allocation2 + $0x110] sm:$0xf] %v610
      %634 = vst.msk [vmem:[#allocation2 + $0x118] sm:$0xf] %vm477, %v598
      %v635 = vld [vmem:[%s327] sm:$0xff]
      %v636 = vld [vmem:[%s327 + $0x8] sm:$0xff]
      %v637 = vld [vmem:[%s327 + $0x10] sm:$0xff]
      %v638 = vld [vmem:[%s327 + $0x18] sm:$0xff]
      %v639 = vld [vmem:[%s327 + $0x20] sm:$0xff]
      %v640 = vld [vmem:[%s327 + $0x28] sm:$0xff]
      %v647 = vcombine.high %v635, %v635
      %v648 = vcombine.high %v636, %v636
      %v649 = vcombine.high %v637, %v637
      %v650 = vcombine.high %v638, %v638
      %v651 = vcombine.high %v639, %v639
      %v652 = vcombine.high %v640, %v640
      %653 = vrot.lane.b32.xlu0 %v635, 112
      %v654 = vpop.permute.xlu0 %653
      %655 = vrot.lane.b32.xlu0 %v647, 112
      %v656 = vpop.permute.xlu0 %655
      %657 = vrot.lane.b32.xlu0 %v636, 112
      %v658 = vpop.permute.xlu0 %657
      %659 = vrot.lane.b32.xlu0 %v648, 112
      %v660 = vpop.permute.xlu0 %659
      %661 = vrot.lane.b32.xlu0 %v637, 112
      %v662 = vpop.permute.xlu0 %661
      %663 = vrot.lane.b32.xlu0 %v649, 112
      %v664 = vpop.permute.xlu0 %663
      %665 = vrot.lane.b32.xlu0 %v638, 112
      %v666 = vpop.permute.xlu0 %665
      %667 = vrot.lane.b32.xlu0 %v650, 112
      %v668 = vpop.permute.xlu0 %667
      %669 = vrot.lane.b32.xlu0 %v639, 112
      %v670 = vpop.permute.xlu0 %669
      %671 = vrot.lane.b32.xlu0 %v651, 112
      %v672 = vpop.permute.xlu0 %671
      %673 = vrot.lane.b32.xlu0 %v640, 112
      %v674 = vpop.permute.xlu0 %673
      %675 = vrot.lane.b32.xlu0 %v652, 112
      %v676 = vpop.permute.xlu0 %675
      %vm677 = vcmask 916480
      %v678 = vsel %vm677, %v654, %v656
      %v679 = vsel %vm677, %v656, %v658
      %v680 = vsel %vm677, %v658, %v660
      %v681 = vsel %vm677, %v660, %v662
      %v682 = vsel %vm677, %v662, %v664
      %v683 = vsel %vm677, %v664, %v666
      %v684 = vsel %vm677, %v666, %v668
      %v685 = vsel %vm677, %v668, %v670
      %v686 = vsel %vm677, %v670, %v672
      %v687 = vsel %vm677, %v672, %v674
      %v688 = vsel %vm677, %v674, %v676
      %701 = vst [vmem:[#allocation2 + $0x120] sm:$0xf] %v678
      %702 = vst [vmem:[#allocation2 + $0x128] sm:$0xf] %v679
      %703 = vst [vmem:[#allocation2 + $0x130] sm:$0xf] %v680
      %704 = vst [vmem:[#allocation2 + $0x138] sm:$0xf] %v681
      %705 = vst [vmem:[#allocation2 + $0x140] sm:$0xf] %v682
      %706 = vst [vmem:[#allocation2 + $0x148] sm:$0xf] %v683
      %707 = vst [vmem:[#allocation2 + $0x150] sm:$0xf] %v684
      %708 = vst [vmem:[#allocation2 + $0x158] sm:$0xf] %v685
      %709 = vst [vmem:[#allocation2 + $0x160] sm:$0xf] %v686
      %710 = vst [vmem:[#allocation2 + $0x168] sm:$0xf] %v687
      %711 = vst [vmem:[#allocation2 + $0x170] sm:$0xf] %v688
      %712 = vst.msk [vmem:[#allocation2 + $0x178] sm:$0xf] %vm477, %v676
      %v713 = vld [vmem:[%s327] sm:$0xff]
      %v714 = vld [vmem:[%s327 + $0x8] sm:$0xff]
      %v715 = vld [vmem:[%s327 + $0x10] sm:$0xff]
      %v716 = vld [vmem:[%s327 + $0x18] sm:$0xff]
      %v717 = vld [vmem:[%s327 + $0x20] sm:$0xff]
      %v718 = vld [vmem:[%s327 + $0x28] sm:$0xff]
      %v725 = vcombine.high %v713, %v713
      %v726 = vcombine.high %v714, %v714
      %v727 = vcombine.high %v715, %v715
      %v728 = vcombine.high %v716, %v716
      %v729 = vcombine.high %v717, %v717
      %v730 = vcombine.high %v718, %v718
      %731 = vrot.lane.b32.xlu0 %v713, 111
      %v732 = vpop.permute.xlu0 %731
      %733 = vrot.lane.b32.xlu0 %v725, 111
      %v734 = vpop.permute.xlu0 %733
      %735 = vrot.lane.b32.xlu0 %v714, 111
      %v736 = vpop.permute.xlu0 %735
      %737 = vrot.lane.b32.xlu0 %v726, 111
      %v738 = vpop.permute.xlu0 %737
      %739 = vrot.lane.b32.xlu0 %v715, 111
      %v740 = vpop.permute.xlu0 %739
      %741 = vrot.lane.b32.xlu0 %v727, 111
      %v742 = vpop.permute.xlu0 %741
      %743 = vrot.lane.b32.xlu0 %v716, 111
      %v744 = vpop.permute.xlu0 %743
      %745 = vrot.lane.b32.xlu0 %v728, 111
      %v746 = vpop.permute.xlu0 %745
      %747 = vrot.lane.b32.xlu0 %v717, 111
      %v748 = vpop.permute.xlu0 %747
      %749 = vrot.lane.b32.xlu0 %v729, 111
      %v750 = vpop.permute.xlu0 %749
      %751 = vrot.lane.b32.xlu0 %v718, 111
      %v752 = vpop.permute.xlu0 %751
      %753 = vrot.lane.b32.xlu0 %v730, 111
      %v754 = vpop.permute.xlu0 %753
      %vm755 = vcmask 908288
      %v756 = vsel %vm755, %v732, %v734
      %v757 = vsel %vm755, %v734, %v736
      %v758 = vsel %vm755, %v736, %v738
      %v759 = vsel %vm755, %v738, %v740
      %v760 = vsel %vm755, %v740, %v742
      %v761 = vsel %vm755, %v742, %v744
      %v762 = vsel %vm755, %v744, %v746
      %v763 = vsel %vm755, %v746, %v748
      %v764 = vsel %vm755, %v748, %v750
      %v765 = vsel %vm755, %v750, %v752
      %v766 = vsel %vm755, %v752, %v754
      %779 = vst [vmem:[#allocation2 + $0x180] sm:$0xf] %v756
      %780 = vst [vmem:[#allocation2 + $0x188] sm:$0xf] %v757
      %781 = vst [vmem:[#allocation2 + $0x190] sm:$0xf] %v758
      %782 = vst [vmem:[#allocation2 + $0x198] sm:$0xf] %v759
      %783 = vst [vmem:[#allocation2 + $0x1a0] sm:$0xf] %v760
      %784 = vst [vmem:[#allocation2 + $0x1a8] sm:$0xf] %v761
      %785 = vst [vmem:[#allocation2 + $0x1b0] sm:$0xf] %v762
      %786 = vst [vmem:[#allocation2 + $0x1b8] sm:$0xf] %v763
      %787 = vst [vmem:[#allocation2 + $0x1c0] sm:$0xf] %v764
      %788 = vst [vmem:[#allocation2 + $0x1c8] sm:$0xf] %v765
      %789 = vst [vmem:[#allocation2 + $0x1d0] sm:$0xf] %v766
      %790 = vst.msk [vmem:[#allocation2 + $0x1d8] sm:$0xf] %vm477, %v754
      %v791 = vld [vmem:[%s327] sm:$0xff]
      %v792 = vld [vmem:[%s327 + $0x8] sm:$0xff]
      %v793 = vld [vmem:[%s327 + $0x10] sm:$0xff]
      %v794 = vld [vmem:[%s327 + $0x18] sm:$0xff]
      %v795 = vld [vmem:[%s327 + $0x20] sm:$0xff]
      %v796 = vld [vmem:[%s327 + $0x28] sm:$0xff]
      %v803 = vcombine.high %v791, %v791
      %v804 = vcombine.high %v792, %v792
      %v805 = vcombine.high %v793, %v793
      %v806 = vcombine.high %v794, %v794
      %v807 = vcombine.high %v795, %v795
      %v808 = vcombine.high %v796, %v796
      %809 = vrot.lane.b32.xlu0 %v791, 110
      %v810 = vpop.permute.xlu0 %809
      %811 = vrot.lane.b32.xlu0 %v803, 110
      %v812 = vpop.permute.xlu0 %811
      %813 = vrot.lane.b32.xlu0 %v792, 110
      %v814 = vpop.permute.xlu0 %813
      %815 = vrot.lane.b32.xlu0 %v804, 110
      %v816 = vpop.permute.xlu0 %815
      %817 = vrot.lane.b32.xlu0 %v793, 110
      %v818 = vpop.permute.xlu0 %817
      %819 = vrot.lane.b32.xlu0 %v805, 110
      %v820 = vpop.permute.xlu0 %819
      %821 = vrot.lane.b32.xlu0 %v794, 110
      %v822 = vpop.permute.xlu0 %821
      %823 = vrot.lane.b32.xlu0 %v806, 110
      %v824 = vpop.permute.xlu0 %823
      %825 = vrot.lane.b32.xlu0 %v795, 110
      %v826 = vpop.permute.xlu0 %825
      %827 = vrot.lane.b32.xlu0 %v807, 110
      %v828 = vpop.permute.xlu0 %827
      %829 = vrot.lane.b32.xlu0 %v796, 110
      %v830 = vpop.permute.xlu0 %829
      %831 = vrot.lane.b32.xlu0 %v808, 110
      %v832 = vpop.permute.xlu0 %831
      %vm833 = vcmask 900096
      %v834 = vsel %vm833, %v810, %v812
      %v835 = vsel %vm833, %v812, %v814
      %v836 = vsel %vm833, %v814, %v816
      %v837 = vsel %vm833, %v816, %v818
      %v838 = vsel %vm833, %v818, %v820
      %v839 = vsel %vm833, %v820, %v822
      %v840 = vsel %vm833, %v822, %v824
      %v841 = vsel %vm833, %v824, %v826
      %v842 = vsel %vm833, %v826, %v828
      %v843 = vsel %vm833, %v828, %v830
      %v844 = vsel %vm833, %v830, %v832
      %857 = vst [vmem:[#allocation2 + $0x1e0] sm:$0xf] %v834
      %858 = vst [vmem:[#allocation2 + $0x1e8] sm:$0xf] %v835
      %859 = vst [vmem:[#allocation2 + $0x1f0] sm:$0xf] %v836
      %860 = vst [vmem:[#allocation2 + $0x1f8] sm:$0xf] %v837
      %861 = vst [vmem:[#allocation2 + $0x200] sm:$0xf] %v838
      %862 = vst [vmem:[#allocation2 + $0x208] sm:$0xf] %v839
      %863 = vst [vmem:[#allocation2 + $0x210] sm:$0xf] %v840
      %864 = vst [vmem:[#allocation2 + $0x218] sm:$0xf] %v841
      %865 = vst [vmem:[#allocation2 + $0x220] sm:$0xf] %v842
      %866 = vst [vmem:[#allocation2 + $0x228] sm:$0xf] %v843
      %867 = vst [vmem:[#allocation2 + $0x230] sm:$0xf] %v844
      %868 = vst.msk [vmem:[#allocation2 + $0x238] sm:$0xf] %vm477, %v832
      %v869 = vld [vmem:[%s327] sm:$0xff]
      %v870 = vld [vmem:[%s327 + $0x8] sm:$0xff]
      %v871 = vld [vmem:[%s327 + $0x10] sm:$0xff]
      %v872 = vld [vmem:[%s327 + $0x18] sm:$0xff]
      %v873 = vld [vmem:[%s327 + $0x20] sm:$0xff]
      %v874 = vld [vmem:[%s327 + $0x28] sm:$0xff]
      %v881 = vcombine.high %v869, %v869
      %v882 = vcombine.high %v870, %v870
      %v883 = vcombine.high %v871, %v871
      %v884 = vcombine.high %v872, %v872
      %v885 = vcombine.high %v873, %v873
      %v886 = vcombine.high %v874, %v874
      %887 = vrot.lane.b32.xlu0 %v869, 96
      %v888 = vpop.permute.xlu0 %887
      %889 = vrot.lane.b32.xlu0 %v881, 96
      %v890 = vpop.permute.xlu0 %889
      %891 = vrot.lane.b32.xlu0 %v870, 96
      %v892 = vpop.permute.xlu0 %891
      %893 = vrot.lane.b32.xlu0 %v882, 96
      %v894 = vpop.permute.xlu0 %893
      %895 = vrot.lane.b32.xlu0 %v871, 96
      %v896 = vpop.permute.xlu0 %895
      %897 = vrot.lane.b32.xlu0 %v883, 96
      %v898 = vpop.permute.xlu0 %897
      %899 = vrot.lane.b32.xlu0 %v872, 96
      %v900 = vpop.permute.xlu0 %899
      %901 = vrot.lane.b32.xlu0 %v884, 96
      %v902 = vpop.permute.xlu0 %901
      %903 = vrot.lane.b32.xlu0 %v873, 96
      %v904 = vpop.permute.xlu0 %903
      %905 = vrot.lane.b32.xlu0 %v885, 96
      %v906 = vpop.permute.xlu0 %905
      %907 = vrot.lane.b32.xlu0 %v874, 96
      %v908 = vpop.permute.xlu0 %907
      %909 = vrot.lane.b32.xlu0 %v886, 96
      %v910 = vpop.permute.xlu0 %909
      %vm911 = vcmask 785408
      %v912 = vsel %vm911, %v888, %v890
      %v913 = vsel %vm911, %v890, %v892
      %v914 = vsel %vm911, %v892, %v894
      %v915 = vsel %vm911, %v894, %v896
      %v916 = vsel %vm911, %v896, %v898
      %v917 = vsel %vm911, %v898, %v900
      %v918 = vsel %vm911, %v900, %v902
      %v919 = vsel %vm911, %v902, %v904
      %v920 = vsel %vm911, %v904, %v906
      %v921 = vsel %vm911, %v906, %v908
      %v922 = vsel %vm911, %v908, %v910
      %935 = vst [vmem:[#allocation2 + $0x240] sm:$0xf] %v912
      %936 = vst [vmem:[#allocation2 + $0x248] sm:$0xf] %v913
      %937 = vst [vmem:[#allocation2 + $0x250] sm:$0xf] %v914
      %938 = vst [vmem:[#allocation2 + $0x258] sm:$0xf] %v915
      %939 = vst [vmem:[#allocation2 + $0x260] sm:$0xf] %v916
      %940 = vst [vmem:[#allocation2 + $0x268] sm:$0xf] %v917
      %941 = vst [vmem:[#allocation2 + $0x270] sm:$0xf] %v918
      %942 = vst [vmem:[#allocation2 + $0x278] sm:$0xf] %v919
      %943 = vst [vmem:[#allocation2 + $0x280] sm:$0xf] %v920
      %944 = vst [vmem:[#allocation2 + $0x288] sm:$0xf] %v921
      %945 = vst [vmem:[#allocation2 + $0x290] sm:$0xf] %v922
      %946 = vst.msk [vmem:[#allocation2 + $0x298] sm:$0xf] %vm477, %v910
      %v947 = vld [vmem:[%s327] sm:$0xff]
      %v948 = vld [vmem:[%s327 + $0x8] sm:$0xff]
      %v949 = vld [vmem:[%s327 + $0x10] sm:$0xff]
      %v950 = vld [vmem:[%s327 + $0x18] sm:$0xff]
      %v951 = vld [vmem:[%s327 + $0x20] sm:$0xff]
      %v952 = vld [vmem:[%s327 + $0x28] sm:$0xff]
      %v959 = vcombine.high %v947, %v947
      %v960 = vcombine.high %v948, %v948
      %v961 = vcombine.high %v949, %v949
      %v962 = vcombine.high %v950, %v950
      %v963 = vcombine.high %v951, %v951
      %v964 = vcombine.high %v952, %v952
      %965 = vrot.lane.b32.xlu0 %v947, 95
      %v966 = vpop.permute.xlu0 %965
      %967 = vrot.lane.b32.xlu0 %v959, 95
      %v968 = vpop.permute.xlu0 %967
      %969 = vrot.lane.b32.xlu0 %v948, 95
      %v970 = vpop.permute.xlu0 %969
      %971 = vrot.lane.b32.xlu0 %v960, 95
      %v972 = vpop.permute.xlu0 %971
      %973 = vrot.lane.b32.xlu0 %v949, 95
      %v974 = vpop.permute.xlu0 %973
      %975 = vrot.lane.b32.xlu0 %v961, 95
      %v976 = vpop.permute.xlu0 %975
      %977 = vrot.lane.b32.xlu0 %v950, 95
      %v978 = vpop.permute.xlu0 %977
      %979 = vrot.lane.b32.xlu0 %v962, 95
      %v980 = vpop.permute.xlu0 %979
      %981 = vrot.lane.b32.xlu0 %v951, 95
      %v982 = vpop.permute.xlu0 %981
      %983 = vrot.lane.b32.xlu0 %v963, 95
      %v984 = vpop.permute.xlu0 %983
      %985 = vrot.lane.b32.xlu0 %v952, 95
      %v986 = vpop.permute.xlu0 %985
      %987 = vrot.lane.b32.xlu0 %v964, 95
      %v988 = vpop.permute.xlu0 %987
      %vm989 = vcmask 777216
      %v990 = vsel %vm989, %v966, %v968
      %v991 = vsel %vm989, %v968, %v970
      %v992 = vsel %vm989, %v970, %v972
      %v993 = vsel %vm989, %v972, %v974
      %v994 = vsel %vm989, %v974, %v976
      %v995 = vsel %vm989, %v976, %v978
      %v996 = vsel %vm989, %v978, %v980
      %v997 = vsel %vm989, %v980, %v982
      %v998 = vsel %vm989, %v982, %v984
      %v999 = vsel %vm989, %v984, %v986
      %v1000 = vsel %vm989, %v986, %v988
      %1013 = vst [vmem:[#allocation2 + $0x2a0] sm:$0xf] %v990
      %1014 = vst [vmem:[#allocation2 + $0x2a8] sm:$0xf] %v991
      %1015 = vst [vmem:[#allocation2 + $0x2b0] sm:$0xf] %v992
      %1016 = vst [vmem:[#allocation2 + $0x2b8] sm:$0xf] %v993
      %1017 = vst [vmem:[#allocation2 + $0x2c0] sm:$0xf] %v994
      %1018 = vst [vmem:[#allocation2 + $0x2c8] sm:$0xf] %v995
      %1019 = vst [vmem:[#allocation2 + $0x2d0] sm:$0xf] %v996
      %1020 = vst [vmem:[#allocation2 + $0x2d8] sm:$0xf] %v997
      %1021 = vst [vmem:[#allocation2 + $0x2e0] sm:$0xf] %v998
      %1022 = vst [vmem:[#allocation2 + $0x2e8] sm:$0xf] %v999
      %1023 = vst [vmem:[#allocation2 + $0x2f0] sm:$0xf] %v1000
      %1024 = vst.msk [vmem:[#allocation2 + $0x2f8] sm:$0xf] %vm477, %v988
      %v1025 = vld [vmem:[%s327] sm:$0xff]
      %v1026 = vld [vmem:[%s327 + $0x8] sm:$0xff]
      %v1027 = vld [vmem:[%s327 + $0x10] sm:$0xff]
      %v1028 = vld [vmem:[%s327 + $0x18] sm:$0xff]
      %v1029 = vld [vmem:[%s327 + $0x20] sm:$0xff]
      %v1030 = vld [vmem:[%s327 + $0x28] sm:$0xff]
      %v1037 = vcombine.high %v1025, %v1025
      %v1038 = vcombine.high %v1026, %v1026
      %v1039 = vcombine.high %v1027, %v1027
      %v1040 = vcombine.high %v1028, %v1028
      %v1041 = vcombine.high %v1029, %v1029
      %v1042 = vcombine.high %v1030, %v1030
      %1043 = vrot.lane.b32.xlu0 %v1025, 94
      %v1044 = vpop.permute.xlu0 %1043
      %1045 = vrot.lane.b32.xlu0 %v1037, 94
      %v1046 = vpop.permute.xlu0 %1045
      %1047 = vrot.lane.b32.xlu0 %v1026, 94
      %v1048 = vpop.permute.xlu0 %1047
      %1049 = vrot.lane.b32.xlu0 %v1038, 94
      %v1050 = vpop.permute.xlu0 %1049
      %1051 = vrot.lane.b32.xlu0 %v1027, 94
      %v1052 = vpop.permute.xlu0 %1051
      %1053 = vrot.lane.b32.xlu0 %v1039, 94
      %v1054 = vpop.permute.xlu0 %1053
      %1055 = vrot.lane.b32.xlu0 %v1028, 94
      %v1056 = vpop.permute.xlu0 %1055
      %1057 = vrot.lane.b32.xlu0 %v1040, 94
      %v1058 = vpop.permute.xlu0 %1057
      %1059 = vrot.lane.b32.xlu0 %v1029, 94
      %v1060 = vpop.permute.xlu0 %1059
      %1061 = vrot.lane.b32.xlu0 %v1041, 94
      %v1062 = vpop.permute.xlu0 %1061
      %1063 = vrot.lane.b32.xlu0 %v1030, 94
      %v1064 = vpop.permute.xlu0 %1063
      %1065 = vrot.lane.b32.xlu0 %v1042, 94
      %v1066 = vpop.permute.xlu0 %1065
      %v1067 = vsel %vm344, %v1044, %v1046
      %v1068 = vsel %vm344, %v1046, %v1048
      %v1069 = vsel %vm344, %v1048, %v1050
      %v1070 = vsel %vm344, %v1050, %v1052
      %v1071 = vsel %vm344, %v1052, %v1054
      %v1072 = vsel %vm344, %v1054, %v1056
      %v1073 = vsel %vm344, %v1056, %v1058
      %v1074 = vsel %vm344, %v1058, %v1060
      %v1075 = vsel %vm344, %v1060, %v1062
      %v1076 = vsel %vm344, %v1062, %v1064
      %v1077 = vsel %vm344, %v1064, %v1066
      %1090 = vst [vmem:[#allocation2 + $0x300] sm:$0xf] %v1067
      %1091 = vst [vmem:[#allocation2 + $0x308] sm:$0xf] %v1068
      %1092 = vst [vmem:[#allocation2 + $0x310] sm:$0xf] %v1069
      %1093 = vst [vmem:[#allocation2 + $0x318] sm:$0xf] %v1070
      %1094 = vst [vmem:[#allocation2 + $0x320] sm:$0xf] %v1071
      %1095 = vst [vmem:[#allocation2 + $0x328] sm:$0xf] %v1072
      %1096 = vst [vmem:[#allocation2 + $0x330] sm:$0xf] %v1073
      %1097 = vst [vmem:[#allocation2 + $0x338] sm:$0xf] %v1074
      %1098 = vst [vmem:[#allocation2 + $0x340] sm:$0xf] %v1075
      %1099 = vst [vmem:[#allocation2 + $0x348] sm:$0xf] %v1076
      %1100 = vst [vmem:[#allocation2 + $0x350] sm:$0xf] %v1077
      %1101 = vst.msk [vmem:[#allocation2 + $0x358] sm:$0xf] %vm477, %v1066
      %v1102 = vld [vmem:[%s1] sm:$0xff]
      %v1103 = vld [vmem:[#allocation2] sm:$0xff]
      %v1104 = vld [vmem:[#allocation2 + $0x8] sm:$0xff]
      %v1105 = vld [vmem:[#allocation2 + $0x10] sm:$0xff]
      %v1106 = vld [vmem:[#allocation2 + $0x18] sm:$0xff]
      %v1107 = vld [vmem:[#allocation2 + $0x20] sm:$0xff]
      %v1108 = vld [vmem:[#allocation2 + $0x28] sm:$0xff]
      %v1109 = vld [vmem:[#allocation2 + $0x30] sm:$0xff]
      %v1110 = vld [vmem:[#allocation2 + $0x38] sm:$0xff]
      %v1111 = vld [vmem:[#allocation2 + $0x60] sm:$0xff]
      %v1112 = vld [vmem:[#allocation2 + $0x68] sm:$0xff]
      %v1113 = vld [vmem:[#allocation2 + $0x70] sm:$0xff]
      %v1114 = vld [vmem:[#allocation2 + $0x78] sm:$0xff]
      %v1115 = vld [vmem:[#allocation2 + $0x80] sm:$0xff]
      %v1116 = vld [vmem:[#allocation2 + $0x88] sm:$0xff]
      %v1117 = vld [vmem:[#allocation2 + $0x90] sm:$0xff]
      %v1118 = vld [vmem:[#allocation2 + $0x98] sm:$0xff]
      %v1119 = vld [vmem:[#allocation2 + $0xc0] sm:$0xff]
      %v1120 = vld [vmem:[#allocation2 + $0xc8] sm:$0xff]
      %v1121 = vld [vmem:[#allocation2 + $0xd0] sm:$0xff]
      %v1122 = vld [vmem:[#allocation2 + $0xd8] sm:$0xff]
      %v1123 = vld [vmem:[#allocation2 + $0xe0] sm:$0xff]
      %v1124 = vld [vmem:[#allocation2 + $0xe8] sm:$0xff]
      %v1125 = vld [vmem:[#allocation2 + $0xf0] sm:$0xff]
      %v1126 = vld [vmem:[#allocation2 + $0xf8] sm:$0xff]
      %v1127 = vld [vmem:[#allocation2 + $0x120] sm:$0xff]
      %v1128 = vld [vmem:[#allocation2 + $0x128] sm:$0xff]
      %v1129 = vld [vmem:[#allocation2 + $0x130] sm:$0xff]
      %v1130 = vld [vmem:[#allocation2 + $0x138] sm:$0xff]
      %v1131 = vld [vmem:[#allocation2 + $0x140] sm:$0xff]
      %v1132 = vld [vmem:[#allocation2 + $0x148] sm:$0xff]
      %v1133 = vld [vmem:[#allocation2 + $0x150] sm:$0xff]
      %v1134 = vld [vmem:[#allocation2 + $0x158] sm:$0xff]
      %v1135 = vld [vmem:[#allocation2 + $0x180] sm:$0xff]
      %v1136 = vld [vmem:[#allocation2 + $0x188] sm:$0xff]
      %v1137 = vld [vmem:[#allocation2 + $0x190] sm:$0xff]
      %v1138 = vld [vmem:[#allocation2 + $0x198] sm:$0xff]
      %v1139 = vld [vmem:[#allocation2 + $0x1a0] sm:$0xff]
      %v1140 = vld [vmem:[#allocation2 + $0x1a8] sm:$0xff]
      %v1141 = vld [vmem:[#allocation2 + $0x1b0] sm:$0xff]
      %v1142 = vld [vmem:[#allocation2 + $0x1b8] sm:$0xff]
      %v1143 = vld [vmem:[#allocation2 + $0x1e0] sm:$0xff]
      %v1144 = vld [vmem:[#allocation2 + $0x1e8] sm:$0xff]
      %v1145 = vld [vmem:[#allocation2 + $0x1f0] sm:$0xff]
      %v1146 = vld [vmem:[#allocation2 + $0x1f8] sm:$0xff]
      %v1147 = vld [vmem:[#allocation2 + $0x200] sm:$0xff]
      %v1148 = vld [vmem:[#allocation2 + $0x208] sm:$0xff]
      %v1149 = vld [vmem:[#allocation2 + $0x210] sm:$0xff]
      %v1150 = vld [vmem:[#allocation2 + $0x218] sm:$0xff]
      %v1151 = vld [vmem:[#allocation2 + $0x240] sm:$0xff]
      %v1152 = vld [vmem:[#allocation2 + $0x248] sm:$0xff]
      %v1153 = vld [vmem:[#allocation2 + $0x250] sm:$0xff]
      %v1154 = vld [vmem:[#allocation2 + $0x258] sm:$0xff]
      %v1155 = vld [vmem:[#allocation2 + $0x260] sm:$0xff]
      %v1156 = vld [vmem:[#allocation2 + $0x268] sm:$0xff]
      %v1157 = vld [vmem:[#allocation2 + $0x270] sm:$0xff]
      %v1158 = vld [vmem:[#allocation2 + $0x278] sm:$0xff]
      %v1159 = vld [vmem:[#allocation2 + $0x2a0] sm:$0xff]
      %v1160 = vld [vmem:[#allocation2 + $0x2a8] sm:$0xff]
      %v1161 = vld [vmem:[#allocation2 + $0x2b0] sm:$0xff]
      %v1162 = vld [vmem:[#allocation2 + $0x2b8] sm:$0xff]
      %v1163 = vld [vmem:[#allocation2 + $0x2c0] sm:$0xff]
      %v1164 = vld [vmem:[#allocation2 + $0x2c8] sm:$0xff]
      %v1165 = vld [vmem:[#allocation2 + $0x2d0] sm:$0xff]
      %v1166 = vld [vmem:[#allocation2 + $0x2d8] sm:$0xff]
      %v1167 = vld [vmem:[#allocation2 + $0x300] sm:$0xff]
      %v1168 = vld [vmem:[#allocation2 + $0x308] sm:$0xff]
      %v1169 = vld [vmem:[#allocation2 + $0x310] sm:$0xff]
      %v1170 = vld [vmem:[#allocation2 + $0x318] sm:$0xff]
      %v1171 = vld [vmem:[#allocation2 + $0x320] sm:$0xff]
      %v1172 = vld [vmem:[#allocation2 + $0x328] sm:$0xff]
      %v1173 = vld [vmem:[#allocation2 + $0x330] sm:$0xff]
      %v1174 = vld [vmem:[#allocation2 + $0x338] sm:$0xff]
      %s1175 = scalar_lea.vmem %s1, 8
      %v1176 = vld [vmem:[%s1175] sm:$0xff]
      %v1177 = vld [vmem:[#allocation2 + $0x40] sm:$0xff]
      %v1178 = vld [vmem:[#allocation2 + $0x48] sm:$0xff]
      %v1179 = vld [vmem:[#allocation2 + $0xa0] sm:$0xff]
      %v1180 = vld [vmem:[#allocation2 + $0xa8] sm:$0xff]
      %v1181 = vld [vmem:[#allocation2 + $0x100] sm:$0xff]
      %v1182 = vld [vmem:[#allocation2 + $0x108] sm:$0xff]
      %v1183 = vld [vmem:[#allocation2 + $0x160] sm:$0xff]
      %v1184 = vld [vmem:[#allocation2 + $0x168] sm:$0xff]
      %v1185 = vld [vmem:[#allocation2 + $0x1c0] sm:$0xff]
      %v1186 = vld [vmem:[#allocation2 + $0x1c8] sm:$0xff]
      %v1187 = vld [vmem:[#allocation2 + $0x220] sm:$0xff]
      %v1188 = vld [vmem:[#allocation2 + $0x228] sm:$0xff]
      %v1189 = vld [vmem:[#allocation2 + $0x280] sm:$0xff]
      %v1190 = vld [vmem:[#allocation2 + $0x288] sm:$0xff]
      %v1191 = vld [vmem:[#allocation2 + $0x2e0] sm:$0xff]
      %v1192 = vld [vmem:[#allocation2 + $0x2e8] sm:$0xff]
      %v1193 = vld [vmem:[#allocation2 + $0x340] sm:$0xff]
      %v1194 = vld [vmem:[#allocation2 + $0x348] sm:$0xff]
      %vm1195 = vcmask 588800
      %v1197 = vsel %vm1195, %v1176, 0
      %1199 = vmatprep.subr.mxu0 %v1106
      %1200 = vmatpush1.msra.mxu0 %v1105
      %1201 = vmatprep.subr.mxu0 %v1114
      %1202 = vmatpush1.msra.mxu0 %v1113
      %1203 = vmatprep.subr.mxu0 %v1122
      %1204 = vmatpush1.msra.mxu0 %v1121
      %1205 = vmatprep.subr.mxu0 %v1130
      %1206 = vmatpush1.msra.mxu0 %v1129
      %1207 = vmatprep.subr.mxu0 %v1138
      %1208 = vmatpush1.msra.mxu0 %v1137
      %1209 = vmatprep.subr.mxu0 %v1146
      %1210 = vmatpush1.msra.mxu0 %v1145
      %1211 = vmatprep.subr.mxu0 %v1154
      %1212 = vmatpush1.msra.mxu0 %v1153
      %1213 = vmatprep.subr.mxu0 %v1162
      %1214 = vmatpush1.msra.mxu0 %v1161
      %1215 = vmatprep.subr.mxu0 %v1170
      %1216 = vmatpush1.msra.mxu0 %v1169
      %1217 = vmatprep.subr.mxu0 0.0
      %1218 = vmatpush1.msra.mxu0 0.0
      %1219 = vmatprep.subr.mxu0 0.0
      %1220 = vmatpush1.msra.mxu0 0.0
      %1221 = vmatprep.subr.mxu0 0.0
      %1222 = vmatpush1.msra.mxu0 0.0
      %1223 = vmatprep.subr.mxu0 0.0
      %1224 = vmatpush1.msra.mxu0 0.0
      %1225 = vmatprep.subr.mxu0 0.0
      %1226 = vmatpush1.msra.mxu0 0.0
      %1227 = vmatprep.subr.mxu0 0.0
      %1228 = vmatpush1.msra.mxu0 0.0
      %1229 = vmatprep.subr.mxu0 0.0
      %1230 = vmatpush1.msra.mxu0 0.0
      %1231 = vmatprep.subr.mxu0 0.0
      %1232 = vmatpush1.msra.mxu0 0.0
      %1233 = vmatprep.subr.mxu0 0.0
      %1234 = vmatpush1.msra.mxu0 0.0
      %1235 = vmatprep.subr.mxu0 0.0
      %1236 = vmatpush1.msra.mxu0 0.0
      %1237 = vmatprep.subr.mxu0 0.0
      %1238 = vmatpush1.msra.mxu0 0.0
      %1239 = vmatprep.subr.mxu0 0.0
      %1240 = vmatpush1.msra.mxu0 0.0
      %1241 = vmatprep.subr.mxu0 0.0
      %1242 = vmatpush1.msra.mxu0 0.0
      %1243 = vmatprep.subr.mxu0 0.0
      %1244 = vmatpush1.msra.mxu0 0.0
      %1245 = vmatprep.subr.mxu0 0.0
      %1246 = vmatpush1.msra.mxu0 0.0
      %1247 = vmatprep.subr.mxu0 0.0
      %1248 = vmatpush1.msra.mxu0 0.0
      %1249 = vmatprep.subr.mxu0 0.0
      %1250 = vmatpush1.msra.mxu0 0.0
      %1251 = vmatprep.subr.mxu0 0.0
      %1252 = vmatpush1.msra.mxu0 0.0
      %1253 = vmatprep.subr.mxu0 0.0
      %1254 = vmatpush1.msra.mxu0 0.0
      %1255 = vmatprep.subr.mxu0 0.0
      %1256 = vmatpush1.msra.mxu0 0.0
      %1257 = vmatprep.subr.mxu0 0.0
      %1258 = vmatpush1.msra.mxu0 0.0
      %1259 = vmatprep.subr.mxu0 0.0
      %1260 = vmatpush1.msra.mxu0 0.0
      %1261 = vmatprep.subr.mxu0 0.0
      %1262 = vmatpush1.msra.mxu0 0.0
      %1263 = vmatprep.mubr.f32.mxu0 0.0
      %1264 = vmatmul.mubr.f32.gmra.mrb[0].mxu0 %v1197
      %v1265 = vpop.f32.mrb[0].mxu0
      %v1266 = vadd.f32 0.0, %v1265
      %v1267 = vpop.f32.mrb[0].mxu0
      %v1268 = vadd.f32 0.0, %v1267
      %1269 = vdwg.mxu0
      %1270 = vmatprep.subr.mxu0 %v1108
      %1271 = vmatpush1.msra.mxu0 %v1107
      %1272 = vmatprep.subr.mxu0 %v1116
      %1273 = vmatpush1.msra.mxu0 %v1115
      %1274 = vmatprep.subr.mxu0 %v1124
      %1275 = vmatpush1.msra.mxu0 %v1123
      %1276 = vmatprep.subr.mxu0 %v1132
      %1277 = vmatpush1.msra.mxu0 %v1131
      %1278 = vmatprep.subr.mxu0 %v1140
      %1279 = vmatpush1.msra.mxu0 %v1139
      %1280 = vmatprep.subr.mxu0 %v1148
      %1281 = vmatpush1.msra.mxu0 %v1147
      %1282 = vmatprep.subr.mxu0 %v1156
      %1283 = vmatpush1.msra.mxu0 %v1155
      %1284 = vmatprep.subr.mxu0 %v1164
      %1285 = vmatpush1.msra.mxu0 %v1163
      %1286 = vmatprep.subr.mxu0 %v1172
      %1287 = vmatpush1.msra.mxu0 %v1171
      %1288 = vmatprep.subr.mxu0 0.0
      %1289 = vmatpush1.msra.mxu0 0.0
      %1290 = vmatprep.subr.mxu0 0.0
      %1291 = vmatpush1.msra.mxu0 0.0
      %1292 = vmatprep.subr.mxu0 0.0
      %1293 = vmatpush1.msra.mxu0 0.0
      %1294 = vmatprep.subr.mxu0 0.0
      %1295 = vmatpush1.msra.mxu0 0.0
      %1296 = vmatprep.subr.mxu0 0.0
      %1297 = vmatpush1.msra.mxu0 0.0
      %1298 = vmatprep.subr.mxu0 0.0
      %1299 = vmatpush1.msra.mxu0 0.0
      %1300 = vmatprep.subr.mxu0 0.0
      %1301 = vmatpush1.msra.mxu0 0.0
      %1302 = vmatprep.subr.mxu0 0.0
      %1303 = vmatpush1.msra.mxu0 0.0
      %1304 = vmatprep.subr.mxu0 0.0
      %1305 = vmatpush1.msra.mxu0 0.0
      %1306 = vmatprep.subr.mxu0 0.0
      %1307 = vmatpush1.msra.mxu0 0.0
      %1308 = vmatprep.subr.mxu0 0.0
      %1309 = vmatpush1.msra.mxu0 0.0
      %1310 = vmatprep.subr.mxu0 0.0
      %1311 = vmatpush1.msra.mxu0 0.0
      %1312 = vmatprep.subr.mxu0 0.0
      %1313 = vmatpush1.msra.mxu0 0.0
      %1314 = vmatprep.subr.mxu0 0.0
      %1315 = vmatpush1.msra.mxu0 0.0
      %1316 = vmatprep.subr.mxu0 0.0
      %1317 = vmatpush1.msra.mxu0 0.0
      %1318 = vmatprep.subr.mxu0 0.0
      %1319 = vmatpush1.msra.mxu0 0.0
      %1320 = vmatprep.subr.mxu0 0.0
      %1321 = vmatpush1.msra.mxu0 0.0
      %1322 = vmatprep.subr.mxu0 0.0
      %1323 = vmatpush1.msra.mxu0 0.0
      %1324 = vmatprep.subr.mxu0 0.0
      %1325 = vmatpush1.msra.mxu0 0.0
      %1326 = vmatprep.subr.mxu0 0.0
      %1327 = vmatpush1.msra.mxu0 0.0
      %1328 = vmatprep.subr.mxu0 0.0
      %1329 = vmatpush1.msra.mxu0 0.0
      %1330 = vmatprep.subr.mxu0 0.0
      %1331 = vmatpush1.msra.mxu0 0.0
      %1332 = vmatprep.subr.mxu0 0.0
      %1333 = vmatpush1.msra.mxu0 0.0
      %1334 = vmatprep.mubr.f32.mxu0 0.0
      %1335 = vmatmul.mubr.f32.gmra.mrb[0].mxu0 %v1197
      %v1336 = vpop.f32.mrb[0].mxu0
      %v1337 = vadd.f32 0.0, %v1336
      %v1338 = vpop.f32.mrb[0].mxu0
      %v1339 = vadd.f32 0.0, %v1338
      %1340 = vdwg.mxu0
      %1341 = vmatprep.subr.mxu0 %v1110
      %1342 = vmatpush1.msra.mxu0 %v1109
      %1343 = vmatprep.subr.mxu0 %v1118
      %1344 = vmatpush1.msra.mxu0 %v1117
      %1345 = vmatprep.subr.mxu0 %v1126
      %1346 = vmatpush1.msra.mxu0 %v1125
      %1347 = vmatprep.subr.mxu0 %v1134
      %1348 = vmatpush1.msra.mxu0 %v1133
      %1349 = vmatprep.subr.mxu0 %v1142
      %1350 = vmatpush1.msra.mxu0 %v1141
      %1351 = vmatprep.subr.mxu0 %v1150
      %1352 = vmatpush1.msra.mxu0 %v1149
      %1353 = vmatprep.subr.mxu0 %v1158
      %1354 = vmatpush1.msra.mxu0 %v1157
      %1355 = vmatprep.subr.mxu0 %v1166
      %1356 = vmatpush1.msra.mxu0 %v1165
      %1357 = vmatprep.subr.mxu0 %v1174
      %1358 = vmatpush1.msra.mxu0 %v1173
      %1359 = vmatprep.subr.mxu0 0.0
      %1360 = vmatpush1.msra.mxu0 0.0
      %1361 = vmatprep.subr.mxu0 0.0
      %1362 = vmatpush1.msra.mxu0 0.0
      %1363 = vmatprep.subr.mxu0 0.0
      %1364 = vmatpush1.msra.mxu0 0.0
      %1365 = vmatprep.subr.mxu0 0.0
      %1366 = vmatpush1.msra.mxu0 0.0
      %1367 = vmatprep.subr.mxu0 0.0
      %1368 = vmatpush1.msra.mxu0 0.0
      %1369 = vmatprep.subr.mxu0 0.0
      %1370 = vmatpush1.msra.mxu0 0.0
      %1371 = vmatprep.subr.mxu0 0.0
      %1372 = vmatpush1.msra.mxu0 0.0
      %1373 = vmatprep.subr.mxu0 0.0
      %1374 = vmatpush1.msra.mxu0 0.0
      %1375 = vmatprep.subr.mxu0 0.0
      %1376 = vmatpush1.msra.mxu0 0.0
      %1377 = vmatprep.subr.mxu0 0.0
      %1378 = vmatpush1.msra.mxu0 0.0
      %1379 = vmatprep.subr.mxu0 0.0
      %1380 = vmatpush1.msra.mxu0 0.0
      %1381 = vmatprep.subr.mxu0 0.0
      %1382 = vmatpush1.msra.mxu0 0.0
      %1383 = vmatprep.subr.mxu0 0.0
      %1384 = vmatpush1.msra.mxu0 0.0
      %1385 = vmatprep.subr.mxu0 0.0
      %1386 = vmatpush1.msra.mxu0 0.0
      %1387 = vmatprep.subr.mxu0 0.0
      %1388 = vmatpush1.msra.mxu0 0.0
      %1389 = vmatprep.subr.mxu0 0.0
      %1390 = vmatpush1.msra.mxu0 0.0
      %1391 = vmatprep.subr.mxu0 0.0
      %1392 = vmatpush1.msra.mxu0 0.0
      %1393 = vmatprep.subr.mxu0 0.0
      %1394 = vmatpush1.msra.mxu0 0.0
      %1395 = vmatprep.subr.mxu0 0.0
      %1396 = vmatpush1.msra.mxu0 0.0
      %1397 = vmatprep.subr.mxu0 0.0
      %1398 = vmatpush1.msra.mxu0 0.0
      %1399 = vmatprep.subr.mxu0 0.0
      %1400 = vmatpush1.msra.mxu0 0.0
      %1401 = vmatprep.subr.mxu0 0.0
      %1402 = vmatpush1.msra.mxu0 0.0
      %1403 = vmatprep.subr.mxu0 0.0
      %1404 = vmatpush1.msra.mxu0 0.0
      %1405 = vmatprep.mubr.f32.mxu0 0.0
      %1406 = vmatmul.mubr.f32.gmra.mrb[0].mxu0 %v1197
      %v1407 = vpop.f32.mrb[0].mxu0
      %v1408 = vadd.f32 0.0, %v1407
      %v1409 = vpop.f32.mrb[0].mxu0
      %v1410 = vadd.f32 0.0, %v1409
      %1411 = vdwg.mxu0
      %1412 = vmatprep.subr.mxu0 %v1178
      %1413 = vmatpush1.msra.mxu0 %v1177
      %1414 = vmatprep.subr.mxu0 %v1180
      %1415 = vmatpush1.msra.mxu0 %v1179
      %1416 = vmatprep.subr.mxu0 %v1182
      %1417 = vmatpush1.msra.mxu0 %v1181
      %1418 = vmatprep.subr.mxu0 %v1184
      %1419 = vmatpush1.msra.mxu0 %v1183
      %1420 = vmatprep.subr.mxu0 %v1186
      %1421 = vmatpush1.msra.mxu0 %v1185
      %1422 = vmatprep.subr.mxu0 %v1188
      %1423 = vmatpush1.msra.mxu0 %v1187
      %1424 = vmatprep.subr.mxu0 %v1190
      %1425 = vmatpush1.msra.mxu0 %v1189
      %1426 = vmatprep.subr.mxu0 %v1192
      %1427 = vmatpush1.msra.mxu0 %v1191
      %1428 = vmatprep.subr.mxu0 %v1194
      %1429 = vmatpush1.msra.mxu0 %v1193
      %1430 = vmatprep.subr.mxu0 0.0
      %1431 = vmatpush1.msra.mxu0 0.0
      %1432 = vmatprep.subr.mxu0 0.0
      %1433 = vmatpush1.msra.mxu0 0.0
      %1434 = vmatprep.subr.mxu0 0.0
      %1435 = vmatpush1.msra.mxu0 0.0
      %1436 = vmatprep.subr.mxu0 0.0
      %1437 = vmatpush1.msra.mxu0 0.0
      %1438 = vmatprep.subr.mxu0 0.0
      %1439 = vmatpush1.msra.mxu0 0.0
      %1440 = vmatprep.subr.mxu0 0.0
      %1441 = vmatpush1.msra.mxu0 0.0
      %1442 = vmatprep.subr.mxu0 0.0
      %1443 = vmatpush1.msra.mxu0 0.0
      %1444 = vmatprep.subr.mxu0 0.0
      %1445 = vmatpush1.msra.mxu0 0.0
      %1446 = vmatprep.subr.mxu0 0.0
      %1447 = vmatpush1.msra.mxu0 0.0
      %1448 = vmatprep.subr.mxu0 0.0
      %1449 = vmatpush1.msra.mxu0 0.0
      %1450 = vmatprep.subr.mxu0 0.0
      %1451 = vmatpush1.msra.mxu0 0.0
      %1452 = vmatprep.subr.mxu0 0.0
      %1453 = vmatpush1.msra.mxu0 0.0
      %1454 = vmatprep.subr.mxu0 0.0
      %1455 = vmatpush1.msra.mxu0 0.0
      %1456 = vmatprep.subr.mxu0 0.0
      %1457 = vmatpush1.msra.mxu0 0.0
      %1458 = vmatprep.subr.mxu0 0.0
      %1459 = vmatpush1.msra.mxu0 0.0
      %1460 = vmatprep.subr.mxu0 0.0
      %1461 = vmatpush1.msra.mxu0 0.0
      %1462 = vmatprep.subr.mxu0 0.0
      %1463 = vmatpush1.msra.mxu0 0.0
      %1464 = vmatprep.subr.mxu0 0.0
      %1465 = vmatpush1.msra.mxu0 0.0
      %1466 = vmatprep.subr.mxu0 0.0
      %1467 = vmatpush1.msra.mxu0 0.0
      %1468 = vmatprep.subr.mxu0 0.0
      %1469 = vmatpush1.msra.mxu0 0.0
      %1470 = vmatprep.subr.mxu0 0.0
      %1471 = vmatpush1.msra.mxu0 0.0
      %1472 = vmatprep.subr.mxu0 0.0
      %1473 = vmatpush1.msra.mxu0 0.0
      %1474 = vmatprep.subr.mxu0 0.0
      %1475 = vmatpush1.msra.mxu0 0.0
      %1476 = vmatprep.mubr.f32.mxu0 0.0
      %1477 = vmatmul.mubr.f32.gmra.mrb[0].mxu0 %v1197
      %v1478 = vpop.f32.mrb[0].mxu0
      %v1479 = vadd.f32 0.0, %v1478
      %v1480 = vpop.f32.mrb[0].mxu0
      %v1481 = vadd.f32 0.0, %v1480
      %1482 = vdwg.mxu0
      %v1484 = vsel %vm1195, %v1102, 0
      %1486 = vmatprep.subr.mxu0 %v1104
      %1487 = vmatpush1.msra.mxu0 %v1103
      %1488 = vmatprep.subr.mxu0 %v1112
      %1489 = vmatpush1.msra.mxu0 %v1111
      %1490 = vmatprep.subr.mxu0 %v1120
      %1491 = vmatpush1.msra.mxu0 %v1119
      %1492 = vmatprep.subr.mxu0 %v1128
      %1493 = vmatpush1.msra.mxu0 %v1127
      %1494 = vmatprep.subr.mxu0 %v1136
      %1495 = vmatpush1.msra.mxu0 %v1135
      %1496 = vmatprep.subr.mxu0 %v1144
      %1497 = vmatpush1.msra.mxu0 %v1143
      %1498 = vmatprep.subr.mxu0 %v1152
      %1499 = vmatpush1.msra.mxu0 %v1151
      %1500 = vmatprep.subr.mxu0 %v1160
      %1501 = vmatpush1.msra.mxu0 %v1159
      %1502 = vmatprep.subr.mxu0 %v1168
      %1503 = vmatpush1.msra.mxu0 %v1167
      %1504 = vmatprep.subr.mxu0 0.0
      %1505 = vmatpush1.msra.mxu0 0.0
      %1506 = vmatprep.subr.mxu0 0.0
      %1507 = vmatpush1.msra.mxu0 0.0
      %1508 = vmatprep.subr.mxu0 0.0
      %1509 = vmatpush1.msra.mxu0 0.0
      %1510 = vmatprep.subr.mxu0 0.0
      %1511 = vmatpush1.msra.mxu0 0.0
      %1512 = vmatprep.subr.mxu0 0.0
      %1513 = vmatpush1.msra.mxu0 0.0
      %1514 = vmatprep.subr.mxu0 0.0
      %1515 = vmatpush1.msra.mxu0 0.0
      %1516 = vmatprep.subr.mxu0 0.0
      %1517 = vmatpush1.msra.mxu0 0.0
      %1518 = vmatprep.subr.mxu0 0.0
      %1519 = vmatpush1.msra.mxu0 0.0
      %1520 = vmatprep.subr.mxu0 0.0
      %1521 = vmatpush1.msra.mxu0 0.0
      %1522 = vmatprep.subr.mxu0 0.0
      %1523 = vmatpush1.msra.mxu0 0.0
      %1524 = vmatprep.subr.mxu0 0.0
      %1525 = vmatpush1.msra.mxu0 0.0
      %1526 = vmatprep.subr.mxu0 0.0
      %1527 = vmatpush1.msra.mxu0 0.0
      %1528 = vmatprep.subr.mxu0 0.0
      %1529 = vmatpush1.msra.mxu0 0.0
      %1530 = vmatprep.subr.mxu0 0.0
      %1531 = vmatpush1.msra.mxu0 0.0
      %1532 = vmatprep.subr.mxu0 0.0
      %1533 = vmatpush1.msra.mxu0 0.0
      %1534 = vmatprep.subr.mxu0 0.0
      %1535 = vmatpush1.msra.mxu0 0.0
      %1536 = vmatprep.subr.mxu0 0.0
      %1537 = vmatpush1.msra.mxu0 0.0
      %1538 = vmatprep.subr.mxu0 0.0
      %1539 = vmatpush1.msra.mxu0 0.0
      %1540 = vmatprep.subr.mxu0 0.0
      %1541 = vmatpush1.msra.mxu0 0.0
      %1542 = vmatprep.subr.mxu0 0.0
      %1543 = vmatpush1.msra.mxu0 0.0
      %1544 = vmatprep.subr.mxu0 0.0
      %1545 = vmatpush1.msra.mxu0 0.0
      %1546 = vmatprep.subr.mxu0 0.0
      %1547 = vmatpush1.msra.mxu0 0.0
      %1548 = vmatprep.subr.mxu0 0.0
      %1549 = vmatpush1.msra.mxu0 0.0
      %1550 = vmatprep.mubr.f32.mxu0 0.0
      %1551 = vmatmul.mubr.f32.gmra.mrb[0].mxu0 %v1484
      %v1552 = vpop.f32.mrb[0].mxu0
      %v1553 = vadd.f32 %v1266, %v1552
      %v1554 = vpop.f32.mrb[0].mxu0
      %v1555 = vadd.f32 %v1268, %v1554
      %1556 = vdwg.mxu0
      %1557 = vmatprep.subr.mxu0 %v1106
      %1558 = vmatpush1.msra.mxu0 %v1105
      %1559 = vmatprep.subr.mxu0 %v1114
      %1560 = vmatpush1.msra.mxu0 %v1113
      %1561 = vmatprep.subr.mxu0 %v1122
      %1562 = vmatpush1.msra.mxu0 %v1121
      %1563 = vmatprep.subr.mxu0 %v1130
      %1564 = vmatpush1.msra.mxu0 %v1129
      %1565 = vmatprep.subr.mxu0 %v1138
      %1566 = vmatpush1.msra.mxu0 %v1137
      %1567 = vmatprep.subr.mxu0 %v1146
      %1568 = vmatpush1.msra.mxu0 %v1145
      %1569 = vmatprep.subr.mxu0 %v1154
      %1570 = vmatpush1.msra.mxu0 %v1153
      %1571 = vmatprep.subr.mxu0 %v1162
      %1572 = vmatpush1.msra.mxu0 %v1161
      %1573 = vmatprep.subr.mxu0 %v1170
      %1574 = vmatpush1.msra.mxu0 %v1169
      %1575 = vmatprep.subr.mxu0 0.0
      %1576 = vmatpush1.msra.mxu0 0.0
      %1577 = vmatprep.subr.mxu0 0.0
      %1578 = vmatpush1.msra.mxu0 0.0
      %1579 = vmatprep.subr.mxu0 0.0
      %1580 = vmatpush1.msra.mxu0 0.0
      %1581 = vmatprep.subr.mxu0 0.0
      %1582 = vmatpush1.msra.mxu0 0.0
      %1583 = vmatprep.subr.mxu0 0.0
      %1584 = vmatpush1.msra.mxu0 0.0
      %1585 = vmatprep.subr.mxu0 0.0
      %1586 = vmatpush1.msra.mxu0 0.0
      %1587 = vmatprep.subr.mxu0 0.0
      %1588 = vmatpush1.msra.mxu0 0.0
      %1589 = vmatprep.subr.mxu0 0.0
      %1590 = vmatpush1.msra.mxu0 0.0
      %1591 = vmatprep.subr.mxu0 0.0
      %1592 = vmatpush1.msra.mxu0 0.0
      %1593 = vmatprep.subr.mxu0 0.0
      %1594 = vmatpush1.msra.mxu0 0.0
      %1595 = vmatprep.subr.mxu0 0.0
      %1596 = vmatpush1.msra.mxu0 0.0
      %1597 = vmatprep.subr.mxu0 0.0
      %1598 = vmatpush1.msra.mxu0 0.0
      %1599 = vmatprep.subr.mxu0 0.0
      %1600 = vmatpush1.msra.mxu0 0.0
      %1601 = vmatprep.subr.mxu0 0.0
      %1602 = vmatpush1.msra.mxu0 0.0
      %1603 = vmatprep.subr.mxu0 0.0
      %1604 = vmatpush1.msra.mxu0 0.0
      %1605 = vmatprep.subr.mxu0 0.0
      %1606 = vmatpush1.msra.mxu0 0.0
      %1607 = vmatprep.subr.mxu0 0.0
      %1608 = vmatpush1.msra.mxu0 0.0
      %1609 = vmatprep.subr.mxu0 0.0
      %1610 = vmatpush1.msra.mxu0 0.0
      %1611 = vmatprep.subr.mxu0 0.0
      %1612 = vmatpush1.msra.mxu0 0.0
      %1613 = vmatprep.subr.mxu0 0.0
      %1614 = vmatpush1.msra.mxu0 0.0
      %1615 = vmatprep.subr.mxu0 0.0
      %1616 = vmatpush1.msra.mxu0 0.0
      %1617 = vmatprep.subr.mxu0 0.0
      %1618 = vmatpush1.msra.mxu0 0.0
      %1619 = vmatprep.subr.mxu0 0.0
      %1620 = vmatpush1.msra.mxu0 0.0
      %1621 = vmatprep.mubr.f32.mxu0 0.0
      %1622 = vmatmul.mubr.f32.gmra.mrb[0].mxu0 %v1484
      %v1623 = vpop.f32.mrb[0].mxu0
      %v1624 = vadd.f32 %v1337, %v1623
      %v1625 = vpop.f32.mrb[0].mxu0
      %v1626 = vadd.f32 %v1339, %v1625
      %1627 = vdwg.mxu0
      %1628 = vmatprep.subr.mxu0 %v1108
      %1629 = vmatpush1.msra.mxu0 %v1107
      %1630 = vmatprep.subr.mxu0 %v1116
      %1631 = vmatpush1.msra.mxu0 %v1115
      %1632 = vmatprep.subr.mxu0 %v1124
      %1633 = vmatpush1.msra.mxu0 %v1123
      %1634 = vmatprep.subr.mxu0 %v1132
      %1635 = vmatpush1.msra.mxu0 %v1131
      %1636 = vmatprep.subr.mxu0 %v1140
      %1637 = vmatpush1.msra.mxu0 %v1139
      %1638 = vmatprep.subr.mxu0 %v1148
      %1639 = vmatpush1.msra.mxu0 %v1147
      %1640 = vmatprep.subr.mxu0 %v1156
      %1641 = vmatpush1.msra.mxu0 %v1155
      %1642 = vmatprep.subr.mxu0 %v1164
      %1643 = vmatpush1.msra.mxu0 %v1163
      %1644 = vmatprep.subr.mxu0 %v1172
      %1645 = vmatpush1.msra.mxu0 %v1171
      %1646 = vmatprep.subr.mxu0 0.0
      %1647 = vmatpush1.msra.mxu0 0.0
      %1648 = vmatprep.subr.mxu0 0.0
      %1649 = vmatpush1.msra.mxu0 0.0
      %1650 = vmatprep.subr.mxu0 0.0
      %1651 = vmatpush1.msra.mxu0 0.0
      %1652 = vmatprep.subr.mxu0 0.0
      %1653 = vmatpush1.msra.mxu0 0.0
      %1654 = vmatprep.subr.mxu0 0.0
      %1655 = vmatpush1.msra.mxu0 0.0
      %1656 = vmatprep.subr.mxu0 0.0
      %1657 = vmatpush1.msra.mxu0 0.0
      %1658 = vmatprep.subr.mxu0 0.0
      %1659 = vmatpush1.msra.mxu0 0.0
      %1660 = vmatprep.subr.mxu0 0.0
      %1661 = vmatpush1.msra.mxu0 0.0
      %1662 = vmatprep.subr.mxu0 0.0
      %1663 = vmatpush1.msra.mxu0 0.0
      %1664 = vmatprep.subr.mxu0 0.0
      %1665 = vmatpush1.msra.mxu0 0.0
      %1666 = vmatprep.subr.mxu0 0.0
      %1667 = vmatpush1.msra.mxu0 0.0
      %1668 = vmatprep.subr.mxu0 0.0
      %1669 = vmatpush1.msra.mxu0 0.0
      %1670 = vmatprep.subr.mxu0 0.0
      %1671 = vmatpush1.msra.mxu0 0.0
      %1672 = vmatprep.subr.mxu0 0.0
      %1673 = vmatpush1.msra.mxu0 0.0
      %1674 = vmatprep.subr.mxu0 0.0
      %1675 = vmatpush1.msra.mxu0 0.0
      %1676 = vmatprep.subr.mxu0 0.0
      %1677 = vmatpush1.msra.mxu0 0.0
      %1678 = vmatprep.subr.mxu0 0.0
      %1679 = vmatpush1.msra.mxu0 0.0
      %1680 = vmatprep.subr.mxu0 0.0
      %1681 = vmatpush1.msra.mxu0 0.0
      %1682 = vmatprep.subr.mxu0 0.0
      %1683 = vmatpush1.msra.mxu0 0.0
      %1684 = vmatprep.subr.mxu0 0.0
      %1685 = vmatpush1.msra.mxu0 0.0
      %1686 = vmatprep.subr.mxu0 0.0
      %1687 = vmatpush1.msra.mxu0 0.0
      %1688 = vmatprep.subr.mxu0 0.0
      %1689 = vmatpush1.msra.mxu0 0.0
      %1690 = vmatprep.subr.mxu0 0.0
      %1691 = vmatpush1.msra.mxu0 0.0
      %1692 = vmatprep.mubr.f32.mxu0 0.0
      %1693 = vmatmul.mubr.f32.gmra.mrb[0].mxu0 %v1484
      %v1694 = vpop.f32.mrb[0].mxu0
      %v1695 = vadd.f32 %v1408, %v1694
      %v1696 = vpop.f32.mrb[0].mxu0
      %v1697 = vadd.f32 %v1410, %v1696
      %1698 = vdwg.mxu0
      %1699 = vmatprep.subr.mxu0 %v1110
      %1700 = vmatpush1.msra.mxu0 %v1109
      %1701 = vmatprep.subr.mxu0 %v1118
      %1702 = vmatpush1.msra.mxu0 %v1117
      %1703 = vmatprep.subr.mxu0 %v1126
      %1704 = vmatpush1.msra.mxu0 %v1125
      %1705 = vmatprep.subr.mxu0 %v1134
      %1706 = vmatpush1.msra.mxu0 %v1133
      %1707 = vmatprep.subr.mxu0 %v1142
      %1708 = vmatpush1.msra.mxu0 %v1141
      %1709 = vmatprep.subr.mxu0 %v1150
      %1710 = vmatpush1.msra.mxu0 %v1149
      %1711 = vmatprep.subr.mxu0 %v1158
      %1712 = vmatpush1.msra.mxu0 %v1157
      %1713 = vmatprep.subr.mxu0 %v1166
      %1714 = vmatpush1.msra.mxu0 %v1165
      %1715 = vmatprep.subr.mxu0 %v1174
      %1716 = vmatpush1.msra.mxu0 %v1173
      %1717 = vmatprep.subr.mxu0 0.0
      %1718 = vmatpush1.msra.mxu0 0.0
      %1719 = vmatprep.subr.mxu0 0.0
      %1720 = vmatpush1.msra.mxu0 0.0
      %1721 = vmatprep.subr.mxu0 0.0
      %1722 = vmatpush1.msra.mxu0 0.0
      %1723 = vmatprep.subr.mxu0 0.0
      %1724 = vmatpush1.msra.mxu0 0.0
      %1725 = vmatprep.subr.mxu0 0.0
      %1726 = vmatpush1.msra.mxu0 0.0
      %1727 = vmatprep.subr.mxu0 0.0
      %1728 = vmatpush1.msra.mxu0 0.0
      %1729 = vmatprep.subr.mxu0 0.0
      %1730 = vmatpush1.msra.mxu0 0.0
      %1731 = vmatprep.subr.mxu0 0.0
      %1732 = vmatpush1.msra.mxu0 0.0
      %1733 = vmatprep.subr.mxu0 0.0
      %1734 = vmatpush1.msra.mxu0 0.0
      %1735 = vmatprep.subr.mxu0 0.0
      %1736 = vmatpush1.msra.mxu0 0.0
      %1737 = vmatprep.subr.mxu0 0.0
      %1738 = vmatpush1.msra.mxu0 0.0
      %1739 = vmatprep.subr.mxu0 0.0
      %1740 = vmatpush1.msra.mxu0 0.0
      %1741 = vmatprep.subr.mxu0 0.0
      %1742 = vmatpush1.msra.mxu0 0.0
      %1743 = vmatprep.subr.mxu0 0.0
      %1744 = vmatpush1.msra.mxu0 0.0
      %1745 = vmatprep.subr.mxu0 0.0
      %1746 = vmatpush1.msra.mxu0 0.0
      %1747 = vmatprep.subr.mxu0 0.0
      %1748 = vmatpush1.msra.mxu0 0.0
      %1749 = vmatprep.subr.mxu0 0.0
      %1750 = vmatpush1.msra.mxu0 0.0
      %1751 = vmatprep.subr.mxu0 0.0
      %1752 = vmatpush1.msra.mxu0 0.0
      %1753 = vmatprep.subr.mxu0 0.0
      %1754 = vmatpush1.msra.mxu0 0.0
      %1755 = vmatprep.subr.mxu0 0.0
      %1756 = vmatpush1.msra.mxu0 0.0
      %1757 = vmatprep.subr.mxu0 0.0
      %1758 = vmatpush1.msra.mxu0 0.0
      %1759 = vmatprep.subr.mxu0 0.0
      %1760 = vmatpush1.msra.mxu0 0.0
      %1761 = vmatprep.subr.mxu0 0.0
      %1762 = vmatpush1.msra.mxu0 0.0
      %1763 = vmatprep.mubr.f32.mxu0 0.0
      %1764 = vmatmul.mubr.f32.gmra.mrb[0].mxu0 %v1484
      %v1765 = vpop.f32.mrb[0].mxu0
      %v1766 = vadd.f32 %v1479, %v1765
      %v1767 = vpop.f32.mrb[0].mxu0
      %v1768 = vadd.f32 %v1481, %v1767
      %1769 = vdwg.mxu0
      %s1770 = scalar_lea.vmem %s1, 16
      %v1771 = vld [vmem:[%s1770] sm:$0xff]
      %v1772 = vld [vmem:[#allocation2 + $0x20] sm:$0xff]
      %v1773 = vld [vmem:[#allocation2 + $0x28] sm:$0xff]
      %v1774 = vld [vmem:[#allocation2 + $0x30] sm:$0xff]
      %v1775 = vld [vmem:[#allocation2 + $0x38] sm:$0xff]
      %v1776 = vld [vmem:[#allocation2 + $0x40] sm:$0xff]
      %v1777 = vld [vmem:[#allocation2 + $0x48] sm:$0xff]
      %v1778 = vld [vmem:[#allocation2 + $0x50] sm:$0xff]
      %v1779 = vld [vmem:[#allocation2 + $0x58] sm:$0xff]
      %v1780 = vld [vmem:[#allocation2 + $0x80] sm:$0xff]
      %v1781 = vld [vmem:[#allocation2 + $0x88] sm:$0xff]
      %v1782 = vld [vmem:[#allocation2 + $0x90] sm:$0xff]
      %v1783 = vld [vmem:[#allocation2 + $0x98] sm:$0xff]
      %v1784 = vld [vmem:[#allocation2 + $0xa0] sm:$0xff]
      %v1785 = vld [vmem:[#allocation2 + $0xa8] sm:$0xff]
      %v1786 = vld [vmem:[#allocation2 + $0xb0] sm:$0xff]
      %v1787 = vld [vmem:[#allocation2 + $0xb8] sm:$0xff]
      %v1788 = vld [vmem:[#allocation2 + $0xe0] sm:$0xff]
      %v1789 = vld [vmem:[#allocation2 + $0xe8] sm:$0xff]
      %v1790 = vld [vmem:[#allocation2 + $0xf0] sm:$0xff]
      %v1791 = vld [vmem:[#allocation2 + $0xf8] sm:$0xff]
      %v1792 = vld [vmem:[#allocation2 + $0x100] sm:$0xff]
      %v1793 = vld [vmem:[#allocation2 + $0x108] sm:$0xff]
      %v1794 = vld [vmem:[#allocation2 + $0x110] sm:$0xff]
      %v1795 = vld [vmem:[#allocation2 + $0x118] sm:$0xff]
      %v1796 = vld [vmem:[#allocation2 + $0x140] sm:$0xff]
      %v1797 = vld [vmem:[#allocation2 + $0x148] sm:$0xff]
      %v1798 = vld [vmem:[#allocation2 + $0x150] sm:$0xff]
      %v1799 = vld [vmem:[#allocation2 + $0x158] sm:$0xff]
      %v1800 = vld [vmem:[#allocation2 + $0x160] sm:$0xff]
      %v1801 = vld [vmem:[#allocation2 + $0x168] sm:$0xff]
      %v1802 = vld [vmem:[#allocation2 + $0x170] sm:$0xff]
      %v1803 = vld [vmem:[#allocation2 + $0x178] sm:$0xff]
      %v1804 = vld [vmem:[#allocation2 + $0x1a0] sm:$0xff]
      %v1805 = vld [vmem:[#allocation2 + $0x1a8] sm:$0xff]
      %v1806 = vld [vmem:[#allocation2 + $0x1b0] sm:$0xff]
      %v1807 = vld [vmem:[#allocation2 + $0x1b8] sm:$0xff]
      %v1808 = vld [vmem:[#allocation2 + $0x1c0] sm:$0xff]
      %v1809 = vld [vmem:[#allocation2 + $0x1c8] sm:$0xff]
      %v1810 = vld [vmem:[#allocation2 + $0x1d0] sm:$0xff]
      %v1811 = vld [vmem:[#allocation2 + $0x1d8] sm:$0xff]
      %v1812 = vld [vmem:[#allocation2 + $0x200] sm:$0xff]
      %v1813 = vld [vmem:[#allocation2 + $0x208] sm:$0xff]
      %v1814 = vld [vmem:[#allocation2 + $0x210] sm:$0xff]
      %v1815 = vld [vmem:[#allocation2 + $0x218] sm:$0xff]
      %v1816 = vld [vmem:[#allocation2 + $0x220] sm:$0xff]
      %v1817 = vld [vmem:[#allocation2 + $0x228] sm:$0xff]
      %v1818 = vld [vmem:[#allocation2 + $0x230] sm:$0xff]
      %v1819 = vld [vmem:[#allocation2 + $0x238] sm:$0xff]
      %v1820 = vld [vmem:[#allocation2 + $0x260] sm:$0xff]
      %v1821 = vld [vmem:[#allocation2 + $0x268] sm:$0xff]
      %v1822 = vld [vmem:[#allocation2 + $0x270] sm:$0xff]
      %v1823 = vld [vmem:[#allocation2 + $0x278] sm:$0xff]
      %v1824 = vld [vmem:[#allocation2 + $0x280] sm:$0xff]
      %v1825 = vld [vmem:[#allocation2 + $0x288] sm:$0xff]
      %v1826 = vld [vmem:[#allocation2 + $0x290] sm:$0xff]
      %v1827 = vld [vmem:[#allocation2 + $0x298] sm:$0xff]
      %v1828 = vld [vmem:[#allocation2 + $0x2c0] sm:$0xff]
      %v1829 = vld [vmem:[#allocation2 + $0x2c8] sm:$0xff]
      %v1830 = vld [vmem:[#allocation2 + $0x2d0] sm:$0xff]
      %v1831 = vld [vmem:[#allocation2 + $0x2d8] sm:$0xff]
      %v1832 = vld [vmem:[#allocation2 + $0x2e0] sm:$0xff]
      %v1833 = vld [vmem:[#allocation2 + $0x2e8] sm:$0xff]
      %v1834 = vld [vmem:[#allocation2 + $0x2f0] sm:$0xff]
      %v1835 = vld [vmem:[#allocation2 + $0x2f8] sm:$0xff]
      %v1836 = vld [vmem:[#allocation2 + $0x320] sm:$0xff]
      %v1837 = vld [vmem:[#allocation2 + $0x328] sm:$0xff]
      %v1838 = vld [vmem:[#allocation2 + $0x330] sm:$0xff]
      %v1839 = vld [vmem:[#allocation2 + $0x338] sm:$0xff]
      %v1840 = vld [vmem:[#allocation2 + $0x340] sm:$0xff]
      %v1841 = vld [vmem:[#allocation2 + $0x348] sm:$0xff]
      %v1842 = vld [vmem:[#allocation2 + $0x350] sm:$0xff]
      %v1843 = vld [vmem:[#allocation2 + $0x358] sm:$0xff]
      %v1845 = vsel %vm1195, %v1771, 0
      %1847 = vmatprep.subr.mxu0 %v1773
      %1848 = vmatpush1.msra.mxu0 %v1772
      %1849 = vmatprep.subr.mxu0 %v1781
      %1850 = vmatpush1.msra.mxu0 %v1780
      %1851 = vmatprep.subr.mxu0 %v1789
      %1852 = vmatpush1.msra.mxu0 %v1788
      %1853 = vmatprep.subr.mxu0 %v1797
      %1854 = vmatpush1.msra.mxu0 %v1796
      %1855 = vmatprep.subr.mxu0 %v1805
      %1856 = vmatpush1.msra.mxu0 %v1804
      %1857 = vmatprep.subr.mxu0 %v1813
      %1858 = vmatpush1.msra.mxu0 %v1812
      %1859 = vmatprep.subr.mxu0 %v1821
      %1860 = vmatpush1.msra.mxu0 %v1820
      %1861 = vmatprep.subr.mxu0 %v1829
      %1862 = vmatpush1.msra.mxu0 %v1828
      %1863 = vmatprep.subr.mxu0 %v1837
      %1864 = vmatpush1.msra.mxu0 %v1836
      %1865 = vmatprep.subr.mxu0 0.0
      %1866 = vmatpush1.msra.mxu0 0.0
      %1867 = vmatprep.subr.mxu0 0.0
      %1868 = vmatpush1.msra.mxu0 0.0
      %1869 = vmatprep.subr.mxu0 0.0
      %1870 = vmatpush1.msra.mxu0 0.0
      %1871 = vmatprep.subr.mxu0 0.0
      %1872 = vmatpush1.msra.mxu0 0.0
      %1873 = vmatprep.subr.mxu0 0.0
      %1874 = vmatpush1.msra.mxu0 0.0
      %1875 = vmatprep.subr.mxu0 0.0
      %1876 = vmatpush1.msra.mxu0 0.0
      %1877 = vmatprep.subr.mxu0 0.0
      %1878 = vmatpush1.msra.mxu0 0.0
      %1879 = vmatprep.subr.mxu0 0.0
      %1880 = vmatpush1.msra.mxu0 0.0
      %1881 = vmatprep.subr.mxu0 0.0
      %1882 = vmatpush1.msra.mxu0 0.0
      %1883 = vmatprep.subr.mxu0 0.0
      %1884 = vmatpush1.msra.mxu0 0.0
      %1885 = vmatprep.subr.mxu0 0.0
      %1886 = vmatpush1.msra.mxu0 0.0
      %1887 = vmatprep.subr.mxu0 0.0
      %1888 = vmatpush1.msra.mxu0 0.0
      %1889 = vmatprep.subr.mxu0 0.0
      %1890 = vmatpush1.msra.mxu0 0.0
      %1891 = vmatprep.subr.mxu0 0.0
      %1892 = vmatpush1.msra.mxu0 0.0
      %1893 = vmatprep.subr.mxu0 0.0
      %1894 = vmatpush1.msra.mxu0 0.0
      %1895 = vmatprep.subr.mxu0 0.0
      %1896 = vmatpush1.msra.mxu0 0.0
      %1897 = vmatprep.subr.mxu0 0.0
      %1898 = vmatpush1.msra.mxu0 0.0
      %1899 = vmatprep.subr.mxu0 0.0
      %1900 = vmatpush1.msra.mxu0 0.0
      %1901 = vmatprep.subr.mxu0 0.0
      %1902 = vmatpush1.msra.mxu0 0.0
      %1903 = vmatprep.subr.mxu0 0.0
      %1904 = vmatpush1.msra.mxu0 0.0
      %1905 = vmatprep.subr.mxu0 0.0
      %1906 = vmatpush1.msra.mxu0 0.0
      %1907 = vmatprep.subr.mxu0 0.0
      %1908 = vmatpush1.msra.mxu0 0.0
      %1909 = vmatprep.subr.mxu0 0.0
      %1910 = vmatpush1.msra.mxu0 0.0
      %1911 = vmatprep.mubr.f32.mxu0 0.0
      %1912 = vmatmul.mubr.f32.gmra.mrb[0].mxu0 %v1845
      %v1913 = vpop.f32.mrb[0].mxu0
      %v1914 = vadd.f32 0.0, %v1913
      %v1915 = vpop.f32.mrb[0].mxu0
      %v1916 = vadd.f32 0.0, %v1915
      %1917 = vdwg.mxu0
      %1918 = vmatprep.subr.mxu0 %v1775
      %1919 = vmatpush1.msra.mxu0 %v1774
      %1920 = vmatprep.subr.mxu0 %v1783
      %1921 = vmatpush1.msra.mxu0 %v1782
      %1922 = vmatprep.subr.mxu0 %v1791
      %1923 = vmatpush1.msra.mxu0 %v1790
      %1924 = vmatprep.subr.mxu0 %v1799
      %1925 = vmatpush1.msra.mxu0 %v1798
      %1926 = vmatprep.subr.mxu0 %v1807
      %1927 = vmatpush1.msra.mxu0 %v1806
      %1928 = vmatprep.subr.mxu0 %v1815
      %1929 = vmatpush1.msra.mxu0 %v1814
      %1930 = vmatprep.subr.mxu0 %v1823
      %1931 = vmatpush1.msra.mxu0 %v1822
      %1932 = vmatprep.subr.mxu0 %v1831
      %1933 = vmatpush1.msra.mxu0 %v1830
      %1934 = vmatprep.subr.mxu0 %v1839
      %1935 = vmatpush1.msra.mxu0 %v1838
      %1936 = vmatprep.subr.mxu0 0.0
      %1937 = vmatpush1.msra.mxu0 0.0
      %1938 = vmatprep.subr.mxu0 0.0
      %1939 = vmatpush1.msra.mxu0 0.0
      %1940 = vmatprep.subr.mxu0 0.0
      %1941 = vmatpush1.msra.mxu0 0.0
      %1942 = vmatprep.subr.mxu0 0.0
      %1943 = vmatpush1.msra.mxu0 0.0
      %1944 = vmatprep.subr.mxu0 0.0
      %1945 = vmatpush1.msra.mxu0 0.0
      %1946 = vmatprep.subr.mxu0 0.0
      %1947 = vmatpush1.msra.mxu0 0.0
      %1948 = vmatprep.subr.mxu0 0.0
      %1949 = vmatpush1.msra.mxu0 0.0
      %1950 = vmatprep.subr.mxu0 0.0
      %1951 = vmatpush1.msra.mxu0 0.0
      %1952 = vmatprep.subr.mxu0 0.0
      %1953 = vmatpush1.msra.mxu0 0.0
      %1954 = vmatprep.subr.mxu0 0.0
      %1955 = vmatpush1.msra.mxu0 0.0
      %1956 = vmatprep.subr.mxu0 0.0
      %1957 = vmatpush1.msra.mxu0 0.0
      %1958 = vmatprep.subr.mxu0 0.0
      %1959 = vmatpush1.msra.mxu0 0.0
      %1960 = vmatprep.subr.mxu0 0.0
      %1961 = vmatpush1.msra.mxu0 0.0
      %1962 = vmatprep.subr.mxu0 0.0
      %1963 = vmatpush1.msra.mxu0 0.0
      %1964 = vmatprep.subr.mxu0 0.0
      %1965 = vmatpush1.msra.mxu0 0.0
      %1966 = vmatprep.subr.mxu0 0.0
      %1967 = vmatpush1.msra.mxu0 0.0
      %1968 = vmatprep.subr.mxu0 0.0
      %1969 = vmatpush1.msra.mxu0 0.0
      %1970 = vmatprep.subr.mxu0 0.0
      %1971 = vmatpush1.msra.mxu0 0.0
      %1972 = vmatprep.subr.mxu0 0.0
      %1973 = vmatpush1.msra.mxu0 0.0
      %1974 = vmatprep.subr.mxu0 0.0
      %1975 = vmatpush1.msra.mxu0 0.0
      %1976 = vmatprep.subr.mxu0 0.0
      %1977 = vmatpush1.msra.mxu0 0.0
      %1978 = vmatprep.subr.mxu0 0.0
      %1979 = vmatpush1.msra.mxu0 0.0
      %1980 = vmatprep.subr.mxu0 0.0
      %1981 = vmatpush1.msra.mxu0 0.0
      %1982 = vmatprep.mubr.f32.mxu0 0.0
      %1983 = vmatmul.mubr.f32.gmra.mrb[0].mxu0 %v1845
      %v1984 = vpop.f32.mrb[0].mxu0
      %v1985 = vadd.f32 0.0, %v1984
      %v1986 = vpop.f32.mrb[0].mxu0
      %v1987 = vadd.f32 0.0, %v1986
      %1988 = vdwg.mxu0
      %1989 = vmatprep.subr.mxu0 %v1777
      %1990 = vmatpush1.msra.mxu0 %v1776
      %1991 = vmatprep.subr.mxu0 %v1785
      %1992 = vmatpush1.msra.mxu0 %v1784
      %1993 = vmatprep.subr.mxu0 %v1793
      %1994 = vmatpush1.msra.mxu0 %v1792
      %1995 = vmatprep.subr.mxu0 %v1801
      %1996 = vmatpush1.msra.mxu0 %v1800
      %1997 = vmatprep.subr.mxu0 %v1809
      %1998 = vmatpush1.msra.mxu0 %v1808
      %1999 = vmatprep.subr.mxu0 %v1817
      %2000 = vmatpush1.msra.mxu0 %v1816
      %2001 = vmatprep.subr.mxu0 %v1825
      %2002 = vmatpush1.msra.mxu0 %v1824
      %2003 = vmatprep.subr.mxu0 %v1833
      %2004 = vmatpush1.msra.mxu0 %v1832
      %2005 = vmatprep.subr.mxu0 %v1841
      %2006 = vmatpush1.msra.mxu0 %v1840
      %2007 = vmatprep.subr.mxu0 0.0
      %2008 = vmatpush1.msra.mxu0 0.0
      %2009 = vmatprep.subr.mxu0 0.0
      %2010 = vmatpush1.msra.mxu0 0.0
      %2011 = vmatprep.subr.mxu0 0.0
      %2012 = vmatpush1.msra.mxu0 0.0
      %2013 = vmatprep.subr.mxu0 0.0
      %2014 = vmatpush1.msra.mxu0 0.0
      %2015 = vmatprep.subr.mxu0 0.0
      %2016 = vmatpush1.msra.mxu0 0.0
      %2017 = vmatprep.subr.mxu0 0.0
      %2018 = vmatpush1.msra.mxu0 0.0
      %2019 = vmatprep.subr.mxu0 0.0
      %2020 = vmatpush1.msra.mxu0 0.0
      %2021 = vmatprep.subr.mxu0 0.0
      %2022 = vmatpush1.msra.mxu0 0.0
      %2023 = vmatprep.subr.mxu0 0.0
      %2024 = vmatpush1.msra.mxu0 0.0
      %2025 = vmatprep.subr.mxu0 0.0
      %2026 = vmatpush1.msra.mxu0 0.0
      %2027 = vmatprep.subr.mxu0 0.0
      %2028 = vmatpush1.msra.mxu0 0.0
      %2029 = vmatprep.subr.mxu0 0.0
      %2030 = vmatpush1.msra.mxu0 0.0
      %2031 = vmatprep.subr.mxu0 0.0
      %2032 = vmatpush1.msra.mxu0 0.0
      %2033 = vmatprep.subr.mxu0 0.0
      %2034 = vmatpush1.msra.mxu0 0.0
      %2035 = vmatprep.subr.mxu0 0.0
      %2036 = vmatpush1.msra.mxu0 0.0
      %2037 = vmatprep.subr.mxu0 0.0
      %2038 = vmatpush1.msra.mxu0 0.0
      %2039 = vmatprep.subr.mxu0 0.0
      %2040 = vmatpush1.msra.mxu0 0.0
      %2041 = vmatprep.subr.mxu0 0.0
      %2042 = vmatpush1.msra.mxu0 0.0
      %2043 = vmatprep.subr.mxu0 0.0
      %2044 = vmatpush1.msra.mxu0 0.0
      %2045 = vmatprep.subr.mxu0 0.0
      %2046 = vmatpush1.msra.mxu0 0.0
      %2047 = vmatprep.subr.mxu0 0.0
      %2048 = vmatpush1.msra.mxu0 0.0
      %2049 = vmatprep.subr.mxu0 0.0
      %2050 = vmatpush1.msra.mxu0 0.0
      %2051 = vmatprep.subr.mxu0 0.0
      %2052 = vmatpush1.msra.mxu0 0.0
      %2053 = vmatprep.mubr.f32.mxu0 0.0
      %2054 = vmatmul.mubr.f32.gmra.mrb[0].mxu0 %v1845
      %v2055 = vpop.f32.mrb[0].mxu0
      %v2056 = vadd.f32 0.0, %v2055
      %v2057 = vpop.f32.mrb[0].mxu0
      %v2058 = vadd.f32 0.0, %v2057
      %2059 = vdwg.mxu0
      %2060 = vmatprep.subr.mxu0 %v1779
      %2061 = vmatpush1.msra.mxu0 %v1778
      %2062 = vmatprep.subr.mxu0 %v1787
      %2063 = vmatpush1.msra.mxu0 %v1786
      %2064 = vmatprep.subr.mxu0 %v1795
      %2065 = vmatpush1.msra.mxu0 %v1794
      %2066 = vmatprep.subr.mxu0 %v1803
      %2067 = vmatpush1.msra.mxu0 %v1802
      %2068 = vmatprep.subr.mxu0 %v1811
      %2069 = vmatpush1.msra.mxu0 %v1810
      %2070 = vmatprep.subr.mxu0 %v1819
      %2071 = vmatpush1.msra.mxu0 %v1818
      %2072 = vmatprep.subr.mxu0 %v1827
      %2073 = vmatpush1.msra.mxu0 %v1826
      %2074 = vmatprep.subr.mxu0 %v1835
      %2075 = vmatpush1.msra.mxu0 %v1834
      %2076 = vmatprep.subr.mxu0 %v1843
      %2077 = vmatpush1.msra.mxu0 %v1842
      %2078 = vmatprep.subr.mxu0 0.0
      %2079 = vmatpush1.msra.mxu0 0.0
      %2080 = vmatprep.subr.mxu0 0.0
      %2081 = vmatpush1.msra.mxu0 0.0
      %2082 = vmatprep.subr.mxu0 0.0
      %2083 = vmatpush1.msra.mxu0 0.0
      %2084 = vmatprep.subr.mxu0 0.0
      %2085 = vmatpush1.msra.mxu0 0.0
      %2086 = vmatprep.subr.mxu0 0.0
      %2087 = vmatpush1.msra.mxu0 0.0
      %2088 = vmatprep.subr.mxu0 0.0
      %2089 = vmatpush1.msra.mxu0 0.0
      %2090 = vmatprep.subr.mxu0 0.0
      %2091 = vmatpush1.msra.mxu0 0.0
      %2092 = vmatprep.subr.mxu0 0.0
      %2093 = vmatpush1.msra.mxu0 0.0
      %2094 = vmatprep.subr.mxu0 0.0
      %2095 = vmatpush1.msra.mxu0 0.0
      %2096 = vmatprep.subr.mxu0 0.0
      %2097 = vmatpush1.msra.mxu0 0.0
      %2098 = vmatprep.subr.mxu0 0.0
      %2099 = vmatpush1.msra.mxu0 0.0
      %2100 = vmatprep.subr.mxu0 0.0
      %2101 = vmatpush1.msra.mxu0 0.0
      %2102 = vmatprep.subr.mxu0 0.0
      %2103 = vmatpush1.msra.mxu0 0.0
      %2104 = vmatprep.subr.mxu0 0.0
      %2105 = vmatpush1.msra.mxu0 0.0
      %2106 = vmatprep.subr.mxu0 0.0
      %2107 = vmatpush1.msra.mxu0 0.0
      %2108 = vmatprep.subr.mxu0 0.0
      %2109 = vmatpush1.msra.mxu0 0.0
      %2110 = vmatprep.subr.mxu0 0.0
      %2111 = vmatpush1.msra.mxu0 0.0
      %2112 = vmatprep.subr.mxu0 0.0
      %2113 = vmatpush1.msra.mxu0 0.0
      %2114 = vmatprep.subr.mxu0 0.0
      %2115 = vmatpush1.msra.mxu0 0.0
      %2116 = vmatprep.subr.mxu0 0.0
      %2117 = vmatpush1.msra.mxu0 0.0
      %2118 = vmatprep.subr.mxu0 0.0
      %2119 = vmatpush1.msra.mxu0 0.0
      %2120 = vmatprep.subr.mxu0 0.0
      %2121 = vmatpush1.msra.mxu0 0.0
      %2122 = vmatprep.subr.mxu0 0.0
      %2123 = vmatpush1.msra.mxu0 0.0
      %2124 = vmatprep.mubr.f32.mxu0 0.0
      %2125 = vmatmul.mubr.f32.gmra.mrb[0].mxu0 %v1845
      %v2126 = vpop.f32.mrb[0].mxu0
      %v2127 = vadd.f32 0.0, %v2126
      %v2128 = vpop.f32.mrb[0].mxu0
      %v2129 = vadd.f32 0.0, %v2128
      %2130 = vdwg.mxu0
      %v2131 = vadd.f32 %v1553, %v1914
      %v2132 = vadd.f32 %v1555, %v1916
      %v2133 = vadd.f32 %v1624, %v1985
      %v2134 = vadd.f32 %v1626, %v1987
      %v2135 = vadd.f32 %v1695, %v2056
      %v2136 = vadd.f32 %v1697, %v2058
      %v2137 = vadd.f32 %v1766, %v2127
      %v2138 = vadd.f32 %v1768, %v2129
      %v2139 = vld [vmem:[%s2] sm:$0xff]
      %2141 = vset.pattern.permute.xlu0 0
      %2142 = vperm.xlu0 %2141, %v2139
      %v2143 = vpop.permute.xlu0 %2142
      %v2145 = vadd.f32 %v2131, %v2143
      %v2146 = vadd.f32 %v2132, %v2143
      %v2147 = vadd.f32 %v2133, %v2143
      %v2148 = vadd.f32 %v2134, %v2143
      %v2149 = vadd.f32 %v2135, %v2143
      %v2150 = vadd.f32 %v2136, %v2143
      %v2151 = vadd.f32 %v2137, %v2143
      %v2152 = vadd.f32 %v2138, %v2143
      %vm2153 = vcmp.ge.f32.partialorder %v2145, 0.0
      %vm2154 = vcmp.ge.f32.partialorder %v2146, 0.0
      %vm2155 = vcmp.ge.f32.partialorder %v2147, 0.0
      %vm2156 = vcmp.ge.f32.partialorder %v2148, 0.0
      %vm2157 = vcmp.ge.f32.partialorder %v2149, 0.0
      %vm2158 = vcmp.ge.f32.partialorder %v2150, 0.0
      %vm2159 = vcmp.ge.f32.partialorder %v2151, 0.0
      %vm2160 = vcmp.ge.f32.partialorder %v2152, 0.0
      %v2161 = vmul.f32 %v2145, 0.01
      %v2162 = vmul.f32 %v2146, 0.01
      %v2163 = vmul.f32 %v2147, 0.01
      %v2164 = vmul.f32 %v2148, 0.01
      %v2165 = vmul.f32 %v2149, 0.01
      %v2166 = vmul.f32 %v2150, 0.01
      %v2167 = vmul.f32 %v2151, 0.01
      %v2168 = vmul.f32 %v2152, 0.01
      %v2169 = vsel %vm2153, %v2145, %v2161
      %v2170 = vsel %vm2154, %v2146, %v2162
      %v2171 = vsel %vm2155, %v2147, %v2163
      %v2172 = vsel %vm2156, %v2148, %v2164
      %v2173 = vsel %vm2157, %v2149, %v2165
      %v2174 = vsel %vm2158, %v2150, %v2166
      %v2175 = vsel %vm2159, %v2151, %v2167
      %v2176 = vsel %vm2160, %v2152, %v2168
      %v2177 = vadd.f32 %v2169, %v2171
      %v2178 = vadd.f32 %v2170, %v2172
      %v2179 = vld [vmem:[%s3] sm:$0xff]
      %v2180 = vld [vmem:[%s3 + $0x8] sm:$0xff]
      %v2181 = vld [vmem:[%s3 + $0x10] sm:$0xff]
      %v2182 = vld [vmem:[%s3 + $0x18] sm:$0xff]
      %v2183 = vld [vmem:[%s3 + $0x20] sm:$0xff]
      %v2184 = vld [vmem:[%s3 + $0x28] sm:$0xff]
      %v2185 = vld [vmem:[%s3 + $0x30] sm:$0xff]
      %v2186 = vld [vmem:[%s3 + $0x38] sm:$0xff]
      %v2187 = vld [vmem:[%s3 + $0x40] sm:$0xff]
      %v2188 = vld [vmem:[%s3 + $0x48] sm:$0xff]
      %v2189 = vld [vmem:[%s3 + $0x50] sm:$0xff]
      %v2190 = vld [vmem:[%s3 + $0x58] sm:$0xff]
      %v2191 = vld [vmem:[%s3 + $0x60] sm:$0xff]
      %v2192 = vld [vmem:[%s3 + $0x68] sm:$0xff]
      %v2193 = vld [vmem:[%s3 + $0x70] sm:$0xff]
      %v2194 = vld [vmem:[%s3 + $0x78] sm:$0xff]
      %v2195 = vld [vmem:[%s3 + $0x80] sm:$0xff]
      %v2196 = vld [vmem:[%s3 + $0x88] sm:$0xff]
      %v2197 = vld [vmem:[%s3 + $0x90] sm:$0xff]
      %v2198 = vld [vmem:[%s3 + $0x98] sm:$0xff]
      %v2199 = vld [vmem:[%s3 + $0xa0] sm:$0xff]
      %v2200 = vld [vmem:[%s3 + $0xa8] sm:$0xff]
      %v2201 = vld [vmem:[%s3 + $0xb0] sm:$0xff]
      %v2202 = vld [vmem:[%s3 + $0xb8] sm:$0xff]
      %v2203 = vld [vmem:[%s3 + $0xc0] sm:$0xff]
      %v2204 = vld [vmem:[%s3 + $0xc8] sm:$0xff]
      %v2205 = vld [vmem:[%s3 + $0xd0] sm:$0xff]
      %v2206 = vld [vmem:[%s3 + $0xd8] sm:$0x3f]
      %v2208 = vsel %vm344, %v2178, 0
      %vm2210 = vcmask 1045504
      %v2212 = vsel %vm2210, %v2206, 0
      %2214 = vmatprep.subr.mxu0 0.0
      %2215 = vmatpush1.msra.mxu0 %v2179
      %2216 = vmatprep.subr.mxu0 0.0
      %2217 = vmatpush1.msra.mxu0 %v2180
      %2218 = vmatprep.subr.mxu0 0.0
      %2219 = vmatpush1.msra.mxu0 %v2181
      %2220 = vmatprep.subr.mxu0 0.0
      %2221 = vmatpush1.msra.mxu0 %v2182
      %2222 = vmatprep.subr.mxu0 0.0
      %2223 = vmatpush1.msra.mxu0 %v2183
      %2224 = vmatprep.subr.mxu0 0.0
      %2225 = vmatpush1.msra.mxu0 %v2184
      %2226 = vmatprep.subr.mxu0 0.0
      %2227 = vmatpush1.msra.mxu0 %v2185
      %2228 = vmatprep.subr.mxu0 0.0
      %2229 = vmatpush1.msra.mxu0 %v2186
      %2230 = vmatprep.subr.mxu0 0.0
      %2231 = vmatpush1.msra.mxu0 %v2187
      %2232 = vmatprep.subr.mxu0 0.0
      %2233 = vmatpush1.msra.mxu0 %v2188
      %2234 = vmatprep.subr.mxu0 0.0
      %2235 = vmatpush1.msra.mxu0 %v2189
      %2236 = vmatprep.subr.mxu0 0.0
      %2237 = vmatpush1.msra.mxu0 %v2190
      %2238 = vmatprep.subr.mxu0 0.0
      %2239 = vmatpush1.msra.mxu0 %v2191
      %2240 = vmatprep.subr.mxu0 0.0
      %2241 = vmatpush1.msra.mxu0 %v2192
      %2242 = vmatprep.subr.mxu0 0.0
      %2243 = vmatpush1.msra.mxu0 %v2193
      %2244 = vmatprep.subr.mxu0 0.0
      %2245 = vmatpush1.msra.mxu0 %v2194
      %2246 = vmatprep.subr.mxu0 0.0
      %2247 = vmatpush1.msra.mxu0 %v2195
      %2248 = vmatprep.subr.mxu0 0.0
      %2249 = vmatpush1.msra.mxu0 %v2196
      %2250 = vmatprep.subr.mxu0 0.0
      %2251 = vmatpush1.msra.mxu0 %v2197
      %2252 = vmatprep.subr.mxu0 0.0
      %2253 = vmatpush1.msra.mxu0 %v2198
      %2254 = vmatprep.subr.mxu0 0.0
      %2255 = vmatpush1.msra.mxu0 %v2199
      %2256 = vmatprep.subr.mxu0 0.0
      %2257 = vmatpush1.msra.mxu0 %v2200
      %2258 = vmatprep.subr.mxu0 0.0
      %2259 = vmatpush1.msra.mxu0 %v2201
      %2260 = vmatprep.subr.mxu0 0.0
      %2261 = vmatpush1.msra.mxu0 %v2202
      %2262 = vmatprep.subr.mxu0 0.0
      %2263 = vmatpush1.msra.mxu0 %v2203
      %2264 = vmatprep.subr.mxu0 0.0
      %2265 = vmatpush1.msra.mxu0 %v2204
      %2266 = vmatprep.subr.mxu0 0.0
      %2267 = vmatpush1.msra.mxu0 %v2205
      %2268 = vmatprep.subr.mxu0 0.0
      %2269 = vmatpush1.msra.mxu0 %v2212
      %2270 = vmatprep.subr.mxu0 0.0
      %2271 = vmatpush1.msra.mxu0 0.0
      %2272 = vmatprep.subr.mxu0 0.0
      %2273 = vmatpush1.msra.mxu0 0.0
      %2274 = vmatprep.subr.mxu0 0.0
      %2275 = vmatpush1.msra.mxu0 0.0
      %2276 = vmatprep.subr.mxu0 0.0
      %2277 = vmatpush1.msra.mxu0 0.0
      %2278 = vmatprep.mubr.f32.mxu0 %v2208
      %2279 = vmatmul.mubr.f32.gmra.mrb[0].mxu0 %v2177
      %v2280 = vpop.f32.mrb[0].mxu0
      %v2281 = vadd.f32 0.0, %v2280
      %v2282 = vpop.f32.mrb[0].mxu0
      %2283 = vdwg.mxu0
      %vm2284 = vcmask 400384
      %2285 = vst.msk [vmem:[#allocation3] sm:$0xff] %vm2284, %v2281
      %v2286 = vadd.f32 %v2173, %v2175
      %v2287 = vadd.f32 %v2174, %v2176
      %v2288 = vld [vmem:[%s3] sm:$0xff]
      %v2289 = vld [vmem:[%s3 + $0x8] sm:$0xff]
      %v2290 = vld [vmem:[%s3 + $0x10] sm:$0xff]
      %v2291 = vld [vmem:[%s3 + $0x18] sm:$0xff]
      %v2292 = vld [vmem:[%s3 + $0x20] sm:$0xff]
      %v2293 = vld [vmem:[%s3 + $0x28] sm:$0xff]
      %v2294 = vld [vmem:[%s3 + $0x30] sm:$0xff]
      %v2295 = vld [vmem:[%s3 + $0x38] sm:$0xff]
      %v2296 = vld [vmem:[%s3 + $0x40] sm:$0xff]
      %v2297 = vld [vmem:[%s3 + $0x48] sm:$0xff]
      %v2298 = vld [vmem:[%s3 + $0x50] sm:$0xff]
      %v2299 = vld [vmem:[%s3 + $0x58] sm:$0xff]
      %v2300 = vld [vmem:[%s3 + $0x60] sm:$0xff]
      %v2301 = vld [vmem:[%s3 + $0x68] sm:$0xff]
      %v2302 = vld [vmem:[%s3 + $0x70] sm:$0xff]
      %v2303 = vld [vmem:[%s3 + $0x78] sm:$0xff]
      %v2304 = vld [vmem:[%s3 + $0x80] sm:$0xff]
      %v2305 = vld [vmem:[%s3 + $0x88] sm:$0xff]
      %v2306 = vld [vmem:[%s3 + $0x90] sm:$0xff]
      %v2307 = vld [vmem:[%s3 + $0x98] sm:$0xff]
      %v2308 = vld [vmem:[%s3 + $0xa0] sm:$0xff]
      %v2309 = vld [vmem:[%s3 + $0xa8] sm:$0xff]
      %v2310 = vld [vmem:[%s3 + $0xb0] sm:$0xff]
      %v2311 = vld [vmem:[%s3 + $0xb8] sm:$0xff]
      %v2312 = vld [vmem:[%s3 + $0xc0] sm:$0xff]
      %v2313 = vld [vmem:[%s3 + $0xc8] sm:$0xff]
      %v2314 = vld [vmem:[%s3 + $0xd0] sm:$0xff]
      %v2315 = vld [vmem:[%s3 + $0xd8] sm:$0x3f]
      %v2317 = vsel %vm344, %v2287, 0
      %v2320 = vsel %vm2210, %v2315, 0
      %2322 = vmatprep.subr.mxu0 0.0
      %2323 = vmatpush1.msra.mxu0 %v2288
      %2324 = vmatprep.subr.mxu0 0.0
      %2325 = vmatpush1.msra.mxu0 %v2289
      %2326 = vmatprep.subr.mxu0 0.0
      %2327 = vmatpush1.msra.mxu0 %v2290
      %2328 = vmatprep.subr.mxu0 0.0
      %2329 = vmatpush1.msra.mxu0 %v2291
      %2330 = vmatprep.subr.mxu0 0.0
      %2331 = vmatpush1.msra.mxu0 %v2292
      %2332 = vmatprep.subr.mxu0 0.0
      %2333 = vmatpush1.msra.mxu0 %v2293
      %2334 = vmatprep.subr.mxu0 0.0
      %2335 = vmatpush1.msra.mxu0 %v2294
      %2336 = vmatprep.subr.mxu0 0.0
      %2337 = vmatpush1.msra.mxu0 %v2295
      %2338 = vmatprep.subr.mxu0 0.0
      %2339 = vmatpush1.msra.mxu0 %v2296
      %2340 = vmatprep.subr.mxu0 0.0
      %2341 = vmatpush1.msra.mxu0 %v2297
      %2342 = vmatprep.subr.mxu0 0.0
      %2343 = vmatpush1.msra.mxu0 %v2298
      %2344 = vmatprep.subr.mxu0 0.0
      %2345 = vmatpush1.msra.mxu0 %v2299
      %2346 = vmatprep.subr.mxu0 0.0
      %2347 = vmatpush1.msra.mxu0 %v2300
      %2348 = vmatprep.subr.mxu0 0.0
      %2349 = vmatpush1.msra.mxu0 %v2301
      %2350 = vmatprep.subr.mxu0 0.0
      %2351 = vmatpush1.msra.mxu0 %v2302
      %2352 = vmatprep.subr.mxu0 0.0
      %2353 = vmatpush1.msra.mxu0 %v2303
      %2354 = vmatprep.subr.mxu0 0.0
      %2355 = vmatpush1.msra.mxu0 %v2304
      %2356 = vmatprep.subr.mxu0 0.0
      %2357 = vmatpush1.msra.mxu0 %v2305
      %2358 = vmatprep.subr.mxu0 0.0
      %2359 = vmatpush1.msra.mxu0 %v2306
      %2360 = vmatprep.subr.mxu0 0.0
      %2361 = vmatpush1.msra.mxu0 %v2307
      %2362 = vmatprep.subr.mxu0 0.0
      %2363 = vmatpush1.msra.mxu0 %v2308
      %2364 = vmatprep.subr.mxu0 0.0
      %2365 = vmatpush1.msra.mxu0 %v2309
      %2366 = vmatprep.subr.mxu0 0.0
      %2367 = vmatpush1.msra.mxu0 %v2310
      %2368 = vmatprep.subr.mxu0 0.0
      %2369 = vmatpush1.msra.mxu0 %v2311
      %2370 = vmatprep.subr.mxu0 0.0
      %2371 = vmatpush1.msra.mxu0 %v2312
      %2372 = vmatprep.subr.mxu0 0.0
      %2373 = vmatpush1.msra.mxu0 %v2313
      %2374 = vmatprep.subr.mxu0 0.0
      %2375 = vmatpush1.msra.mxu0 %v2314
      %2376 = vmatprep.subr.mxu0 0.0
      %2377 = vmatpush1.msra.mxu0 %v2320
      %2378 = vmatprep.subr.mxu0 0.0
      %2379 = vmatpush1.msra.mxu0 0.0
      %2380 = vmatprep.subr.mxu0 0.0
      %2381 = vmatpush1.msra.mxu0 0.0
      %2382 = vmatprep.subr.mxu0 0.0
      %2383 = vmatpush1.msra.mxu0 0.0
      %2384 = vmatprep.subr.mxu0 0.0
      %2385 = vmatpush1.msra.mxu0 0.0
      %2386 = vmatprep.mubr.f32.mxu0 %v2317
      %2387 = vmatmul.mubr.f32.gmra.mrb[0].mxu0 %v2286
      %v2388 = vpop.f32.mrb[0].mxu0
      %v2389 = vadd.f32 0.0, %v2388
      %v2390 = vpop.f32.mrb[0].mxu0
      %2391 = vdwg.mxu0
      %2393 = vrot.lane.b32.xlu0 %v2389, 49
      %v2394 = vpop.permute.xlu0 %2393
      %vm2396 = vcmask 802184
      %2397 = vst.msk [vmem:[#allocation3] sm:$0xff] %vm2396, %v2394
      %v2398 = vld [vmem:[#allocation3] sm:$0xff]
      %vm2399 = vcmask 670720
      %2400 = vst.msk [vmem:[#allocation4] sm:$0xff] %vm2399, %v2398
      %v2401 = vld [vmem:[#allocation3] sm:$0xff]
      %2403 = vrot.lane.b32.xlu0 %v2401, 127
      %v2404 = vpop.permute.xlu0 %2403
      %2406 = vst.msk [vmem:[#allocation4 + $0x8] sm:$0xff] %vm2399, %v2404
      %v2407 = vld [vmem:[#allocation3] sm:$0xff]
      %2409 = vrot.lane.b32.xlu0 %v2407, 126
      %v2410 = vpop.permute.xlu0 %2409
      %2412 = vst.msk [vmem:[#allocation4 + $0x10] sm:$0xff] %vm2399, %v2410
      %v2413 = vld [vmem:[#allocation3] sm:$0xff]
      %2415 = vrot.lane.b32.xlu0 %v2413, 121
      %v2416 = vpop.permute.xlu0 %2415
      %2418 = vst.msk [vmem:[#allocation4 + $0x18] sm:$0xff] %vm2399, %v2416
      %v2419 = vld [vmem:[#allocation3] sm:$0xff]
      %2421 = vrot.lane.b32.xlu0 %v2419, 120
      %v2422 = vpop.permute.xlu0 %2421
      %2424 = vst.msk [vmem:[#allocation4 + $0x20] sm:$0xff] %vm2399, %v2422
      %v2425 = vld [vmem:[#allocation3] sm:$0xff]
      %2427 = vrot.lane.b32.xlu0 %v2425, 119
      %v2428 = vpop.permute.xlu0 %2427
      %2430 = vst.msk [vmem:[#allocation4 + $0x28] sm:$0xff] %vm2399, %v2428
      %v2431 = vld [vmem:[#allocation3] sm:$0xff]
      %2433 = vrot.lane.b32.xlu0 %v2431, 114
      %v2434 = vpop.permute.xlu0 %2433
      %2436 = vst.msk [vmem:[#allocation4 + $0x30] sm:$0xff] %vm2399, %v2434
      %v2437 = vld [vmem:[#allocation3] sm:$0xff]
      %2439 = vrot.lane.b32.xlu0 %v2437, 113
      %v2440 = vpop.permute.xlu0 %2439
      %2442 = vst.msk [vmem:[#allocation4 + $0x38] sm:$0xff] %vm2399, %v2440
      %v2443 = vld [vmem:[#allocation3] sm:$0xff]
      %2445 = vrot.lane.b32.xlu0 %v2443, 112
      %v2446 = vpop.permute.xlu0 %2445
      %2448 = vst.msk [vmem:[#allocation4 + $0x40] sm:$0xff] %vm2399, %v2446
      %v2449 = vld [vmem:[%s4] sm:$0xff]
      %v2450 = vld [vmem:[#allocation4] sm:$0xff]
      %v2451 = vld [vmem:[#allocation4 + $0x8] sm:$0xff]
      %v2452 = vld [vmem:[#allocation4 + $0x10] sm:$0xff]
      %v2453 = vld [vmem:[#allocation4 + $0x18] sm:$0xff]
      %v2454 = vld [vmem:[#allocation4 + $0x20] sm:$0xff]
      %v2455 = vld [vmem:[#allocation4 + $0x28] sm:$0xff]
      %v2456 = vld [vmem:[#allocation4 + $0x30] sm:$0xff]
      %v2457 = vld [vmem:[#allocation4 + $0x38] sm:$0xff]
      %v2458 = vld [vmem:[#allocation4 + $0x40] sm:$0xff]
      %v2459 = vld [vmem:[%s5] sm:$0xff]
      %2461 = vset.pattern.permute.xlu0 0
      %2462 = vperm.xlu0 %2461, %v2459
      %v2463 = vpop.permute.xlu0 %2462
      %v2466 = vsel %vm1195, %v2449, 0
      %2468 = vmatprep.subr.mxu0 0.0
      %2469 = vmatpush1.msra.mxu0 %v2450
      %2470 = vmatprep.subr.mxu0 0.0
      %2471 = vmatpush1.msra.mxu0 %v2451
      %2472 = vmatprep.subr.mxu0 0.0
      %2473 = vmatpush1.msra.mxu0 %v2452
      %2474 = vmatprep.subr.mxu0 0.0
      %2475 = vmatpush1.msra.mxu0 %v2453
      %2476 = vmatprep.subr.mxu0 0.0
      %2477 = vmatpush1.msra.mxu0 %v2454
      %2478 = vmatprep.subr.mxu0 0.0
      %2479 = vmatpush1.msra.mxu0 %v2455
      %2480 = vmatprep.subr.mxu0 0.0
      %2481 = vmatpush1.msra.mxu0 %v2456
      %2482 = vmatprep.subr.mxu0 0.0
      %2483 = vmatpush1.msra.mxu0 %v2457
      %2484 = vmatprep.subr.mxu0 0.0
      %2485 = vmatpush1.msra.mxu0 %v2458
      %2486 = vmatprep.subr.mxu0 0.0
      %2487 = vmatpush1.msra.mxu0 0.0
      %2488 = vmatprep.subr.mxu0 0.0
      %2489 = vmatpush1.msra.mxu0 0.0
      %2490 = vmatprep.subr.mxu0 0.0
      %2491 = vmatpush1.msra.mxu0 0.0
      %2492 = vmatprep.subr.mxu0 0.0
      %2493 = vmatpush1.msra.mxu0 0.0
      %2494 = vmatprep.subr.mxu0 0.0
      %2495 = vmatpush1.msra.mxu0 0.0
      %2496 = vmatprep.subr.mxu0 0.0
      %2497 = vmatpush1.msra.mxu0 0.0
      %2498 = vmatprep.subr.mxu0 0.0
      %2499 = vmatpush1.msra.mxu0 0.0
      %2500 = vmatprep.subr.mxu0 0.0
      %2501 = vmatpush1.msra.mxu0 0.0
      %2502 = vmatprep.subr.mxu0 0.0
      %2503 = vmatpush1.msra.mxu0 0.0
      %2504 = vmatprep.subr.mxu0 0.0
      %2505 = vmatpush1.msra.mxu0 0.0
      %2506 = vmatprep.subr.mxu0 0.0
      %2507 = vmatpush1.msra.mxu0 0.0
      %2508 = vmatprep.subr.mxu0 0.0
      %2509 = vmatpush1.msra.mxu0 0.0
      %2510 = vmatprep.subr.mxu0 0.0
      %2511 = vmatpush1.msra.mxu0 0.0
      %2512 = vmatprep.subr.mxu0 0.0
      %2513 = vmatpush1.msra.mxu0 0.0
      %2514 = vmatprep.subr.mxu0 0.0
      %2515 = vmatpush1.msra.mxu0 0.0
      %2516 = vmatprep.subr.mxu0 0.0
      %2517 = vmatpush1.msra.mxu0 0.0
      %2518 = vmatprep.subr.mxu0 0.0
      %2519 = vmatpush1.msra.mxu0 0.0
      %2520 = vmatprep.subr.mxu0 0.0
      %2521 = vmatpush1.msra.mxu0 0.0
      %2522 = vmatprep.subr.mxu0 0.0
      %2523 = vmatpush1.msra.mxu0 0.0
      %2524 = vmatprep.subr.mxu0 0.0
      %2525 = vmatpush1.msra.mxu0 0.0
      %2526 = vmatprep.subr.mxu0 0.0
      %2527 = vmatpush1.msra.mxu0 0.0
      %2528 = vmatprep.subr.mxu0 0.0
      %2529 = vmatpush1.msra.mxu0 0.0
      %2530 = vmatprep.subr.mxu0 0.0
      %2531 = vmatpush1.msra.mxu0 0.0
      %2532 = vmatprep.mubr.f32.mxu0 0.0
      %2533 = vmatmul.mubr.f32.gmra.mrb[0].mxu0 %v2466
      %v2534 = vpop.f32.mrb[0].mxu0
      %v2535 = vadd.f32 %v2463, %v2534
      %v2536 = vpop.f32.mrb[0].mxu0
      %2537 = vdwg.mxu0
      %vm2538 = vcmp.ge.f32.partialorder %v2535, 0.0
      %v2539 = vmul.f32 %v2535, 0.01
      %v2540 = vsel %vm2538, %v2535, %v2539
      %v2541 = vld [vmem:[%s6] sm:$0xff]
      %v2542 = vld [vmem:[%s6 + $0x8] sm:$0xff]
      %v2543 = vld [vmem:[%s6 + $0x10] sm:$0xff]
      %v2544 = vld [vmem:[%s6 + $0x18] sm:$0xff]
      %v2545 = vld [vmem:[%s6 + $0x20] sm:$0xff]
      %v2546 = vld [vmem:[%s6 + $0x28] sm:$0xff]
      %v2547 = vld [vmem:[%s6 + $0x30] sm:$0xff]
      %v2548 = vld [vmem:[%s6 + $0x38] sm:$0xff]
      %v2549 = vld [vmem:[%s6 + $0x40] sm:$0xff]
      %v2550 = vld [vmem:[%s6 + $0x48] sm:$0xff]
      %v2551 = vld [vmem:[%s6 + $0x50] sm:$0x3]
      %v2553 = vsel %vm2399, %v2540, 0
      %vm2555 = vcmask 1041408
      %v2557 = vsel %vm2555, %v2551, 0
      %2559 = vmatprep.subr.mxu0 0.0
      %2560 = vmatpush1.msra.mxu0 %v2541
      %2561 = vmatprep.subr.mxu0 0.0
      %2562 = vmatpush1.msra.mxu0 %v2542
      %2563 = vmatprep.subr.mxu0 0.0
      %2564 = vmatpush1.msra.mxu0 %v2543
      %2565 = vmatprep.subr.mxu0 0.0
      %2566 = vmatpush1.msra.mxu0 %v2544
      %2567 = vmatprep.subr.mxu0 0.0
      %2568 = vmatpush1.msra.mxu0 %v2545
      %2569 = vmatprep.subr.mxu0 0.0
      %2570 = vmatpush1.msra.mxu0 %v2546
      %2571 = vmatprep.subr.mxu0 0.0
      %2572 = vmatpush1.msra.mxu0 %v2547
      %2573 = vmatprep.subr.mxu0 0.0
      %2574 = vmatpush1.msra.mxu0 %v2548
      %2575 = vmatprep.subr.mxu0 0.0
      %2576 = vmatpush1.msra.mxu0 %v2549
      %2577 = vmatprep.subr.mxu0 0.0
      %2578 = vmatpush1.msra.mxu0 %v2550
      %2579 = vmatprep.subr.mxu0 0.0
      %2580 = vmatpush1.msra.mxu0 %v2557
      %2581 = vmatprep.subr.mxu0 0.0
      %2582 = vmatpush1.msra.mxu0 0.0
      %2583 = vmatprep.subr.mxu0 0.0
      %2584 = vmatpush1.msra.mxu0 0.0
      %2585 = vmatprep.subr.mxu0 0.0
      %2586 = vmatpush1.msra.mxu0 0.0
      %2587 = vmatprep.subr.mxu0 0.0
      %2588 = vmatpush1.msra.mxu0 0.0
      %2589 = vmatprep.subr.mxu0 0.0
      %2590 = vmatpush1.msra.mxu0 0.0
      %2591 = vmatprep.subr.mxu0 0.0
      %2592 = vmatpush1.msra.mxu0 0.0
      %2593 = vmatprep.subr.mxu0 0.0
      %2594 = vmatpush1.msra.mxu0 0.0
      %2595 = vmatprep.subr.mxu0 0.0
      %2596 = vmatpush1.msra.mxu0 0.0
      %2597 = vmatprep.subr.mxu0 0.0
      %2598 = vmatpush1.msra.mxu0 0.0
      %2599 = vmatprep.subr.mxu0 0.0
      %2600 = vmatpush1.msra.mxu0 0.0
      %2601 = vmatprep.subr.mxu0 0.0
      %2602 = vmatpush1.msra.mxu0 0.0
      %2603 = vmatprep.subr.mxu0 0.0
      %2604 = vmatpush1.msra.mxu0 0.0
      %2605 = vmatprep.subr.mxu0 0.0
      %2606 = vmatpush1.msra.mxu0 0.0
      %2607 = vmatprep.subr.mxu0 0.0
      %2608 = vmatpush1.msra.mxu0 0.0
      %2609 = vmatprep.subr.mxu0 0.0
      %2610 = vmatpush1.msra.mxu0 0.0
      %2611 = vmatprep.subr.mxu0 0.0
      %2612 = vmatpush1.msra.mxu0 0.0
      %2613 = vmatprep.subr.mxu0 0.0
      %2614 = vmatpush1.msra.mxu0 0.0
      %2615 = vmatprep.subr.mxu0 0.0
      %2616 = vmatpush1.msra.mxu0 0.0
      %2617 = vmatprep.subr.mxu0 0.0
      %2618 = vmatpush1.msra.mxu0 0.0
      %2619 = vmatprep.subr.mxu0 0.0
      %2620 = vmatpush1.msra.mxu0 0.0
      %2621 = vmatprep.subr.mxu0 0.0
      %2622 = vmatpush1.msra.mxu0 0.0
      %2623 = vmatprep.mubr.f32.mxu0 0.0
      %2624 = vmatmul.mubr.f32.gmra.mrb[0].mxu0 %v2553
      %v2625 = vpop.f32.mrb[0].mxu0
      %v2626 = vadd.f32 0.0, %v2625
      %v2627 = vpop.f32.mrb[0].mxu0
      %2628 = vdwg.mxu0
      %v2629 = vld [vmem:[%s7] sm:$0xff]
      %v2630 = vld [vmem:[%s7 + $0x8] sm:$0xff]
      %v2631 = vld [vmem:[%s8] sm:$0xff]
      %v2632 = vld [vmem:[%s8 + $0x8] sm:$0xff]
      %2634 = vset.pattern.permute.xlu0 0
      %2635 = vperm.xlu0 %2634, %v2631
      %v2636 = vpop.permute.xlu0 %2635
      %2639 = vset.pattern.permute.xlu0 0
      %2640 = vperm.xlu0 %2639, %v2632
      %v2641 = vpop.permute.xlu0 %2640
      %vm2643 = vcmask 64512
      %v2645 = vsel %vm2643, %v2629, 0
      %v2648 = vsel %vm2643, %v2630, 0
      %2650 = vmatprep.subr.mxu0 0.0
      %2651 = vmatpush1.msra.mxu0 %v2626
      %2652 = vmatprep.subr.mxu0 0.0
      %2653 = vmatpush1.msra.mxu0 0.0
      %2654 = vmatprep.subr.mxu0 0.0
      %2655 = vmatpush1.msra.mxu0 0.0
      %2656 = vmatprep.subr.mxu0 0.0
      %2657 = vmatpush1.msra.mxu0 0.0
      %2658 = vmatprep.subr.mxu0 0.0
      %2659 = vmatpush1.msra.mxu0 0.0
      %2660 = vmatprep.subr.mxu0 0.0
      %2661 = vmatpush1.msra.mxu0 0.0
      %2662 = vmatprep.subr.mxu0 0.0
      %2663 = vmatpush1.msra.mxu0 0.0
      %2664 = vmatprep.subr.mxu0 0.0
      %2665 = vmatpush1.msra.mxu0 0.0
      %2666 = vmatprep.subr.mxu0 0.0
      %2667 = vmatpush1.msra.mxu0 0.0
      %2668 = vmatprep.subr.mxu0 0.0
      %2669 = vmatpush1.msra.mxu0 0.0
      %2670 = vmatprep.subr.mxu0 0.0
      %2671 = vmatpush1.msra.mxu0 0.0
      %2672 = vmatprep.subr.mxu0 0.0
      %2673 = vmatpush1.msra.mxu0 0.0
      %2674 = vmatprep.subr.mxu0 0.0
      %2675 = vmatpush1.msra.mxu0 0.0
      %2676 = vmatprep.subr.mxu0 0.0
      %2677 = vmatpush1.msra.mxu0 0.0
      %2678 = vmatprep.subr.mxu0 0.0
      %2679 = vmatpush1.msra.mxu0 0.0
      %2680 = vmatprep.subr.mxu0 0.0
      %2681 = vmatpush1.msra.mxu0 0.0
      %2682 = vmatprep.subr.mxu0 0.0
      %2683 = vmatpush1.msra.mxu0 0.0
      %2684 = vmatprep.subr.mxu0 0.0
      %2685 = vmatpush1.msra.mxu0 0.0
      %2686 = vmatprep.subr.mxu0 0.0
      %2687 = vmatpush1.msra.mxu0 0.0
      %2688 = vmatprep.subr.mxu0 0.0
      %2689 = vmatpush1.msra.mxu0 0.0
      %2690 = vmatprep.subr.mxu0 0.0
      %2691 = vmatpush1.msra.mxu0 0.0
      %2692 = vmatprep.subr.mxu0 0.0
      %2693 = vmatpush1.msra.mxu0 0.0
      %2694 = vmatprep.subr.mxu0 0.0
      %2695 = vmatpush1.msra.mxu0 0.0
      %2696 = vmatprep.subr.mxu0 0.0
      %2697 = vmatpush1.msra.mxu0 0.0
      %2698 = vmatprep.subr.mxu0 0.0
      %2699 = vmatpush1.msra.mxu0 0.0
      %2700 = vmatprep.subr.mxu0 0.0
      %2701 = vmatpush1.msra.mxu0 0.0
      %2702 = vmatprep.subr.mxu0 0.0
      %2703 = vmatpush1.msra.mxu0 0.0
      %2704 = vmatprep.subr.mxu0 0.0
      %2705 = vmatpush1.msra.mxu0 0.0
      %2706 = vmatprep.subr.mxu0 0.0
      %2707 = vmatpush1.msra.mxu0 0.0
      %2708 = vmatprep.subr.mxu0 0.0
      %2709 = vmatpush1.msra.mxu0 0.0
      %2710 = vmatprep.subr.mxu0 0.0
      %2711 = vmatpush1.msra.mxu0 0.0
      %2712 = vmatprep.subr.mxu0 0.0
      %2713 = vmatpush1.msra.mxu0 0.0
      %2714 = vmatprep.mubr.f32.mxu0 0.0
      %2715 = vmatmul.mubr.f32.gmra.mrb[0].mxu0 %v2645
      %v2716 = vpop.f32.mrb[0].mxu0
      %v2717 = vadd.f32 %v2636, %v2716
      %v2718 = vpop.f32.mrb[0].mxu0
      %2719 = vmatprep.mubr.f32.mxu0 0.0
      %2720 = vmatmul.mubr.f32.gmra.mrb[0].mxu0 %v2648
      %v2721 = vpop.f32.mrb[0].mxu0
      %v2722 = vadd.f32 %v2641, %v2721
      %v2723 = vpop.f32.mrb[0].mxu0
      %2724 = vdwg.mxu0
      %vm2725 = vcmask 146432
      %2726 = vst.msk [vmem:[%s332] sm:$0xff] %vm2725, %v2717
      %2727 = vst.msk [vmem:[%s332 + $0x8] sm:$0xff] %vm2725, %v2722
      %p2728 = scmp.lt.s32.totalorder %s20, 1
      %s2729 = scalar_select %p2728, %s20, 1
      %s2730 = smul.addr %s2729, 2
      %s2731 = smul.addr %s2730, 8
      %s2732 = scalar_lea.vmem %s9, %s2731
      // Predicated region
      $region57: #{convolutions_forward.1} parent=55 // pred_check
        %p2733 = pneg %p232
      $region58: #{convolutions_forward.1} parent=55 // pred_check_branch
        %2735 = sbr.rel (%p2733) target = $region60
      $region59: #{convolutions_forward.1} parent=55 // pred_region
        _
      $region60: #{convolutions_forward.1} parent=55 // pred_fallthru
        _
    $region56: #{convolutions_forward.1} parent=5 // pred_fallthru
      _
    %p2736 = scmp.le.s32.totalorder 2, %s15
    // Predicated region
    $region61: #{convolutions_forward.1} parent=5 // pred_check
      %p2737 = pneg %p2736
    $region62: #{convolutions_forward.1} parent=5 // pred_check_branch
      %2739 = sbr.rel (%p2737) target = $region64
    $region63: #{convolutions_forward.1} parent=5 // pred_region
      %s2740 = ssub.s32 %s15, 2
      // Predicated region
      $region65: #{convolutions_forward.1} parent=63 // pred_check
        %p2741 = pneg %p238
      $region66: #{convolutions_forward.1} parent=63 // pred_check_branch
        %2743 = sbr.rel (%p2741) target = $region68
      $region67: #{convolutions_forward.1} parent=63 // pred_region
        %p2744 = scmp.lt.s32.totalorder %s21, 1
        %s2745 = scalar_select %p2744, %s21, 1
        %s2746 = smul.addr %s2745, 2
        %s2747 = smul.addr %s2746, 8
        %s2748 = scalar_lea.vmem %s9, %s2747
      $region68: #{convolutions_forward.1} parent=63 // pred_fallthru
        _
    $region64: #{convolutions_forward.1} parent=5 // pred_fallthru
      _
  $region6: #{convolutions_forward.1} parent=0 // loop_footer
    %s19 = sadd.s32 1, %s15
  $region7: #{convolutions_forward.1} parent=0 // loop_footer_branch
    %14 = sbr.rel target = $region3
  $region8: #{convolutions_forward.1} parent=0 // loop_exit
    _

</llo_original>
